<compile_context>
chip_gen: v7x
topology: tpu7x:2x2x1
jax: 0.10.0
libtpu: 0.0.40
codegen_flags: <defaults>
</compile_context>

<pallas_src>
import functools

import jax
import jax.numpy as jnp
from jax import lax
from jax.experimental import pallas as pl
from jax.experimental.pallas import tpu as pltpu

START_TAG = '<START>'
STOP_TAG = '<STOP>'
NEG_INF = -10000.0


def _bilstm_crf_kernel(
    embeds_ref,                        # (T, E)   f32
    w_ih_f_ref, w_hh_f_ref, b_f_ref,   # (E,4H), (H,4H), (1,4H)   forward dir
    w_ih_b_ref, w_hh_b_ref, b_b_ref,   # (E,4H), (H,4H), (1,4H)   reverse dir
    h0_ref, c0_ref,                    # (2, H)   row0 = fwd, row1 = bwd
    w_tag_ref, b_tag_ref,              # (2H, NTP), (1, NTP)
    trans_ref, trans_t_ref,            # (NTP,NTP): [next,prev] and [prev,next]
    tag_seq_ref,                       # OUT (1, T)  i32   decoded tag path
    score_ref,                         # OUT (1, 1)  f32   best path score
    start_ref,                         # OUT (1, 1)  i32   back-tracked start tag
    gxf_ref, gxb_ref,                  # scratch (T, 4H) f32  hoisted input gates
    hf_ref, hb_ref,                    # scratch (T, H)  f32
    feats_ref,                         # scratch (T, NTP) f32  emission scores
    bp_ref,                            # scratch (T, NTP) i32  Viterbi backpointers
    *, T, H, NTP, start_idx, stop_idx,
):
    f32 = jnp.float32

    # ---------------- hoisted input projections (one MXU matmul each) --------
    embeds = embeds_ref[...]
    gxf_ref[...] = (jnp.dot(embeds, w_ih_f_ref[...], preferred_element_type=f32)
                    + b_f_ref[...])
    gxb_ref[...] = (jnp.dot(embeds, w_ih_b_ref[...], preferred_element_type=f32)
                    + b_b_ref[...])

    w_hh_f = w_hh_f_ref[...]
    w_hh_b = w_hh_b_ref[...]

    def cell(gates, c):
        i = jax.nn.sigmoid(gates[:, 0:H])
        f = jax.nn.sigmoid(gates[:, H:2 * H])
        g = jnp.tanh(gates[:, 2 * H:3 * H])
        o = jax.nn.sigmoid(gates[:, 3 * H:4 * H])
        c_new = f * c + i * g
        h_new = o * jnp.tanh(c_new)
        return h_new, c_new

    # --------- fused + unrolled bidirectional recurrence ----------------------
    def lstm_body(t, carry):
        hf, cf, hb, cb = carry
        tb = T - 1 - t
        gf = gxf_ref[pl.ds(t, 1), :] + jnp.dot(hf, w_hh_f, preferred_element_type=f32)
        gb = gxb_ref[pl.ds(tb, 1), :] + jnp.dot(hb, w_hh_b, preferred_element_type=f32)
        hf, cf = cell(gf, cf)
        hb, cb = cell(gb, cb)
        hf_ref[pl.ds(t, 1), :] = hf
        hb_ref[pl.ds(tb, 1), :] = hb
        return (hf, cf, hb, cb)

    lax.fori_loop(
        0, T, lstm_body,
        (h0_ref[0:1, :], c0_ref[0:1, :], h0_ref[1:2, :], c0_ref[1:2, :]),
        unroll=True)

    # ---------------- hidden2tag emission scores -----------------------------
    feats_ref[...] = (
        jnp.dot(hf_ref[...], w_tag_ref[0:H, :], preferred_element_type=f32)
        + jnp.dot(hb_ref[...], w_tag_ref[H:2 * H, :], preferred_element_type=f32)
        + b_tag_ref[...])

    # ---------------- Viterbi forward recursion -------------------------------
    trans_t = trans_t_ref[...]                                   # [prev, next]
    sub_iota = lax.broadcasted_iota(jnp.int32, (NTP, NTP), 0)    # prev index
    lane_iota = lax.broadcasted_iota(jnp.int32, (NTP, NTP), 1)
    eye = sub_iota == lane_iota
    col_iota = lax.broadcasted_iota(jnp.int32, (NTP, 1), 0)
    row_iota = lax.broadcasted_iota(jnp.int32, (1, NTP), 1)

    init_col = jnp.where(col_iota == start_idx, f32(0.0), f32(NEG_INF))
    init_row = jnp.where(row_iota == start_idx, f32(0.0), f32(NEG_INF))

    def vit_body(t, carry):
        fvar_col, _ = carry
        # scores[prev, next] = fvar[prev] + transitions[next, prev]
        scores = fvar_col + trans_t
        maxv = jnp.max(scores, axis=0, keepdims=True)            # (1, NTP)
        bp = jnp.min(jnp.where(scores == maxv, sub_iota, NTP),
                     axis=0, keepdims=True)                      # first argmax over prev
        bp_ref[pl.ds(t, 1), :] = bp.astype(jnp.int32)
        fvar_row = maxv + feats_ref[pl.ds(t, 1), :]              # (1, NTP)
        fvar_col = jnp.sum(jnp.where(eye, fvar_row, f32(0.0)),
                           axis=1, keepdims=True)                # (NTP, 1) for next step
        return (fvar_col, fvar_row)

    _, fvar_row = lax.fori_loop(0, T, vit_body, (init_col, init_row), unroll=True)

    # terminal scores, best final tag (first-occurrence argmax as in torch.max)
    term = fvar_row + trans_ref[stop_idx:stop_idx + 1, :]        # (1, NTP)
    best_score = jnp.max(term, axis=1, keepdims=True)            # (1, 1)
    best_tag = jnp.min(jnp.where(term == best_score, row_iota, NTP),
                       axis=1, keepdims=True).astype(jnp.int32)  # (1, 1)
    score_ref[...] = best_score

    # ---------------- on-device back-tracking --------------------------------
    t_iota = lax.broadcasted_iota(jnp.int32, (1, T), 1)
    path = jnp.where(t_iota == (T - 1), best_tag, jnp.zeros((1, T), jnp.int32))
    cur = best_tag
    for t in range(T - 1, 0, -1):
        bp_row = bp_ref[t:t + 1, :]                              # (1, NTP)
        cur = jnp.sum(jnp.where(row_iota == cur, bp_row, 0),
                      axis=1, keepdims=True).astype(jnp.int32)   # bp[t][cur]
        path = jnp.where(t_iota == (t - 1), cur, path)
    bp_row0 = bp_ref[0:1, :]
    start = jnp.sum(jnp.where(row_iota == cur, bp_row0, 0),
                    axis=1, keepdims=True).astype(jnp.int32)

    tag_seq_ref[...] = path
    start_ref[...] = start


def make_params(key, vocab_size, embedding_dim, hidden_dim, tag2id):
    """PyTorch-layout parameters (also used by the pure-JAX reference)."""
    NT = len(tag2id)
    H = hidden_dim // 2
    keys = jax.random.split(key, 14)

    def u(k, shape, scale):
        return jax.random.uniform(k, shape, jnp.float32, -scale, scale)

    k1 = 1.0 / float(jnp.sqrt(H))
    k2 = 1.0 / float(jnp.sqrt(hidden_dim))
    P = {
        'embedding': jax.random.normal(keys[0], (vocab_size, embedding_dim), jnp.float32),
        'w_ih_f': u(keys[1], (4 * H, embedding_dim), k1),
        'w_hh_f': u(keys[2], (4 * H, H), k1),
        'b_ih_f': u(keys[3], (4 * H,), k1),
        'b_hh_f': u(keys[4], (4 * H,), k1),
        'w_ih_b': u(keys[5], (4 * H, embedding_dim), k1),
        'w_hh_b': u(keys[6], (4 * H, H), k1),
        'b_ih_b': u(keys[7], (4 * H,), k1),
        'b_hh_b': u(keys[8], (4 * H,), k1),
        'w_tag': u(keys[9], (NT, hidden_dim), k2),
        'b_tag': u(keys[10], (NT,), k2),
        'h0': jax.random.normal(keys[12], (2, H), jnp.float32),
        'c0': jax.random.normal(keys[13], (2, H), jnp.float32),
    }
    trans = jax.random.normal(keys[11], (NT, NT), jnp.float32)
    trans = trans.at[tag2id[START_TAG], :].set(NEG_INF)
    trans = trans.at[:, tag2id[STOP_TAG]].set(NEG_INF)
    P['transitions'] = trans
    return P


def fold_params(P, hidden_dim, num_tags):
    """One-time layout folding: transposes, bias folding, tag-dim lane padding."""
    NT = num_tags
    NTP = max(8, NT)  # pad tag axis so Viterbi vregs and output stores are dense
    w_tag = jnp.zeros((hidden_dim, NTP), jnp.float32).at[:, :NT].set(P['w_tag'].T)
    b_tag = jnp.zeros((1, NTP), jnp.float32).at[:, :NT].set(P['b_tag'][None, :])
    trans = jnp.full((NTP, NTP), NEG_INF, jnp.float32).at[:NT, :NT].set(P['transitions'])
    F = {
        'embedding': P['embedding'],
        'w_ih_f': P['w_ih_f'].T, 'w_hh_f': P['w_hh_f'].T,
        'b_f': (P['b_ih_f'] + P['b_hh_f']).reshape(1, -1),
        'w_ih_b': P['w_ih_b'].T, 'w_hh_b': P['w_hh_b'].T,
        'b_b': (P['b_ih_b'] + P['b_hh_b']).reshape(1, -1),
        'h0': P['h0'], 'c0': P['c0'],
        'w_tag': w_tag, 'b_tag': b_tag,
        'trans': trans, 'trans_t': trans.T,
    }
    return F, NTP


@functools.partial(jax.jit, static_argnames=(
    'hidden_dim', 'num_tags', 'num_tags_padded', 'start_idx', 'stop_idx'))
def bilstm_crf_forward(sentence, F, *, hidden_dim, num_tags, num_tags_padded,
                       start_idx, stop_idx):
    H = hidden_dim // 2
    NTP = num_tags_padded
    T = sentence.shape[0]

    # glue: embedding gather (fused into the same jit)
    embeds = jnp.take(F['embedding'], sentence, axis=0)          # (T, E)

    kernel = functools.partial(
        _bilstm_crf_kernel, T=T, H=H, NTP=NTP,
        start_idx=start_idx, stop_idx=stop_idx)

    def vmem():
        return pl.BlockSpec(memory_space=pltpu.MemorySpace.VMEM)

    tag_seq, score, start = pl.pallas_call(
        kernel,
        out_shape=(jax.ShapeDtypeStruct((1, T), jnp.int32),
                   jax.ShapeDtypeStruct((1, 1), jnp.float32),
                   jax.ShapeDtypeStruct((1, 1), jnp.int32)),
        in_specs=[vmem() for _ in range(13)],
        out_specs=(vmem(), vmem(), vmem()),
        scratch_shapes=[pltpu.VMEM((T, 4 * H), jnp.float32),
                        pltpu.VMEM((T, 4 * H), jnp.float32),
                        pltpu.VMEM((T, H), jnp.float32),
                        pltpu.VMEM((T, H), jnp.float32),
                        pltpu.VMEM((T, NTP), jnp.float32),
                        pltpu.VMEM((T, NTP), jnp.int32)],
    )(embeds,
      F['w_ih_f'], F['w_hh_f'], F['b_f'],
      F['w_ih_b'], F['w_hh_b'], F['b_b'],
      F['h0'], F['c0'],
      F['w_tag'], F['b_tag'],
      F['trans'], F['trans_t'])

    return score[0, 0], tag_seq[0], start[0, 0]


def reference_forward(sentence, P, tag2id, hidden_dim):
    """Pure-JAX/python reference mirroring the PyTorch forward()."""
    H = hidden_dim // 2
    NT = len(tag2id)
    emb = jnp.take(P['embedding'], sentence, axis=0)

    def run_dir(xs, w_ih, w_hh, b_ih, b_hh, h0, c0):
        h, c = h0, c0
        out = []
        for x in xs:
            gates = w_ih @ x + b_ih + w_hh @ h + b_hh
            i = jax.nn.sigmoid(gates[0:H])
            f = jax.nn.sigmoid(gates[H:2 * H])
            g = jnp.tanh(gates[2 * H:3 * H])
            o = jax.nn.sigmoid(gates[3 * H:4 * H])
            c = f * c + i * g
            h = o * jnp.tanh(c)
            out.append(h)
        return out

    xs = [emb[t] for t in range(emb.shape[0])]
    hf = run_dir(xs, P['w_ih_f'], P['w_hh_f'], P['b_ih_f'], P['b_hh_f'],
                 P['h0'][0], P['c0'][0])
    hb = run_dir(xs[::-1], P['w_ih_b'], P['w_hh_b'], P['b_ih_b'], P['b_hh_b'],
                 P['h0'][1], P['c0'][1])[::-1]
    feats = jnp.stack([P['w_tag'] @ jnp.concatenate([hf[t], hb[t]]) + P['b_tag']
                       for t in range(len(xs))])

    import numpy as np
    feats_np = np.asarray(feats)
    trans = np.asarray(P['transitions'])
    fvar = np.full((NT,), NEG_INF, np.float32)
    fvar[tag2id[START_TAG]] = 0.0
    bps = []
    for t in range(feats_np.shape[0]):
        scores = fvar[None, :] + trans                      # [next, prev]
        bps.append(scores.argmax(axis=1))
        fvar = scores.max(axis=1) + feats_np[t]
    term = fvar + trans[tag2id[STOP_TAG]]
    best = int(term.argmax())
    score = float(term[best])
    path = [best]
    for bp_t in reversed(bps):
        path.append(int(bp_t[path[-1]]))
    start = path.pop()
    path.reverse()
    return score, path, start


if __name__ == "__main__":
    vocab_size = 20
    embedding_dim = 16
    hidden_dim = 32
    seq_len = 8
    tag2id = {'B': 0, 'I': 1, 'O': 2, START_TAG: 3, STOP_TAG: 4}

    key = jax.random.PRNGKey(0)
    pkey, skey = jax.random.split(key)
    P = make_params(pkey, vocab_size, embedding_dim, hidden_dim, tag2id)
    F, NTP = fold_params(P, hidden_dim, len(tag2id))
    sentence = jax.random.randint(skey, (seq_len,), 0, vocab_size, jnp.int32)

    score, tag_seq, start = bilstm_crf_forward(
        sentence, F,
        hidden_dim=hidden_dim, num_tags=len(tag2id), num_tags_padded=NTP,
        start_idx=tag2id[START_TAG], stop_idx=tag2id[STOP_TAG])
    jax.block_until_ready((score, tag_seq, start))

    ref_score, ref_path, ref_start = reference_forward(sentence, P, tag2id, hidden_dim)
    assert abs(float(score) - ref_score) < 1e-3, (float(score), ref_score)
    assert [int(x) for x in tag_seq] == ref_path, ([int(x) for x in tag_seq], ref_path)
    assert int(start) == tag2id[START_TAG] == ref_start

    print("KERNEL_OK")
</pallas_src>

<mosaic_0001>
module attributes {stable_mosaic.version = 11 : i64} {
  func.func @_bilstm_crf_kernel(%arg0: memref<8x16xf32, #tpu.memory_space<vmem>>, %arg1: memref<16x64xf32, #tpu.memory_space<vmem>>, %arg2: memref<16x64xf32, #tpu.memory_space<vmem>>, %arg3: memref<1x64xf32, #tpu.memory_space<vmem>>, %arg4: memref<16x64xf32, #tpu.memory_space<vmem>>, %arg5: memref<16x64xf32, #tpu.memory_space<vmem>>, %arg6: memref<1x64xf32, #tpu.memory_space<vmem>>, %arg7: memref<2x16xf32, #tpu.memory_space<vmem>>, %arg8: memref<2x16xf32, #tpu.memory_space<vmem>>, %arg9: memref<32x8xf32, #tpu.memory_space<vmem>>, %arg10: memref<1x8xf32, #tpu.memory_space<vmem>>, %arg11: memref<8x8xf32, #tpu.memory_space<vmem>>, %arg12: memref<8x8xf32, #tpu.memory_space<vmem>>, %arg13: memref<1x8xi32, #tpu.memory_space<vmem>>, %arg14: memref<1x1xf32, #tpu.memory_space<vmem>>, %arg15: memref<1x1xi32, #tpu.memory_space<vmem>>, %arg16: memref<8x64xf32, #tpu.memory_space<vmem>>, %arg17: memref<8x64xf32, #tpu.memory_space<vmem>>, %arg18: memref<8x16xf32, #tpu.memory_space<vmem>>, %arg19: memref<8x16xf32, #tpu.memory_space<vmem>>, %arg20: memref<8x8xf32, #tpu.memory_space<vmem>>, %arg21: memref<8x8xi32, #tpu.memory_space<vmem>>) attributes {dimension_semantics = [], scalar_prefetch = 0 : i64, scratch_operands = 6 : i64, tpu.core_type = #tpu.core_type<tc>} {
    %c0 = arith.constant 0 : index
    %c0_0 = arith.constant 0 : index
    %0 = vector.load %arg0[%c0, %c0_0] : memref<8x16xf32, #tpu.memory_space<vmem>>, vector<8x16xf32>
    %c0_1 = arith.constant 0 : index
    %c0_2 = arith.constant 0 : index
    %1 = vector.load %arg1[%c0_1, %c0_2] : memref<16x64xf32, #tpu.memory_space<vmem>>, vector<16x64xf32>
    %cst = arith.constant dense<0.000000e+00> : vector<8x64xf32>
    %2 = tpu.matmul %0, %1, %cst {dimension_numbers = #tpu.dot_dimension_numbers<[1], [0], [0], [1], [0, 0, 1, 1], [], []>} : vector<8x16xf32>, vector<16x64xf32>, vector<8x64xf32> -> vector<8x64xf32>
    %c0_3 = arith.constant 0 : index
    %c0_4 = arith.constant 0 : index
    %3 = vector.load %arg3[%c0_3, %c0_4] : memref<1x64xf32, #tpu.memory_space<vmem>>, vector<1x64xf32>
    %4 = vector.broadcast %3 : vector<1x64xf32> to vector<8x64xf32>
    %5 = arith.addf %2, %4 : vector<8x64xf32>
    %c0_5 = arith.constant 0 : index
    %c0_6 = arith.constant 0 : index
    %6 = vector.load %arg16[%c0_5, %c0_6] : memref<8x64xf32, #tpu.memory_space<vmem>>, vector<8x64xf32>
    tpu.vector_store %arg16[%c0_5, %c0_6], %5 {strides = array<i32>} : memref<8x64xf32, #tpu.memory_space<vmem>>, vector<8x64xf32>,
    %c0_7 = arith.constant 0 : index
    %c0_8 = arith.constant 0 : index
    %7 = vector.load %arg4[%c0_7, %c0_8] : memref<16x64xf32, #tpu.memory_space<vmem>>, vector<16x64xf32>
    %cst_9 = arith.constant dense<0.000000e+00> : vector<8x64xf32>
    %8 = tpu.matmul %0, %7, %cst_9 {dimension_numbers = #tpu.dot_dimension_numbers<[1], [0], [0], [1], [0, 0, 1, 1], [], []>} : vector<8x16xf32>, vector<16x64xf32>, vector<8x64xf32> -> vector<8x64xf32>
    %c0_10 = arith.constant 0 : index
    %c0_11 = arith.constant 0 : index
    %9 = vector.load %arg6[%c0_10, %c0_11] : memref<1x64xf32, #tpu.memory_space<vmem>>, vector<1x64xf32>
    %10 = vector.broadcast %9 : vector<1x64xf32> to vector<8x64xf32>
    %11 = arith.addf %8, %10 : vector<8x64xf32>
    %c0_12 = arith.constant 0 : index
    %c0_13 = arith.constant 0 : index
    %12 = vector.load %arg17[%c0_12, %c0_13] : memref<8x64xf32, #tpu.memory_space<vmem>>, vector<8x64xf32>
    tpu.vector_store %arg17[%c0_12, %c0_13], %11 {strides = array<i32>} : memref<8x64xf32, #tpu.memory_space<vmem>>, vector<8x64xf32>,
    %c0_14 = arith.constant 0 : index
    %c0_15 = arith.constant 0 : index
    %13 = vector.load %arg2[%c0_14, %c0_15] : memref<16x64xf32, #tpu.memory_space<vmem>>, vector<16x64xf32>
    %c0_16 = arith.constant 0 : index
    %c0_17 = arith.constant 0 : index
    %14 = vector.load %arg5[%c0_16, %c0_17] : memref<16x64xf32, #tpu.memory_space<vmem>>, vector<16x64xf32>
    %c0_18 = arith.constant 0 : index
    %c0_19 = arith.constant 0 : index
    %15 = vector.load %arg7[%c0_18, %c0_19] : memref<2x16xf32, #tpu.memory_space<vmem>>, vector<1x16xf32>
    %c0_20 = arith.constant 0 : index
    %c0_21 = arith.constant 0 : index
    %16 = vector.load %arg8[%c0_20, %c0_21] : memref<2x16xf32, #tpu.memory_space<vmem>>, vector<1x16xf32>
    %c1 = arith.constant 1 : index
    %c0_22 = arith.constant 0 : index
    %17 = vector.load %arg7[%c1, %c0_22] : memref<2x16xf32, #tpu.memory_space<vmem>>, vector<1x16xf32>
    %c1_23 = arith.constant 1 : index
    %c0_24 = arith.constant 0 : index
    %18 = vector.load %arg8[%c1_23, %c0_24] : memref<2x16xf32, #tpu.memory_space<vmem>>, vector<1x16xf32>
    %c0_i32 = arith.constant 0 : i32
    %c7_i32 = arith.constant 7 : i32
    %19 = arith.subi %c7_i32, %c0_i32 : i32
    %20 = arith.index_cast %c0_i32 : i32 to index
    %c0_25 = arith.constant 0 : index
    %21 = vector.load %arg16[%20, %c0_25] : memref<8x64xf32, #tpu.memory_space<vmem>>, vector<1x64xf32>
    %cst_26 = arith.constant dense<0.000000e+00> : vector<1x64xf32>
    %22 = tpu.matmul %15, %13, %cst_26 {dimension_numbers = #tpu.dot_dimension_numbers<[1], [0], [0], [1], [0, 0, 1, 1], [], []>} : vector<1x16xf32>, vector<16x64xf32>, vector<1x64xf32> -> vector<1x64xf32>
    %23 = arith.addf %21, %22 : vector<1x64xf32>
    %24 = arith.index_cast %19 : i32 to index
    %c0_27 = arith.constant 0 : index
    %25 = vector.load %arg17[%24, %c0_27] : memref<8x64xf32, #tpu.memory_space<vmem>>, vector<1x64xf32>
    %cst_28 = arith.constant dense<0.000000e+00> : vector<1x64xf32>
    %26 = tpu.matmul %17, %14, %cst_28 {dimension_numbers = #tpu.dot_dimension_numbers<[1], [0], [0], [1], [0, 0, 1, 1], [], []>} : vector<1x16xf32>, vector<16x64xf32>, vector<1x64xf32> -> vector<1x64xf32>
    %27 = arith.addf %25, %26 : vector<1x64xf32>
    %28 = vector.extract_strided_slice %23 {offsets = [0, 0], sizes = [1, 16], strides = [1, 1]} : vector<1x64xf32> to vector<1x16xf32>
    %29 = arith.negf %28 : vector<1x16xf32>
    %30 = math.exp %29 : vector<1x16xf32>
    %cst_29 = arith.constant 1.000000e+00 : f32
    %31 = vector.broadcast %cst_29 : f32 to vector<1x16xf32>
    %32 = arith.addf %31, %30 : vector<1x16xf32>
    %33 = arith.divf %31, %32 : vector<1x16xf32>
    %34 = vector.extract_strided_slice %23 {offsets = [0, 16], sizes = [1, 16], strides = [1, 1]} : vector<1x64xf32> to vector<1x16xf32>
    %35 = arith.negf %34 : vector<1x16xf32>
    %36 = math.exp %35 : vector<1x16xf32>
    %cst_30 = arith.constant 1.000000e+00 : f32
    %37 = vector.broadcast %cst_30 : f32 to vector<1x16xf32>
    %38 = arith.addf %37, %36 : vector<1x16xf32>
    %39 = arith.divf %37, %38 : vector<1x16xf32>
    %40 = vector.extract_strided_slice %23 {offsets = [0, 32], sizes = [1, 16], strides = [1, 1]} : vector<1x64xf32> to vector<1x16xf32>
    %41 = math.tanh %40 : vector<1x16xf32>
    %42 = vector.extract_strided_slice %23 {offsets = [0, 48], sizes = [1, 16], strides = [1, 1]} : vector<1x64xf32> to vector<1x16xf32>
    %43 = arith.negf %42 : vector<1x16xf32>
    %44 = math.exp %43 : vector<1x16xf32>
    %cst_31 = arith.constant 1.000000e+00 : f32
    %45 = vector.broadcast %cst_31 : f32 to vector<1x16xf32>
    %46 = arith.addf %45, %44 : vector<1x16xf32>
    %47 = arith.divf %45, %46 : vector<1x16xf32>
    %48 = arith.mulf %39, %16 : vector<1x16xf32>
    %49 = arith.mulf %33, %41 : vector<1x16xf32>
    %50 = arith.addf %48, %49 : vector<1x16xf32>
    %51 = math.tanh %50 : vector<1x16xf32>
    %52 = arith.mulf %47, %51 : vector<1x16xf32>
    %53 = vector.extract_strided_slice %27 {offsets = [0, 0], sizes = [1, 16], strides = [1, 1]} : vector<1x64xf32> to vector<1x16xf32>
    %54 = arith.negf %53 : vector<1x16xf32>
    %55 = math.exp %54 : vector<1x16xf32>
    %cst_32 = arith.constant 1.000000e+00 : f32
    %56 = vector.broadcast %cst_32 : f32 to vector<1x16xf32>
    %57 = arith.addf %56, %55 : vector<1x16xf32>
    %58 = arith.divf %56, %57 : vector<1x16xf32>
    %59 = vector.extract_strided_slice %27 {offsets = [0, 16], sizes = [1, 16], strides = [1, 1]} : vector<1x64xf32> to vector<1x16xf32>
    %60 = arith.negf %59 : vector<1x16xf32>
    %61 = math.exp %60 : vector<1x16xf32>
    %cst_33 = arith.constant 1.000000e+00 : f32
    %62 = vector.broadcast %cst_33 : f32 to vector<1x16xf32>
    %63 = arith.addf %62, %61 : vector<1x16xf32>
    %64 = arith.divf %62, %63 : vector<1x16xf32>
    %65 = vector.extract_strided_slice %27 {offsets = [0, 32], sizes = [1, 16], strides = [1, 1]} : vector<1x64xf32> to vector<1x16xf32>
    %66 = math.tanh %65 : vector<1x16xf32>
    %67 = vector.extract_strided_slice %27 {offsets = [0, 48], sizes = [1, 16], strides = [1, 1]} : vector<1x64xf32> to vector<1x16xf32>
    %68 = arith.negf %67 : vector<1x16xf32>
    %69 = math.exp %68 : vector<1x16xf32>
    %cst_34 = arith.constant 1.000000e+00 : f32
    %70 = vector.broadcast %cst_34 : f32 to vector<1x16xf32>
    %71 = arith.addf %70, %69 : vector<1x16xf32>
    %72 = arith.divf %70, %71 : vector<1x16xf32>
    %73 = arith.mulf %64, %18 : vector<1x16xf32>
    %74 = arith.mulf %58, %66 : vector<1x16xf32>
    %75 = arith.addf %73, %74 : vector<1x16xf32>
    %76 = math.tanh %75 : vector<1x16xf32>
    %77 = arith.mulf %72, %76 : vector<1x16xf32>
    %78 = arith.index_cast %c0_i32 : i32 to index
    %c0_35 = arith.constant 0 : index
    %79 = vector.load %arg18[%78, %c0_35] : memref<8x16xf32, #tpu.memory_space<vmem>>, vector<1x16xf32>
    tpu.vector_store %arg18[%78, %c0_35], %52 {strides = array<i32>} : memref<8x16xf32, #tpu.memory_space<vmem>>, vector<1x16xf32>,
    %80 = arith.index_cast %19 : i32 to index
    %c0_36 = arith.constant 0 : index
    %81 = vector.load %arg19[%80, %c0_36] : memref<8x16xf32, #tpu.memory_space<vmem>>, vector<1x16xf32>
    tpu.vector_store %arg19[%80, %c0_36], %77 {strides = array<i32>} : memref<8x16xf32, #tpu.memory_space<vmem>>, vector<1x16xf32>,
    %c1_i32 = arith.constant 1 : i32
    %c7_i32_37 = arith.constant 7 : i32
    %82 = arith.subi %c7_i32_37, %c1_i32 : i32
    %83 = arith.index_cast %c1_i32 : i32 to index
    %c0_38 = arith.constant 0 : index
    %84 = vector.load %arg16[%83, %c0_38] : memref<8x64xf32, #tpu.memory_space<vmem>>, vector<1x64xf32>
    %cst_39 = arith.constant dense<0.000000e+00> : vector<1x64xf32>
    %85 = tpu.matmul %52, %13, %cst_39 {dimension_numbers = #tpu.dot_dimension_numbers<[1], [0], [0], [1], [0, 0, 1, 1], [], []>} : vector<1x16xf32>, vector<16x64xf32>, vector<1x64xf32> -> vector<1x64xf32>
    %86 = arith.addf %84, %85 : vector<1x64xf32>
    %87 = arith.index_cast %82 : i32 to index
    %c0_40 = arith.constant 0 : index
    %88 = vector.load %arg17[%87, %c0_40] : memref<8x64xf32, #tpu.memory_space<vmem>>, vector<1x64xf32>
    %cst_41 = arith.constant dense<0.000000e+00> : vector<1x64xf32>
    %89 = tpu.matmul %77, %14, %cst_41 {dimension_numbers = #tpu.dot_dimension_numbers<[1], [0], [0], [1], [0, 0, 1, 1], [], []>} : vector<1x16xf32>, vector<16x64xf32>, vector<1x64xf32> -> vector<1x64xf32>
    %90 = arith.addf %88, %89 : vector<1x64xf32>
    %91 = vector.extract_strided_slice %86 {offsets = [0, 0], sizes = [1, 16], strides = [1, 1]} : vector<1x64xf32> to vector<1x16xf32>
    %92 = arith.negf %91 : vector<1x16xf32>
    %93 = math.exp %92 : vector<1x16xf32>
    %cst_42 = arith.constant 1.000000e+00 : f32
    %94 = vector.broadcast %cst_42 : f32 to vector<1x16xf32>
    %95 = arith.addf %94, %93 : vector<1x16xf32>
    %96 = arith.divf %94, %95 : vector<1x16xf32>
    %97 = vector.extract_strided_slice %86 {offsets = [0, 16], sizes = [1, 16], strides = [1, 1]} : vector<1x64xf32> to vector<1x16xf32>
    %98 = arith.negf %97 : vector<1x16xf32>
    %99 = math.exp %98 : vector<1x16xf32>
    %cst_43 = arith.constant 1.000000e+00 : f32
    %100 = vector.broadcast %cst_43 : f32 to vector<1x16xf32>
    %101 = arith.addf %100, %99 : vector<1x16xf32>
    %102 = arith.divf %100, %101 : vector<1x16xf32>
    %103 = vector.extract_strided_slice %86 {offsets = [0, 32], sizes = [1, 16], strides = [1, 1]} : vector<1x64xf32> to vector<1x16xf32>
    %104 = math.tanh %103 : vector<1x16xf32>
    %105 = vector.extract_strided_slice %86 {offsets = [0, 48], sizes = [1, 16], strides = [1, 1]} : vector<1x64xf32> to vector<1x16xf32>
    %106 = arith.negf %105 : vector<1x16xf32>
    %107 = math.exp %106 : vector<1x16xf32>
    %cst_44 = arith.constant 1.000000e+00 : f32
    %108 = vector.broadcast %cst_44 : f32 to vector<1x16xf32>
    %109 = arith.addf %108, %107 : vector<1x16xf32>
    %110 = arith.divf %108, %109 : vector<1x16xf32>
    %111 = arith.mulf %102, %50 : vector<1x16xf32>
    %112 = arith.mulf %96, %104 : vector<1x16xf32>
    %113 = arith.addf %111, %112 : vector<1x16xf32>
    %114 = math.tanh %113 : vector<1x16xf32>
    %115 = arith.mulf %110, %114 : vector<1x16xf32>
    %116 = vector.extract_strided_slice %90 {offsets = [0, 0], sizes = [1, 16], strides = [1, 1]} : vector<1x64xf32> to vector<1x16xf32>
    %117 = arith.negf %116 : vector<1x16xf32>
    %118 = math.exp %117 : vector<1x16xf32>
    %cst_45 = arith.constant 1.000000e+00 : f32
    %119 = vector.broadcast %cst_45 : f32 to vector<1x16xf32>
    %120 = arith.addf %119, %118 : vector<1x16xf32>
    %121 = arith.divf %119, %120 : vector<1x16xf32>
    %122 = vector.extract_strided_slice %90 {offsets = [0, 16], sizes = [1, 16], strides = [1, 1]} : vector<1x64xf32> to vector<1x16xf32>
    %123 = arith.negf %122 : vector<1x16xf32>
    %124 = math.exp %123 : vector<1x16xf32>
    %cst_46 = arith.constant 1.000000e+00 : f32
    %125 = vector.broadcast %cst_46 : f32 to vector<1x16xf32>
    %126 = arith.addf %125, %124 : vector<1x16xf32>
    %127 = arith.divf %125, %126 : vector<1x16xf32>
    %128 = vector.extract_strided_slice %90 {offsets = [0, 32], sizes = [1, 16], strides = [1, 1]} : vector<1x64xf32> to vector<1x16xf32>
    %129 = math.tanh %128 : vector<1x16xf32>
    %130 = vector.extract_strided_slice %90 {offsets = [0, 48], sizes = [1, 16], strides = [1, 1]} : vector<1x64xf32> to vector<1x16xf32>
    %131 = arith.negf %130 : vector<1x16xf32>
    %132 = math.exp %131 : vector<1x16xf32>
    %cst_47 = arith.constant 1.000000e+00 : f32
    %133 = vector.broadcast %cst_47 : f32 to vector<1x16xf32>
    %134 = arith.addf %133, %132 : vector<1x16xf32>
    %135 = arith.divf %133, %134 : vector<1x16xf32>
    %136 = arith.mulf %127, %75 : vector<1x16xf32>
    %137 = arith.mulf %121, %129 : vector<1x16xf32>
    %138 = arith.addf %136, %137 : vector<1x16xf32>
    %139 = math.tanh %138 : vector<1x16xf32>
    %140 = arith.mulf %135, %139 : vector<1x16xf32>
    %141 = arith.index_cast %c1_i32 : i32 to index
    %c0_48 = arith.constant 0 : index
    %142 = vector.load %arg18[%141, %c0_48] : memref<8x16xf32, #tpu.memory_space<vmem>>, vector<1x16xf32>
    tpu.vector_store %arg18[%141, %c0_48], %115 {strides = array<i32>} : memref<8x16xf32, #tpu.memory_space<vmem>>, vector<1x16xf32>,
    %143 = arith.index_cast %82 : i32 to index
    %c0_49 = arith.constant 0 : index
    %144 = vector.load %arg19[%143, %c0_49] : memref<8x16xf32, #tpu.memory_space<vmem>>, vector<1x16xf32>
    tpu.vector_store %arg19[%143, %c0_49], %140 {strides = array<i32>} : memref<8x16xf32, #tpu.memory_space<vmem>>, vector<1x16xf32>,
    %c2_i32 = arith.constant 2 : i32
    %c7_i32_50 = arith.constant 7 : i32
    %145 = arith.subi %c7_i32_50, %c2_i32 : i32
    %146 = arith.index_cast %c2_i32 : i32 to index
    %c0_51 = arith.constant 0 : index
    %147 = vector.load %arg16[%146, %c0_51] : memref<8x64xf32, #tpu.memory_space<vmem>>, vector<1x64xf32>
    %cst_52 = arith.constant dense<0.000000e+00> : vector<1x64xf32>
    %148 = tpu.matmul %115, %13, %cst_52 {dimension_numbers = #tpu.dot_dimension_numbers<[1], [0], [0], [1], [0, 0, 1, 1], [], []>} : vector<1x16xf32>, vector<16x64xf32>, vector<1x64xf32> -> vector<1x64xf32>
    %149 = arith.addf %147, %148 : vector<1x64xf32>
    %150 = arith.index_cast %145 : i32 to index
    %c0_53 = arith.constant 0 : index
    %151 = vector.load %arg17[%150, %c0_53] : memref<8x64xf32, #tpu.memory_space<vmem>>, vector<1x64xf32>
    %cst_54 = arith.constant dense<0.000000e+00> : vector<1x64xf32>
    %152 = tpu.matmul %140, %14, %cst_54 {dimension_numbers = #tpu.dot_dimension_numbers<[1], [0], [0], [1], [0, 0, 1, 1], [], []>} : vector<1x16xf32>, vector<16x64xf32>, vector<1x64xf32> -> vector<1x64xf32>
    %153 = arith.addf %151, %152 : vector<1x64xf32>
    %154 = vector.extract_strided_slice %149 {offsets = [0, 0], sizes = [1, 16], strides = [1, 1]} : vector<1x64xf32> to vector<1x16xf32>
    %155 = arith.negf %154 : vector<1x16xf32>
    %156 = math.exp %155 : vector<1x16xf32>
    %cst_55 = arith.constant 1.000000e+00 : f32
    %157 = vector.broadcast %cst_55 : f32 to vector<1x16xf32>
    %158 = arith.addf %157, %156 : vector<1x16xf32>
    %159 = arith.divf %157, %158 : vector<1x16xf32>
    %160 = vector.extract_strided_slice %149 {offsets = [0, 16], sizes = [1, 16], strides = [1, 1]} : vector<1x64xf32> to vector<1x16xf32>
    %161 = arith.negf %160 : vector<1x16xf32>
    %162 = math.exp %161 : vector<1x16xf32>
    %cst_56 = arith.constant 1.000000e+00 : f32
    %163 = vector.broadcast %cst_56 : f32 to vector<1x16xf32>
    %164 = arith.addf %163, %162 : vector<1x16xf32>
    %165 = arith.divf %163, %164 : vector<1x16xf32>
    %166 = vector.extract_strided_slice %149 {offsets = [0, 32], sizes = [1, 16], strides = [1, 1]} : vector<1x64xf32> to vector<1x16xf32>
    %167 = math.tanh %166 : vector<1x16xf32>
    %168 = vector.extract_strided_slice %149 {offsets = [0, 48], sizes = [1, 16], strides = [1, 1]} : vector<1x64xf32> to vector<1x16xf32>
    %169 = arith.negf %168 : vector<1x16xf32>
    %170 = math.exp %169 : vector<1x16xf32>
    %cst_57 = arith.constant 1.000000e+00 : f32
    %171 = vector.broadcast %cst_57 : f32 to vector<1x16xf32>
    %172 = arith.addf %171, %170 : vector<1x16xf32>
    %173 = arith.divf %171, %172 : vector<1x16xf32>
    %174 = arith.mulf %165, %113 : vector<1x16xf32>
    %175 = arith.mulf %159, %167 : vector<1x16xf32>
    %176 = arith.addf %174, %175 : vector<1x16xf32>
    %177 = math.tanh %176 : vector<1x16xf32>
    %178 = arith.mulf %173, %177 : vector<1x16xf32>
    %179 = vector.extract_strided_slice %153 {offsets = [0, 0], sizes = [1, 16], strides = [1, 1]} : vector<1x64xf32> to vector<1x16xf32>
    %180 = arith.negf %179 : vector<1x16xf32>
    %181 = math.exp %180 : vector<1x16xf32>
    %cst_58 = arith.constant 1.000000e+00 : f32
    %182 = vector.broadcast %cst_58 : f32 to vector<1x16xf32>
    %183 = arith.addf %182, %181 : vector<1x16xf32>
    %184 = arith.divf %182, %183 : vector<1x16xf32>
    %185 = vector.extract_strided_slice %153 {offsets = [0, 16], sizes = [1, 16], strides = [1, 1]} : vector<1x64xf32> to vector<1x16xf32>
    %186 = arith.negf %185 : vector<1x16xf32>
    %187 = math.exp %186 : vector<1x16xf32>
    %cst_59 = arith.constant 1.000000e+00 : f32
    %188 = vector.broadcast %cst_59 : f32 to vector<1x16xf32>
    %189 = arith.addf %188, %187 : vector<1x16xf32>
    %190 = arith.divf %188, %189 : vector<1x16xf32>
    %191 = vector.extract_strided_slice %153 {offsets = [0, 32], sizes = [1, 16], strides = [1, 1]} : vector<1x64xf32> to vector<1x16xf32>
    %192 = math.tanh %191 : vector<1x16xf32>
    %193 = vector.extract_strided_slice %153 {offsets = [0, 48], sizes = [1, 16], strides = [1, 1]} : vector<1x64xf32> to vector<1x16xf32>
    %194 = arith.negf %193 : vector<1x16xf32>
    %195 = math.exp %194 : vector<1x16xf32>
    %cst_60 = arith.constant 1.000000e+00 : f32
    %196 = vector.broadcast %cst_60 : f32 to vector<1x16xf32>
    %197 = arith.addf %196, %195 : vector<1x16xf32>
    %198 = arith.divf %196, %197 : vector<1x16xf32>
    %199 = arith.mulf %190, %138 : vector<1x16xf32>
    %200 = arith.mulf %184, %192 : vector<1x16xf32>
    %201 = arith.addf %199, %200 : vector<1x16xf32>
    %202 = math.tanh %201 : vector<1x16xf32>
    %203 = arith.mulf %198, %202 : vector<1x16xf32>
    %204 = arith.index_cast %c2_i32 : i32 to index
    %c0_61 = arith.constant 0 : index
    %205 = vector.load %arg18[%204, %c0_61] : memref<8x16xf32, #tpu.memory_space<vmem>>, vector<1x16xf32>
    tpu.vector_store %arg18[%204, %c0_61], %178 {strides = array<i32>} : memref<8x16xf32, #tpu.memory_space<vmem>>, vector<1x16xf32>,
    %206 = arith.index_cast %145 : i32 to index
    %c0_62 = arith.constant 0 : index
    %207 = vector.load %arg19[%206, %c0_62] : memref<8x16xf32, #tpu.memory_space<vmem>>, vector<1x16xf32>
    tpu.vector_store %arg19[%206, %c0_62], %203 {strides = array<i32>} : memref<8x16xf32, #tpu.memory_space<vmem>>, vector<1x16xf32>,
    %c3_i32 = arith.constant 3 : i32
    %c7_i32_63 = arith.constant 7 : i32
    %208 = arith.subi %c7_i32_63, %c3_i32 : i32
    %209 = arith.index_cast %c3_i32 : i32 to index
    %c0_64 = arith.constant 0 : index
    %210 = vector.load %arg16[%209, %c0_64] : memref<8x64xf32, #tpu.memory_space<vmem>>, vector<1x64xf32>
    %cst_65 = arith.constant dense<0.000000e+00> : vector<1x64xf32>
    %211 = tpu.matmul %178, %13, %cst_65 {dimension_numbers = #tpu.dot_dimension_numbers<[1], [0], [0], [1], [0, 0, 1, 1], [], []>} : vector<1x16xf32>, vector<16x64xf32>, vector<1x64xf32> -> vector<1x64xf32>
    %212 = arith.addf %210, %211 : vector<1x64xf32>
    %213 = arith.index_cast %208 : i32 to index
    %c0_66 = arith.constant 0 : index
    %214 = vector.load %arg17[%213, %c0_66] : memref<8x64xf32, #tpu.memory_space<vmem>>, vector<1x64xf32>
    %cst_67 = arith.constant dense<0.000000e+00> : vector<1x64xf32>
    %215 = tpu.matmul %203, %14, %cst_67 {dimension_numbers = #tpu.dot_dimension_numbers<[1], [0], [0], [1], [0, 0, 1, 1], [], []>} : vector<1x16xf32>, vector<16x64xf32>, vector<1x64xf32> -> vector<1x64xf32>
    %216 = arith.addf %214, %215 : vector<1x64xf32>
    %217 = vector.extract_strided_slice %212 {offsets = [0, 0], sizes = [1, 16], strides = [1, 1]} : vector<1x64xf32> to vector<1x16xf32>
    %218 = arith.negf %217 : vector<1x16xf32>
    %219 = math.exp %218 : vector<1x16xf32>
    %cst_68 = arith.constant 1.000000e+00 : f32
    %220 = vector.broadcast %cst_68 : f32 to vector<1x16xf32>
    %221 = arith.addf %220, %219 : vector<1x16xf32>
    %222 = arith.divf %220, %221 : vector<1x16xf32>
    %223 = vector.extract_strided_slice %212 {offsets = [0, 16], sizes = [1, 16], strides = [1, 1]} : vector<1x64xf32> to vector<1x16xf32>
    %224 = arith.negf %223 : vector<1x16xf32>
    %225 = math.exp %224 : vector<1x16xf32>
    %cst_69 = arith.constant 1.000000e+00 : f32
    %226 = vector.broadcast %cst_69 : f32 to vector<1x16xf32>
    %227 = arith.addf %226, %225 : vector<1x16xf32>
    %228 = arith.divf %226, %227 : vector<1x16xf32>
    %229 = vector.extract_strided_slice %212 {offsets = [0, 32], sizes = [1, 16], strides = [1, 1]} : vector<1x64xf32> to vector<1x16xf32>
    %230 = math.tanh %229 : vector<1x16xf32>
    %231 = vector.extract_strided_slice %212 {offsets = [0, 48], sizes = [1, 16], strides = [1, 1]} : vector<1x64xf32> to vector<1x16xf32>
    %232 = arith.negf %231 : vector<1x16xf32>
    %233 = math.exp %232 : vector<1x16xf32>
    %cst_70 = arith.constant 1.000000e+00 : f32
    %234 = vector.broadcast %cst_70 : f32 to vector<1x16xf32>
    %235 = arith.addf %234, %233 : vector<1x16xf32>
    %236 = arith.divf %234, %235 : vector<1x16xf32>
    %237 = arith.mulf %228, %176 : vector<1x16xf32>
    %238 = arith.mulf %222, %230 : vector<1x16xf32>
    %239 = arith.addf %237, %238 : vector<1x16xf32>
    %240 = math.tanh %239 : vector<1x16xf32>
    %241 = arith.mulf %236, %240 : vector<1x16xf32>
    %242 = vector.extract_strided_slice %216 {offsets = [0, 0], sizes = [1, 16], strides = [1, 1]} : vector<1x64xf32> to vector<1x16xf32>
    %243 = arith.negf %242 : vector<1x16xf32>
    %244 = math.exp %243 : vector<1x16xf32>
    %cst_71 = arith.constant 1.000000e+00 : f32
    %245 = vector.broadcast %cst_71 : f32 to vector<1x16xf32>
    %246 = arith.addf %245, %244 : vector<1x16xf32>
    %247 = arith.divf %245, %246 : vector<1x16xf32>
    %248 = vector.extract_strided_slice %216 {offsets = [0, 16], sizes = [1, 16], strides = [1, 1]} : vector<1x64xf32> to vector<1x16xf32>
    %249 = arith.negf %248 : vector<1x16xf32>
    %250 = math.exp %249 : vector<1x16xf32>
    %cst_72 = arith.constant 1.000000e+00 : f32
    %251 = vector.broadcast %cst_72 : f32 to vector<1x16xf32>
    %252 = arith.addf %251, %250 : vector<1x16xf32>
    %253 = arith.divf %251, %252 : vector<1x16xf32>
    %254 = vector.extract_strided_slice %216 {offsets = [0, 32], sizes = [1, 16], strides = [1, 1]} : vector<1x64xf32> to vector<1x16xf32>
    %255 = math.tanh %254 : vector<1x16xf32>
    %256 = vector.extract_strided_slice %216 {offsets = [0, 48], sizes = [1, 16], strides = [1, 1]} : vector<1x64xf32> to vector<1x16xf32>
    %257 = arith.negf %256 : vector<1x16xf32>
    %258 = math.exp %257 : vector<1x16xf32>
    %cst_73 = arith.constant 1.000000e+00 : f32
    %259 = vector.broadcast %cst_73 : f32 to vector<1x16xf32>
    %260 = arith.addf %259, %258 : vector<1x16xf32>
    %261 = arith.divf %259, %260 : vector<1x16xf32>
    %262 = arith.mulf %253, %201 : vector<1x16xf32>
    %263 = arith.mulf %247, %255 : vector<1x16xf32>
    %264 = arith.addf %262, %263 : vector<1x16xf32>
    %265 = math.tanh %264 : vector<1x16xf32>
    %266 = arith.mulf %261, %265 : vector<1x16xf32>
    %267 = arith.index_cast %c3_i32 : i32 to index
    %c0_74 = arith.constant 0 : index
    %268 = vector.load %arg18[%267, %c0_74] : memref<8x16xf32, #tpu.memory_space<vmem>>, vector<1x16xf32>
    tpu.vector_store %arg18[%267, %c0_74], %241 {strides = array<i32>} : memref<8x16xf32, #tpu.memory_space<vmem>>, vector<1x16xf32>,
    %269 = arith.index_cast %208 : i32 to index
    %c0_75 = arith.constant 0 : index
    %270 = vector.load %arg19[%269, %c0_75] : memref<8x16xf32, #tpu.memory_space<vmem>>, vector<1x16xf32>
    tpu.vector_store %arg19[%269, %c0_75], %266 {strides = array<i32>} : memref<8x16xf32, #tpu.memory_space<vmem>>, vector<1x16xf32>,
    %c4_i32 = arith.constant 4 : i32
    %c7_i32_76 = arith.constant 7 : i32
    %271 = arith.subi %c7_i32_76, %c4_i32 : i32
    %272 = arith.index_cast %c4_i32 : i32 to index
    %c0_77 = arith.constant 0 : index
    %273 = vector.load %arg16[%272, %c0_77] : memref<8x64xf32, #tpu.memory_space<vmem>>, vector<1x64xf32>
    %cst_78 = arith.constant dense<0.000000e+00> : vector<1x64xf32>
    %274 = tpu.matmul %241, %13, %cst_78 {dimension_numbers = #tpu.dot_dimension_numbers<[1], [0], [0], [1], [0, 0, 1, 1], [], []>} : vector<1x16xf32>, vector<16x64xf32>, vector<1x64xf32> -> vector<1x64xf32>
    %275 = arith.addf %273, %274 : vector<1x64xf32>
    %276 = arith.index_cast %271 : i32 to index
    %c0_79 = arith.constant 0 : index
    %277 = vector.load %arg17[%276, %c0_79] : memref<8x64xf32, #tpu.memory_space<vmem>>, vector<1x64xf32>
    %cst_80 = arith.constant dense<0.000000e+00> : vector<1x64xf32>
    %278 = tpu.matmul %266, %14, %cst_80 {dimension_numbers = #tpu.dot_dimension_numbers<[1], [0], [0], [1], [0, 0, 1, 1], [], []>} : vector<1x16xf32>, vector<16x64xf32>, vector<1x64xf32> -> vector<1x64xf32>
    %279 = arith.addf %277, %278 : vector<1x64xf32>
    %280 = vector.extract_strided_slice %275 {offsets = [0, 0], sizes = [1, 16], strides = [1, 1]} : vector<1x64xf32> to vector<1x16xf32>
    %281 = arith.negf %280 : vector<1x16xf32>
    %282 = math.exp %281 : vector<1x16xf32>
    %cst_81 = arith.constant 1.000000e+00 : f32
    %283 = vector.broadcast %cst_81 : f32 to vector<1x16xf32>
    %284 = arith.addf %283, %282 : vector<1x16xf32>
    %285 = arith.divf %283, %284 : vector<1x16xf32>
    %286 = vector.extract_strided_slice %275 {offsets = [0, 16], sizes = [1, 16], strides = [1, 1]} : vector<1x64xf32> to vector<1x16xf32>
    %287 = arith.negf %286 : vector<1x16xf32>
    %288 = math.exp %287 : vector<1x16xf32>
    %cst_82 = arith.constant 1.000000e+00 : f32
    %289 = vector.broadcast %cst_82 : f32 to vector<1x16xf32>
    %290 = arith.addf %289, %288 : vector<1x16xf32>
    %291 = arith.divf %289, %290 : vector<1x16xf32>
    %292 = vector.extract_strided_slice %275 {offsets = [0, 32], sizes = [1, 16], strides = [1, 1]} : vector<1x64xf32> to vector<1x16xf32>
    %293 = math.tanh %292 : vector<1x16xf32>
    %294 = vector.extract_strided_slice %275 {offsets = [0, 48], sizes = [1, 16], strides = [1, 1]} : vector<1x64xf32> to vector<1x16xf32>
    %295 = arith.negf %294 : vector<1x16xf32>
    %296 = math.exp %295 : vector<1x16xf32>
    %cst_83 = arith.constant 1.000000e+00 : f32
    %297 = vector.broadcast %cst_83 : f32 to vector<1x16xf32>
    %298 = arith.addf %297, %296 : vector<1x16xf32>
    %299 = arith.divf %297, %298 : vector<1x16xf32>
    %300 = arith.mulf %291, %239 : vector<1x16xf32>
    %301 = arith.mulf %285, %293 : vector<1x16xf32>
    %302 = arith.addf %300, %301 : vector<1x16xf32>
    %303 = math.tanh %302 : vector<1x16xf32>
    %304 = arith.mulf %299, %303 : vector<1x16xf32>
    %305 = vector.extract_strided_slice %279 {offsets = [0, 0], sizes = [1, 16], strides = [1, 1]} : vector<1x64xf32> to vector<1x16xf32>
    %306 = arith.negf %305 : vector<1x16xf32>
    %307 = math.exp %306 : vector<1x16xf32>
    %cst_84 = arith.constant 1.000000e+00 : f32
    %308 = vector.broadcast %cst_84 : f32 to vector<1x16xf32>
    %309 = arith.addf %308, %307 : vector<1x16xf32>
    %310 = arith.divf %308, %309 : vector<1x16xf32>
    %311 = vector.extract_strided_slice %279 {offsets = [0, 16], sizes = [1, 16], strides = [1, 1]} : vector<1x64xf32> to vector<1x16xf32>
    %312 = arith.negf %311 : vector<1x16xf32>
    %313 = math.exp %312 : vector<1x16xf32>
    %cst_85 = arith.constant 1.000000e+00 : f32
    %314 = vector.broadcast %cst_85 : f32 to vector<1x16xf32>
    %315 = arith.addf %314, %313 : vector<1x16xf32>
    %316 = arith.divf %314, %315 : vector<1x16xf32>
    %317 = vector.extract_strided_slice %279 {offsets = [0, 32], sizes = [1, 16], strides = [1, 1]} : vector<1x64xf32> to vector<1x16xf32>
    %318 = math.tanh %317 : vector<1x16xf32>
    %319 = vector.extract_strided_slice %279 {offsets = [0, 48], sizes = [1, 16], strides = [1, 1]} : vector<1x64xf32> to vector<1x16xf32>
    %320 = arith.negf %319 : vector<1x16xf32>
    %321 = math.exp %320 : vector<1x16xf32>
    %cst_86 = arith.constant 1.000000e+00 : f32
    %322 = vector.broadcast %cst_86 : f32 to vector<1x16xf32>
    %323 = arith.addf %322, %321 : vector<1x16xf32>
    %324 = arith.divf %322, %323 : vector<1x16xf32>
    %325 = arith.mulf %316, %264 : vector<1x16xf32>
    %326 = arith.mulf %310, %318 : vector<1x16xf32>
    %327 = arith.addf %325, %326 : vector<1x16xf32>
    %328 = math.tanh %327 : vector<1x16xf32>
    %329 = arith.mulf %324, %328 : vector<1x16xf32>
    %330 = arith.index_cast %c4_i32 : i32 to index
    %c0_87 = arith.constant 0 : index
    %331 = vector.load %arg18[%330, %c0_87] : memref<8x16xf32, #tpu.memory_space<vmem>>, vector<1x16xf32>
    tpu.vector_store %arg18[%330, %c0_87], %304 {strides = array<i32>} : memref<8x16xf32, #tpu.memory_space<vmem>>, vector<1x16xf32>,
    %332 = arith.index_cast %271 : i32 to index
    %c0_88 = arith.constant 0 : index
    %333 = vector.load %arg19[%332, %c0_88] : memref<8x16xf32, #tpu.memory_space<vmem>>, vector<1x16xf32>
    tpu.vector_store %arg19[%332, %c0_88], %329 {strides = array<i32>} : memref<8x16xf32, #tpu.memory_space<vmem>>, vector<1x16xf32>,
    %c5_i32 = arith.constant 5 : i32
    %c7_i32_89 = arith.constant 7 : i32
    %334 = arith.subi %c7_i32_89, %c5_i32 : i32
    %335 = arith.index_cast %c5_i32 : i32 to index
    %c0_90 = arith.constant 0 : index
    %336 = vector.load %arg16[%335, %c0_90] : memref<8x64xf32, #tpu.memory_space<vmem>>, vector<1x64xf32>
    %cst_91 = arith.constant dense<0.000000e+00> : vector<1x64xf32>
    %337 = tpu.matmul %304, %13, %cst_91 {dimension_numbers = #tpu.dot_dimension_numbers<[1], [0], [0], [1], [0, 0, 1, 1], [], []>} : vector<1x16xf32>, vector<16x64xf32>, vector<1x64xf32> -> vector<1x64xf32>
    %338 = arith.addf %336, %337 : vector<1x64xf32>
    %339 = arith.index_cast %334 : i32 to index
    %c0_92 = arith.constant 0 : index
    %340 = vector.load %arg17[%339, %c0_92] : memref<8x64xf32, #tpu.memory_space<vmem>>, vector<1x64xf32>
    %cst_93 = arith.constant dense<0.000000e+00> : vector<1x64xf32>
    %341 = tpu.matmul %329, %14, %cst_93 {dimension_numbers = #tpu.dot_dimension_numbers<[1], [0], [0], [1], [0, 0, 1, 1], [], []>} : vector<1x16xf32>, vector<16x64xf32>, vector<1x64xf32> -> vector<1x64xf32>
    %342 = arith.addf %340, %341 : vector<1x64xf32>
    %343 = vector.extract_strided_slice %338 {offsets = [0, 0], sizes = [1, 16], strides = [1, 1]} : vector<1x64xf32> to vector<1x16xf32>
    %344 = arith.negf %343 : vector<1x16xf32>
    %345 = math.exp %344 : vector<1x16xf32>
    %cst_94 = arith.constant 1.000000e+00 : f32
    %346 = vector.broadcast %cst_94 : f32 to vector<1x16xf32>
    %347 = arith.addf %346, %345 : vector<1x16xf32>
    %348 = arith.divf %346, %347 : vector<1x16xf32>
    %349 = vector.extract_strided_slice %338 {offsets = [0, 16], sizes = [1, 16], strides = [1, 1]} : vector<1x64xf32> to vector<1x16xf32>
    %350 = arith.negf %349 : vector<1x16xf32>
    %351 = math.exp %350 : vector<1x16xf32>
    %cst_95 = arith.constant 1.000000e+00 : f32
    %352 = vector.broadcast %cst_95 : f32 to vector<1x16xf32>
    %353 = arith.addf %352, %351 : vector<1x16xf32>
    %354 = arith.divf %352, %353 : vector<1x16xf32>
    %355 = vector.extract_strided_slice %338 {offsets = [0, 32], sizes = [1, 16], strides = [1, 1]} : vector<1x64xf32> to vector<1x16xf32>
    %356 = math.tanh %355 : vector<1x16xf32>
    %357 = vector.extract_strided_slice %338 {offsets = [0, 48], sizes = [1, 16], strides = [1, 1]} : vector<1x64xf32> to vector<1x16xf32>
    %358 = arith.negf %357 : vector<1x16xf32>
    %359 = math.exp %358 : vector<1x16xf32>
    %cst_96 = arith.constant 1.000000e+00 : f32
    %360 = vector.broadcast %cst_96 : f32 to vector<1x16xf32>
    %361 = arith.addf %360, %359 : vector<1x16xf32>
    %362 = arith.divf %360, %361 : vector<1x16xf32>
    %363 = arith.mulf %354, %302 : vector<1x16xf32>
    %364 = arith.mulf %348, %356 : vector<1x16xf32>
    %365 = arith.addf %363, %364 : vector<1x16xf32>
    %366 = math.tanh %365 : vector<1x16xf32>
    %367 = arith.mulf %362, %366 : vector<1x16xf32>
    %368 = vector.extract_strided_slice %342 {offsets = [0, 0], sizes = [1, 16], strides = [1, 1]} : vector<1x64xf32> to vector<1x16xf32>
    %369 = arith.negf %368 : vector<1x16xf32>
    %370 = math.exp %369 : vector<1x16xf32>
    %cst_97 = arith.constant 1.000000e+00 : f32
    %371 = vector.broadcast %cst_97 : f32 to vector<1x16xf32>
    %372 = arith.addf %371, %370 : vector<1x16xf32>
    %373 = arith.divf %371, %372 : vector<1x16xf32>
    %374 = vector.extract_strided_slice %342 {offsets = [0, 16], sizes = [1, 16], strides = [1, 1]} : vector<1x64xf32> to vector<1x16xf32>
    %375 = arith.negf %374 : vector<1x16xf32>
    %376 = math.exp %375 : vector<1x16xf32>
    %cst_98 = arith.constant 1.000000e+00 : f32
    %377 = vector.broadcast %cst_98 : f32 to vector<1x16xf32>
    %378 = arith.addf %377, %376 : vector<1x16xf32>
    %379 = arith.divf %377, %378 : vector<1x16xf32>
    %380 = vector.extract_strided_slice %342 {offsets = [0, 32], sizes = [1, 16], strides = [1, 1]} : vector<1x64xf32> to vector<1x16xf32>
    %381 = math.tanh %380 : vector<1x16xf32>
    %382 = vector.extract_strided_slice %342 {offsets = [0, 48], sizes = [1, 16], strides = [1, 1]} : vector<1x64xf32> to vector<1x16xf32>
    %383 = arith.negf %382 : vector<1x16xf32>
    %384 = math.exp %383 : vector<1x16xf32>
    %cst_99 = arith.constant 1.000000e+00 : f32
    %385 = vector.broadcast %cst_99 : f32 to vector<1x16xf32>
    %386 = arith.addf %385, %384 : vector<1x16xf32>
    %387 = arith.divf %385, %386 : vector<1x16xf32>
    %388 = arith.mulf %379, %327 : vector<1x16xf32>
    %389 = arith.mulf %373, %381 : vector<1x16xf32>
    %390 = arith.addf %388, %389 : vector<1x16xf32>
    %391 = math.tanh %390 : vector<1x16xf32>
    %392 = arith.mulf %387, %391 : vector<1x16xf32>
    %393 = arith.index_cast %c5_i32 : i32 to index
    %c0_100 = arith.constant 0 : index
    %394 = vector.load %arg18[%393, %c0_100] : memref<8x16xf32, #tpu.memory_space<vmem>>, vector<1x16xf32>
    tpu.vector_store %arg18[%393, %c0_100], %367 {strides = array<i32>} : memref<8x16xf32, #tpu.memory_space<vmem>>, vector<1x16xf32>,
    %395 = arith.index_cast %334 : i32 to index
    %c0_101 = arith.constant 0 : index
    %396 = vector.load %arg19[%395, %c0_101] : memref<8x16xf32, #tpu.memory_space<vmem>>, vector<1x16xf32>
    tpu.vector_store %arg19[%395, %c0_101], %392 {strides = array<i32>} : memref<8x16xf32, #tpu.memory_space<vmem>>, vector<1x16xf32>,
    %c6_i32 = arith.constant 6 : i32
    %c7_i32_102 = arith.constant 7 : i32
    %397 = arith.subi %c7_i32_102, %c6_i32 : i32
    %398 = arith.index_cast %c6_i32 : i32 to index
    %c0_103 = arith.constant 0 : index
    %399 = vector.load %arg16[%398, %c0_103] : memref<8x64xf32, #tpu.memory_space<vmem>>, vector<1x64xf32>
    %cst_104 = arith.constant dense<0.000000e+00> : vector<1x64xf32>
    %400 = tpu.matmul %367, %13, %cst_104 {dimension_numbers = #tpu.dot_dimension_numbers<[1], [0], [0], [1], [0, 0, 1, 1], [], []>} : vector<1x16xf32>, vector<16x64xf32>, vector<1x64xf32> -> vector<1x64xf32>
    %401 = arith.addf %399, %400 : vector<1x64xf32>
    %402 = arith.index_cast %397 : i32 to index
    %c0_105 = arith.constant 0 : index
    %403 = vector.load %arg17[%402, %c0_105] : memref<8x64xf32, #tpu.memory_space<vmem>>, vector<1x64xf32>
    %cst_106 = arith.constant dense<0.000000e+00> : vector<1x64xf32>
    %404 = tpu.matmul %392, %14, %cst_106 {dimension_numbers = #tpu.dot_dimension_numbers<[1], [0], [0], [1], [0, 0, 1, 1], [], []>} : vector<1x16xf32>, vector<16x64xf32>, vector<1x64xf32> -> vector<1x64xf32>
    %405 = arith.addf %403, %404 : vector<1x64xf32>
    %406 = vector.extract_strided_slice %401 {offsets = [0, 0], sizes = [1, 16], strides = [1, 1]} : vector<1x64xf32> to vector<1x16xf32>
    %407 = arith.negf %406 : vector<1x16xf32>
    %408 = math.exp %407 : vector<1x16xf32>
    %cst_107 = arith.constant 1.000000e+00 : f32
    %409 = vector.broadcast %cst_107 : f32 to vector<1x16xf32>
    %410 = arith.addf %409, %408 : vector<1x16xf32>
    %411 = arith.divf %409, %410 : vector<1x16xf32>
    %412 = vector.extract_strided_slice %401 {offsets = [0, 16], sizes = [1, 16], strides = [1, 1]} : vector<1x64xf32> to vector<1x16xf32>
    %413 = arith.negf %412 : vector<1x16xf32>
    %414 = math.exp %413 : vector<1x16xf32>
    %cst_108 = arith.constant 1.000000e+00 : f32
    %415 = vector.broadcast %cst_108 : f32 to vector<1x16xf32>
    %416 = arith.addf %415, %414 : vector<1x16xf32>
    %417 = arith.divf %415, %416 : vector<1x16xf32>
    %418 = vector.extract_strided_slice %401 {offsets = [0, 32], sizes = [1, 16], strides = [1, 1]} : vector<1x64xf32> to vector<1x16xf32>
    %419 = math.tanh %418 : vector<1x16xf32>
    %420 = vector.extract_strided_slice %401 {offsets = [0, 48], sizes = [1, 16], strides = [1, 1]} : vector<1x64xf32> to vector<1x16xf32>
    %421 = arith.negf %420 : vector<1x16xf32>
    %422 = math.exp %421 : vector<1x16xf32>
    %cst_109 = arith.constant 1.000000e+00 : f32
    %423 = vector.broadcast %cst_109 : f32 to vector<1x16xf32>
    %424 = arith.addf %423, %422 : vector<1x16xf32>
    %425 = arith.divf %423, %424 : vector<1x16xf32>
    %426 = arith.mulf %417, %365 : vector<1x16xf32>
    %427 = arith.mulf %411, %419 : vector<1x16xf32>
    %428 = arith.addf %426, %427 : vector<1x16xf32>
    %429 = math.tanh %428 : vector<1x16xf32>
    %430 = arith.mulf %425, %429 : vector<1x16xf32>
    %431 = vector.extract_strided_slice %405 {offsets = [0, 0], sizes = [1, 16], strides = [1, 1]} : vector<1x64xf32> to vector<1x16xf32>
    %432 = arith.negf %431 : vector<1x16xf32>
    %433 = math.exp %432 : vector<1x16xf32>
    %cst_110 = arith.constant 1.000000e+00 : f32
    %434 = vector.broadcast %cst_110 : f32 to vector<1x16xf32>
    %435 = arith.addf %434, %433 : vector<1x16xf32>
    %436 = arith.divf %434, %435 : vector<1x16xf32>
    %437 = vector.extract_strided_slice %405 {offsets = [0, 16], sizes = [1, 16], strides = [1, 1]} : vector<1x64xf32> to vector<1x16xf32>
    %438 = arith.negf %437 : vector<1x16xf32>
    %439 = math.exp %438 : vector<1x16xf32>
    %cst_111 = arith.constant 1.000000e+00 : f32
    %440 = vector.broadcast %cst_111 : f32 to vector<1x16xf32>
    %441 = arith.addf %440, %439 : vector<1x16xf32>
    %442 = arith.divf %440, %441 : vector<1x16xf32>
    %443 = vector.extract_strided_slice %405 {offsets = [0, 32], sizes = [1, 16], strides = [1, 1]} : vector<1x64xf32> to vector<1x16xf32>
    %444 = math.tanh %443 : vector<1x16xf32>
    %445 = vector.extract_strided_slice %405 {offsets = [0, 48], sizes = [1, 16], strides = [1, 1]} : vector<1x64xf32> to vector<1x16xf32>
    %446 = arith.negf %445 : vector<1x16xf32>
    %447 = math.exp %446 : vector<1x16xf32>
    %cst_112 = arith.constant 1.000000e+00 : f32
    %448 = vector.broadcast %cst_112 : f32 to vector<1x16xf32>
    %449 = arith.addf %448, %447 : vector<1x16xf32>
    %450 = arith.divf %448, %449 : vector<1x16xf32>
    %451 = arith.mulf %442, %390 : vector<1x16xf32>
    %452 = arith.mulf %436, %444 : vector<1x16xf32>
    %453 = arith.addf %451, %452 : vector<1x16xf32>
    %454 = math.tanh %453 : vector<1x16xf32>
    %455 = arith.mulf %450, %454 : vector<1x16xf32>
    %456 = arith.index_cast %c6_i32 : i32 to index
    %c0_113 = arith.constant 0 : index
    %457 = vector.load %arg18[%456, %c0_113] : memref<8x16xf32, #tpu.memory_space<vmem>>, vector<1x16xf32>
    tpu.vector_store %arg18[%456, %c0_113], %430 {strides = array<i32>} : memref<8x16xf32, #tpu.memory_space<vmem>>, vector<1x16xf32>,
    %458 = arith.index_cast %397 : i32 to index
    %c0_114 = arith.constant 0 : index
    %459 = vector.load %arg19[%458, %c0_114] : memref<8x16xf32, #tpu.memory_space<vmem>>, vector<1x16xf32>
    tpu.vector_store %arg19[%458, %c0_114], %455 {strides = array<i32>} : memref<8x16xf32, #tpu.memory_space<vmem>>, vector<1x16xf32>,
    %c7_i32_115 = arith.constant 7 : i32
    %c7_i32_116 = arith.constant 7 : i32
    %460 = arith.subi %c7_i32_116, %c7_i32_115 : i32
    %461 = arith.index_cast %c7_i32_115 : i32 to index
    %c0_117 = arith.constant 0 : index
    %462 = vector.load %arg16[%461, %c0_117] : memref<8x64xf32, #tpu.memory_space<vmem>>, vector<1x64xf32>
    %cst_118 = arith.constant dense<0.000000e+00> : vector<1x64xf32>
    %463 = tpu.matmul %430, %13, %cst_118 {dimension_numbers = #tpu.dot_dimension_numbers<[1], [0], [0], [1], [0, 0, 1, 1], [], []>} : vector<1x16xf32>, vector<16x64xf32>, vector<1x64xf32> -> vector<1x64xf32>
    %464 = arith.addf %462, %463 : vector<1x64xf32>
    %465 = arith.index_cast %460 : i32 to index
    %c0_119 = arith.constant 0 : index
    %466 = vector.load %arg17[%465, %c0_119] : memref<8x64xf32, #tpu.memory_space<vmem>>, vector<1x64xf32>
    %cst_120 = arith.constant dense<0.000000e+00> : vector<1x64xf32>
    %467 = tpu.matmul %455, %14, %cst_120 {dimension_numbers = #tpu.dot_dimension_numbers<[1], [0], [0], [1], [0, 0, 1, 1], [], []>} : vector<1x16xf32>, vector<16x64xf32>, vector<1x64xf32> -> vector<1x64xf32>
    %468 = arith.addf %466, %467 : vector<1x64xf32>
    %469 = vector.extract_strided_slice %464 {offsets = [0, 0], sizes = [1, 16], strides = [1, 1]} : vector<1x64xf32> to vector<1x16xf32>
    %470 = arith.negf %469 : vector<1x16xf32>
    %471 = math.exp %470 : vector<1x16xf32>
    %cst_121 = arith.constant 1.000000e+00 : f32
    %472 = vector.broadcast %cst_121 : f32 to vector<1x16xf32>
    %473 = arith.addf %472, %471 : vector<1x16xf32>
    %474 = arith.divf %472, %473 : vector<1x16xf32>
    %475 = vector.extract_strided_slice %464 {offsets = [0, 16], sizes = [1, 16], strides = [1, 1]} : vector<1x64xf32> to vector<1x16xf32>
    %476 = arith.negf %475 : vector<1x16xf32>
    %477 = math.exp %476 : vector<1x16xf32>
    %cst_122 = arith.constant 1.000000e+00 : f32
    %478 = vector.broadcast %cst_122 : f32 to vector<1x16xf32>
    %479 = arith.addf %478, %477 : vector<1x16xf32>
    %480 = arith.divf %478, %479 : vector<1x16xf32>
    %481 = vector.extract_strided_slice %464 {offsets = [0, 32], sizes = [1, 16], strides = [1, 1]} : vector<1x64xf32> to vector<1x16xf32>
    %482 = math.tanh %481 : vector<1x16xf32>
    %483 = vector.extract_strided_slice %464 {offsets = [0, 48], sizes = [1, 16], strides = [1, 1]} : vector<1x64xf32> to vector<1x16xf32>
    %484 = arith.negf %483 : vector<1x16xf32>
    %485 = math.exp %484 : vector<1x16xf32>
    %cst_123 = arith.constant 1.000000e+00 : f32
    %486 = vector.broadcast %cst_123 : f32 to vector<1x16xf32>
    %487 = arith.addf %486, %485 : vector<1x16xf32>
    %488 = arith.divf %486, %487 : vector<1x16xf32>
    %489 = arith.mulf %480, %428 : vector<1x16xf32>
    %490 = arith.mulf %474, %482 : vector<1x16xf32>
    %491 = arith.addf %489, %490 : vector<1x16xf32>
    %492 = math.tanh %491 : vector<1x16xf32>
    %493 = arith.mulf %488, %492 : vector<1x16xf32>
    %494 = vector.extract_strided_slice %468 {offsets = [0, 0], sizes = [1, 16], strides = [1, 1]} : vector<1x64xf32> to vector<1x16xf32>
    %495 = arith.negf %494 : vector<1x16xf32>
    %496 = math.exp %495 : vector<1x16xf32>
    %cst_124 = arith.constant 1.000000e+00 : f32
    %497 = vector.broadcast %cst_124 : f32 to vector<1x16xf32>
    %498 = arith.addf %497, %496 : vector<1x16xf32>
    %499 = arith.divf %497, %498 : vector<1x16xf32>
    %500 = vector.extract_strided_slice %468 {offsets = [0, 16], sizes = [1, 16], strides = [1, 1]} : vector<1x64xf32> to vector<1x16xf32>
    %501 = arith.negf %500 : vector<1x16xf32>
    %502 = math.exp %501 : vector<1x16xf32>
    %cst_125 = arith.constant 1.000000e+00 : f32
    %503 = vector.broadcast %cst_125 : f32 to vector<1x16xf32>
    %504 = arith.addf %503, %502 : vector<1x16xf32>
    %505 = arith.divf %503, %504 : vector<1x16xf32>
    %506 = vector.extract_strided_slice %468 {offsets = [0, 32], sizes = [1, 16], strides = [1, 1]} : vector<1x64xf32> to vector<1x16xf32>
    %507 = math.tanh %506 : vector<1x16xf32>
    %508 = vector.extract_strided_slice %468 {offsets = [0, 48], sizes = [1, 16], strides = [1, 1]} : vector<1x64xf32> to vector<1x16xf32>
    %509 = arith.negf %508 : vector<1x16xf32>
    %510 = math.exp %509 : vector<1x16xf32>
    %cst_126 = arith.constant 1.000000e+00 : f32
    %511 = vector.broadcast %cst_126 : f32 to vector<1x16xf32>
    %512 = arith.addf %511, %510 : vector<1x16xf32>
    %513 = arith.divf %511, %512 : vector<1x16xf32>
    %514 = arith.mulf %505, %453 : vector<1x16xf32>
    %515 = arith.mulf %499, %507 : vector<1x16xf32>
    %516 = arith.addf %514, %515 : vector<1x16xf32>
    %517 = math.tanh %516 : vector<1x16xf32>
    %518 = arith.mulf %513, %517 : vector<1x16xf32>
    %519 = arith.index_cast %c7_i32_115 : i32 to index
    %c0_127 = arith.constant 0 : index
    %520 = vector.load %arg18[%519, %c0_127] : memref<8x16xf32, #tpu.memory_space<vmem>>, vector<1x16xf32>
    tpu.vector_store %arg18[%519, %c0_127], %493 {strides = array<i32>} : memref<8x16xf32, #tpu.memory_space<vmem>>, vector<1x16xf32>,
    %521 = arith.index_cast %460 : i32 to index
    %c0_128 = arith.constant 0 : index
    %522 = vector.load %arg19[%521, %c0_128] : memref<8x16xf32, #tpu.memory_space<vmem>>, vector<1x16xf32>
    tpu.vector_store %arg19[%521, %c0_128], %518 {strides = array<i32>} : memref<8x16xf32, #tpu.memory_space<vmem>>, vector<1x16xf32>,
    %c8_i32 = arith.constant 8 : i32
    %c0_129 = arith.constant 0 : index
    %c0_130 = arith.constant 0 : index
    %523 = vector.load %arg18[%c0_129, %c0_130] : memref<8x16xf32, #tpu.memory_space<vmem>>, vector<8x16xf32>
    %c0_131 = arith.constant 0 : index
    %c0_132 = arith.constant 0 : index
    %524 = vector.load %arg9[%c0_131, %c0_132] : memref<32x8xf32, #tpu.memory_space<vmem>>, vector<16x8xf32>
    %cst_133 = arith.constant dense<0.000000e+00> : vector<8x8xf32>
    %525 = tpu.matmul %523, %524, %cst_133 {dimension_numbers = #tpu.dot_dimension_numbers<[1], [0], [0], [1], [0, 0, 1, 1], [], []>} : vector<8x16xf32>, vector<16x8xf32>, vector<8x8xf32> -> vector<8x8xf32>
    %c0_134 = arith.constant 0 : index
    %c0_135 = arith.constant 0 : index
    %526 = vector.load %arg19[%c0_134, %c0_135] : memref<8x16xf32, #tpu.memory_space<vmem>>, vector<8x16xf32>
    %c16 = arith.constant 16 : index
    %c0_136 = arith.constant 0 : index
    %527 = vector.load %arg9[%c16, %c0_136] : memref<32x8xf32, #tpu.memory_space<vmem>>, vector<16x8xf32>
    %cst_137 = arith.constant dense<0.000000e+00> : vector<8x8xf32>
    %528 = tpu.matmul %526, %527, %cst_137 {dimension_numbers = #tpu.dot_dimension_numbers<[1], [0], [0], [1], [0, 0, 1, 1], [], []>} : vector<8x16xf32>, vector<16x8xf32>, vector<8x8xf32> -> vector<8x8xf32>
    %529 = arith.addf %525, %528 : vector<8x8xf32>
    %c0_138 = arith.constant 0 : index
    %c0_139 = arith.constant 0 : index
    %530 = vector.load %arg10[%c0_138, %c0_139] : memref<1x8xf32, #tpu.memory_space<vmem>>, vector<1x8xf32>
    %531 = vector.broadcast %530 : vector<1x8xf32> to vector<8x8xf32>
    %532 = arith.addf %529, %531 : vector<8x8xf32>
    %c0_140 = arith.constant 0 : index
    %c0_141 = arith.constant 0 : index
    %533 = vector.load %arg20[%c0_140, %c0_141] : memref<8x8xf32, #tpu.memory_space<vmem>>, vector<8x8xf32>
    tpu.vector_store %arg20[%c0_140, %c0_141], %532 {strides = array<i32>} : memref<8x8xf32, #tpu.memory_space<vmem>>, vector<8x8xf32>,
    %c0_142 = arith.constant 0 : index
    %c0_143 = arith.constant 0 : index
    %534 = vector.load %arg12[%c0_142, %c0_143] : memref<8x8xf32, #tpu.memory_space<vmem>>, vector<8x8xf32>
    %535 = tpu.iota {dimensions = array<i32: 0>} : vector<8x8xi32>
    %536 = tpu.iota {dimensions = array<i32: 1>} : vector<8x8xi32>
    %537 = arith.cmpi eq, %535, %536 : vector<8x8xi32>
    %538 = tpu.iota {dimensions = array<i32: 0>} : vector<8x1xi32>
    %539 = tpu.iota {dimensions = array<i32: 1>} : vector<1x8xi32>
    %c3_i32_144 = arith.constant 3 : i32
    %540 = vector.broadcast %c3_i32_144 : i32 to vector<8x1xi32>
    %541 = arith.cmpi eq, %538, %540 : vector<8x1xi32>
    %cst_145 = arith.constant 0.000000e+00 : f32
    %cst_146 = arith.constant -1.000000e+04 : f32
    %542 = vector.broadcast %cst_145 : f32 to vector<8x1xf32>
    %543 = vector.broadcast %cst_146 : f32 to vector<8x1xf32>
    %544 = arith.select %541, %542, %543 : vector<8x1xi1>, vector<8x1xf32>
    %c3_i32_147 = arith.constant 3 : i32
    %545 = vector.broadcast %c3_i32_147 : i32 to vector<1x8xi32>
    %546 = arith.cmpi eq, %539, %545 : vector<1x8xi32>
    %cst_148 = arith.constant 0.000000e+00 : f32
    %cst_149 = arith.constant -1.000000e+04 : f32
    %547 = vector.broadcast %cst_148 : f32 to vector<1x8xf32>
    %548 = vector.broadcast %cst_149 : f32 to vector<1x8xf32>
    %549 = arith.select %546, %547, %548 : vector<1x8xi1>, vector<1x8xf32>
    %c0_i32_150 = arith.constant 0 : i32
    %550 = vector.broadcast %544 : vector<8x1xf32> to vector<8x8xf32>
    %551 = arith.addf %550, %534 : vector<8x8xf32>
    %cst_151 = arith.constant dense<0xFF800000> : vector<8xf32>
    %552 = vector.multi_reduction <maximumf>, %551, %cst_151 [0] : vector<8x8xf32> to vector<8xf32>
    %553 = vector.shape_cast %552 : vector<8xf32> to vector<1x8xf32>
    %554 = vector.broadcast %553 : vector<1x8xf32> to vector<8x8xf32>
    %555 = arith.cmpf oeq, %551, %554 : vector<8x8xf32>
    %c8_i32_152 = arith.constant 8 : i32
    %556 = vector.broadcast %c8_i32_152 : i32 to vector<8x8xi32>
    %557 = arith.select %555, %535, %556 : vector<8x8xi1>, vector<8x8xi32>
    %cst_153 = arith.constant dense<2147483647> : vector<8xi32>
    %558 = vector.multi_reduction <minsi>, %557, %cst_153 [0] : vector<8x8xi32> to vector<8xi32>
    %559 = vector.shape_cast %558 : vector<8xi32> to vector<1x8xi32>
    %560 = arith.index_cast %c0_i32_150 : i32 to index
    %c0_154 = arith.constant 0 : index
    %561 = vector.load %arg21[%560, %c0_154] : memref<8x8xi32, #tpu.memory_space<vmem>>, vector<1x8xi32>
    tpu.vector_store %arg21[%560, %c0_154], %559 {strides = array<i32>} : memref<8x8xi32, #tpu.memory_space<vmem>>, vector<1x8xi32>,
    %562 = arith.index_cast %c0_i32_150 : i32 to index
    %c0_155 = arith.constant 0 : index
    %563 = vector.load %arg20[%562, %c0_155] : memref<8x8xf32, #tpu.memory_space<vmem>>, vector<1x8xf32>
    %564 = arith.addf %553, %563 : vector<1x8xf32>
    %cst_156 = arith.constant 0.000000e+00 : f32
    %565 = vector.shape_cast %564 : vector<1x8xf32> to vector<1x8xf32>
    %566 = vector.broadcast %565 : vector<1x8xf32> to vector<8x8xf32>
    %567 = vector.broadcast %cst_156 : f32 to vector<8x8xf32>
    %568 = arith.select %537, %566, %567 : vector<8x8xi1>, vector<8x8xf32>
    %cst_157 = arith.constant dense<0.000000e+00> : vector<8xf32>
    %569 = vector.multi_reduction <add>, %568, %cst_157 [1] : vector<8x8xf32> to vector<8xf32>
    %570 = vector.shape_cast %569 : vector<8xf32> to vector<8x1xf32>
    %c1_i32_158 = arith.constant 1 : i32
    %571 = vector.broadcast %570 : vector<8x1xf32> to vector<8x8xf32>
    %572 = arith.addf %571, %534 : vector<8x8xf32>
    %cst_159 = arith.constant dense<0xFF800000> : vector<8xf32>
    %573 = vector.multi_reduction <maximumf>, %572, %cst_159 [0] : vector<8x8xf32> to vector<8xf32>
    %574 = vector.shape_cast %573 : vector<8xf32> to vector<1x8xf32>
    %575 = vector.broadcast %574 : vector<1x8xf32> to vector<8x8xf32>
    %576 = arith.cmpf oeq, %572, %575 : vector<8x8xf32>
    %c8_i32_160 = arith.constant 8 : i32
    %577 = vector.broadcast %c8_i32_160 : i32 to vector<8x8xi32>
    %578 = arith.select %576, %535, %577 : vector<8x8xi1>, vector<8x8xi32>
    %cst_161 = arith.constant dense<2147483647> : vector<8xi32>
    %579 = vector.multi_reduction <minsi>, %578, %cst_161 [0] : vector<8x8xi32> to vector<8xi32>
    %580 = vector.shape_cast %579 : vector<8xi32> to vector<1x8xi32>
    %581 = arith.index_cast %c1_i32_158 : i32 to index
    %c0_162 = arith.constant 0 : index
    %582 = vector.load %arg21[%581, %c0_162] : memref<8x8xi32, #tpu.memory_space<vmem>>, vector<1x8xi32>
    tpu.vector_store %arg21[%581, %c0_162], %580 {strides = array<i32>} : memref<8x8xi32, #tpu.memory_space<vmem>>, vector<1x8xi32>,
    %583 = arith.index_cast %c1_i32_158 : i32 to index
    %c0_163 = arith.constant 0 : index
    %584 = vector.load %arg20[%583, %c0_163] : memref<8x8xf32, #tpu.memory_space<vmem>>, vector<1x8xf32>
    %585 = arith.addf %574, %584 : vector<1x8xf32>
    %cst_164 = arith.constant 0.000000e+00 : f32
    %586 = vector.shape_cast %585 : vector<1x8xf32> to vector<1x8xf32>
    %587 = vector.broadcast %586 : vector<1x8xf32> to vector<8x8xf32>
    %588 = vector.broadcast %cst_164 : f32 to vector<8x8xf32>
    %589 = arith.select %537, %587, %588 : vector<8x8xi1>, vector<8x8xf32>
    %cst_165 = arith.constant dense<0.000000e+00> : vector<8xf32>
    %590 = vector.multi_reduction <add>, %589, %cst_165 [1] : vector<8x8xf32> to vector<8xf32>
    %591 = vector.shape_cast %590 : vector<8xf32> to vector<8x1xf32>
    %c2_i32_166 = arith.constant 2 : i32
    %592 = vector.broadcast %591 : vector<8x1xf32> to vector<8x8xf32>
    %593 = arith.addf %592, %534 : vector<8x8xf32>
    %cst_167 = arith.constant dense<0xFF800000> : vector<8xf32>
    %594 = vector.multi_reduction <maximumf>, %593, %cst_167 [0] : vector<8x8xf32> to vector<8xf32>
    %595 = vector.shape_cast %594 : vector<8xf32> to vector<1x8xf32>
    %596 = vector.broadcast %595 : vector<1x8xf32> to vector<8x8xf32>
    %597 = arith.cmpf oeq, %593, %596 : vector<8x8xf32>
    %c8_i32_168 = arith.constant 8 : i32
    %598 = vector.broadcast %c8_i32_168 : i32 to vector<8x8xi32>
    %599 = arith.select %597, %535, %598 : vector<8x8xi1>, vector<8x8xi32>
    %cst_169 = arith.constant dense<2147483647> : vector<8xi32>
    %600 = vector.multi_reduction <minsi>, %599, %cst_169 [0] : vector<8x8xi32> to vector<8xi32>
    %601 = vector.shape_cast %600 : vector<8xi32> to vector<1x8xi32>
    %602 = arith.index_cast %c2_i32_166 : i32 to index
    %c0_170 = arith.constant 0 : index
    %603 = vector.load %arg21[%602, %c0_170] : memref<8x8xi32, #tpu.memory_space<vmem>>, vector<1x8xi32>
    tpu.vector_store %arg21[%602, %c0_170], %601 {strides = array<i32>} : memref<8x8xi32, #tpu.memory_space<vmem>>, vector<1x8xi32>,
    %604 = arith.index_cast %c2_i32_166 : i32 to index
    %c0_171 = arith.constant 0 : index
    %605 = vector.load %arg20[%604, %c0_171] : memref<8x8xf32, #tpu.memory_space<vmem>>, vector<1x8xf32>
    %606 = arith.addf %595, %605 : vector<1x8xf32>
    %cst_172 = arith.constant 0.000000e+00 : f32
    %607 = vector.shape_cast %606 : vector<1x8xf32> to vector<1x8xf32>
    %608 = vector.broadcast %607 : vector<1x8xf32> to vector<8x8xf32>
    %609 = vector.broadcast %cst_172 : f32 to vector<8x8xf32>
    %610 = arith.select %537, %608, %609 : vector<8x8xi1>, vector<8x8xf32>
    %cst_173 = arith.constant dense<0.000000e+00> : vector<8xf32>
    %611 = vector.multi_reduction <add>, %610, %cst_173 [1] : vector<8x8xf32> to vector<8xf32>
    %612 = vector.shape_cast %611 : vector<8xf32> to vector<8x1xf32>
    %c3_i32_174 = arith.constant 3 : i32
    %613 = vector.broadcast %612 : vector<8x1xf32> to vector<8x8xf32>
    %614 = arith.addf %613, %534 : vector<8x8xf32>
    %cst_175 = arith.constant dense<0xFF800000> : vector<8xf32>
    %615 = vector.multi_reduction <maximumf>, %614, %cst_175 [0] : vector<8x8xf32> to vector<8xf32>
    %616 = vector.shape_cast %615 : vector<8xf32> to vector<1x8xf32>
    %617 = vector.broadcast %616 : vector<1x8xf32> to vector<8x8xf32>
    %618 = arith.cmpf oeq, %614, %617 : vector<8x8xf32>
    %c8_i32_176 = arith.constant 8 : i32
    %619 = vector.broadcast %c8_i32_176 : i32 to vector<8x8xi32>
    %620 = arith.select %618, %535, %619 : vector<8x8xi1>, vector<8x8xi32>
    %cst_177 = arith.constant dense<2147483647> : vector<8xi32>
    %621 = vector.multi_reduction <minsi>, %620, %cst_177 [0] : vector<8x8xi32> to vector<8xi32>
    %622 = vector.shape_cast %621 : vector<8xi32> to vector<1x8xi32>
    %623 = arith.index_cast %c3_i32_174 : i32 to index
    %c0_178 = arith.constant 0 : index
    %624 = vector.load %arg21[%623, %c0_178] : memref<8x8xi32, #tpu.memory_space<vmem>>, vector<1x8xi32>
    tpu.vector_store %arg21[%623, %c0_178], %622 {strides = array<i32>} : memref<8x8xi32, #tpu.memory_space<vmem>>, vector<1x8xi32>,
    %625 = arith.index_cast %c3_i32_174 : i32 to index
    %c0_179 = arith.constant 0 : index
    %626 = vector.load %arg20[%625, %c0_179] : memref<8x8xf32, #tpu.memory_space<vmem>>, vector<1x8xf32>
    %627 = arith.addf %616, %626 : vector<1x8xf32>
    %cst_180 = arith.constant 0.000000e+00 : f32
    %628 = vector.shape_cast %627 : vector<1x8xf32> to vector<1x8xf32>
    %629 = vector.broadcast %628 : vector<1x8xf32> to vector<8x8xf32>
    %630 = vector.broadcast %cst_180 : f32 to vector<8x8xf32>
    %631 = arith.select %537, %629, %630 : vector<8x8xi1>, vector<8x8xf32>
    %cst_181 = arith.constant dense<0.000000e+00> : vector<8xf32>
    %632 = vector.multi_reduction <add>, %631, %cst_181 [1] : vector<8x8xf32> to vector<8xf32>
    %633 = vector.shape_cast %632 : vector<8xf32> to vector<8x1xf32>
    %c4_i32_182 = arith.constant 4 : i32
    %634 = vector.broadcast %633 : vector<8x1xf32> to vector<8x8xf32>
    %635 = arith.addf %634, %534 : vector<8x8xf32>
    %cst_183 = arith.constant dense<0xFF800000> : vector<8xf32>
    %636 = vector.multi_reduction <maximumf>, %635, %cst_183 [0] : vector<8x8xf32> to vector<8xf32>
    %637 = vector.shape_cast %636 : vector<8xf32> to vector<1x8xf32>
    %638 = vector.broadcast %637 : vector<1x8xf32> to vector<8x8xf32>
    %639 = arith.cmpf oeq, %635, %638 : vector<8x8xf32>
    %c8_i32_184 = arith.constant 8 : i32
    %640 = vector.broadcast %c8_i32_184 : i32 to vector<8x8xi32>
    %641 = arith.select %639, %535, %640 : vector<8x8xi1>, vector<8x8xi32>
    %cst_185 = arith.constant dense<2147483647> : vector<8xi32>
    %642 = vector.multi_reduction <minsi>, %641, %cst_185 [0] : vector<8x8xi32> to vector<8xi32>
    %643 = vector.shape_cast %642 : vector<8xi32> to vector<1x8xi32>
    %644 = arith.index_cast %c4_i32_182 : i32 to index
    %c0_186 = arith.constant 0 : index
    %645 = vector.load %arg21[%644, %c0_186] : memref<8x8xi32, #tpu.memory_space<vmem>>, vector<1x8xi32>
    tpu.vector_store %arg21[%644, %c0_186], %643 {strides = array<i32>} : memref<8x8xi32, #tpu.memory_space<vmem>>, vector<1x8xi32>,
    %646 = arith.index_cast %c4_i32_182 : i32 to index
    %c0_187 = arith.constant 0 : index
    %647 = vector.load %arg20[%646, %c0_187] : memref<8x8xf32, #tpu.memory_space<vmem>>, vector<1x8xf32>
    %648 = arith.addf %637, %647 : vector<1x8xf32>
    %cst_188 = arith.constant 0.000000e+00 : f32
    %649 = vector.shape_cast %648 : vector<1x8xf32> to vector<1x8xf32>
    %650 = vector.broadcast %649 : vector<1x8xf32> to vector<8x8xf32>
    %651 = vector.broadcast %cst_188 : f32 to vector<8x8xf32>
    %652 = arith.select %537, %650, %651 : vector<8x8xi1>, vector<8x8xf32>
    %cst_189 = arith.constant dense<0.000000e+00> : vector<8xf32>
    %653 = vector.multi_reduction <add>, %652, %cst_189 [1] : vector<8x8xf32> to vector<8xf32>
    %654 = vector.shape_cast %653 : vector<8xf32> to vector<8x1xf32>
    %c5_i32_190 = arith.constant 5 : i32
    %655 = vector.broadcast %654 : vector<8x1xf32> to vector<8x8xf32>
    %656 = arith.addf %655, %534 : vector<8x8xf32>
    %cst_191 = arith.constant dense<0xFF800000> : vector<8xf32>
    %657 = vector.multi_reduction <maximumf>, %656, %cst_191 [0] : vector<8x8xf32> to vector<8xf32>
    %658 = vector.shape_cast %657 : vector<8xf32> to vector<1x8xf32>
    %659 = vector.broadcast %658 : vector<1x8xf32> to vector<8x8xf32>
    %660 = arith.cmpf oeq, %656, %659 : vector<8x8xf32>
    %c8_i32_192 = arith.constant 8 : i32
    %661 = vector.broadcast %c8_i32_192 : i32 to vector<8x8xi32>
    %662 = arith.select %660, %535, %661 : vector<8x8xi1>, vector<8x8xi32>
    %cst_193 = arith.constant dense<2147483647> : vector<8xi32>
    %663 = vector.multi_reduction <minsi>, %662, %cst_193 [0] : vector<8x8xi32> to vector<8xi32>
    %664 = vector.shape_cast %663 : vector<8xi32> to vector<1x8xi32>
    %665 = arith.index_cast %c5_i32_190 : i32 to index
    %c0_194 = arith.constant 0 : index
    %666 = vector.load %arg21[%665, %c0_194] : memref<8x8xi32, #tpu.memory_space<vmem>>, vector<1x8xi32>
    tpu.vector_store %arg21[%665, %c0_194], %664 {strides = array<i32>} : memref<8x8xi32, #tpu.memory_space<vmem>>, vector<1x8xi32>,
    %667 = arith.index_cast %c5_i32_190 : i32 to index
    %c0_195 = arith.constant 0 : index
    %668 = vector.load %arg20[%667, %c0_195] : memref<8x8xf32, #tpu.memory_space<vmem>>, vector<1x8xf32>
    %669 = arith.addf %658, %668 : vector<1x8xf32>
    %cst_196 = arith.constant 0.000000e+00 : f32
    %670 = vector.shape_cast %669 : vector<1x8xf32> to vector<1x8xf32>
    %671 = vector.broadcast %670 : vector<1x8xf32> to vector<8x8xf32>
    %672 = vector.broadcast %cst_196 : f32 to vector<8x8xf32>
    %673 = arith.select %537, %671, %672 : vector<8x8xi1>, vector<8x8xf32>
    %cst_197 = arith.constant dense<0.000000e+00> : vector<8xf32>
    %674 = vector.multi_reduction <add>, %673, %cst_197 [1] : vector<8x8xf32> to vector<8xf32>
    %675 = vector.shape_cast %674 : vector<8xf32> to vector<8x1xf32>
    %c6_i32_198 = arith.constant 6 : i32
    %676 = vector.broadcast %675 : vector<8x1xf32> to vector<8x8xf32>
    %677 = arith.addf %676, %534 : vector<8x8xf32>
    %cst_199 = arith.constant dense<0xFF800000> : vector<8xf32>
    %678 = vector.multi_reduction <maximumf>, %677, %cst_199 [0] : vector<8x8xf32> to vector<8xf32>
    %679 = vector.shape_cast %678 : vector<8xf32> to vector<1x8xf32>
    %680 = vector.broadcast %679 : vector<1x8xf32> to vector<8x8xf32>
    %681 = arith.cmpf oeq, %677, %680 : vector<8x8xf32>
    %c8_i32_200 = arith.constant 8 : i32
    %682 = vector.broadcast %c8_i32_200 : i32 to vector<8x8xi32>
    %683 = arith.select %681, %535, %682 : vector<8x8xi1>, vector<8x8xi32>
    %cst_201 = arith.constant dense<2147483647> : vector<8xi32>
    %684 = vector.multi_reduction <minsi>, %683, %cst_201 [0] : vector<8x8xi32> to vector<8xi32>
    %685 = vector.shape_cast %684 : vector<8xi32> to vector<1x8xi32>
    %686 = arith.index_cast %c6_i32_198 : i32 to index
    %c0_202 = arith.constant 0 : index
    %687 = vector.load %arg21[%686, %c0_202] : memref<8x8xi32, #tpu.memory_space<vmem>>, vector<1x8xi32>
    tpu.vector_store %arg21[%686, %c0_202], %685 {strides = array<i32>} : memref<8x8xi32, #tpu.memory_space<vmem>>, vector<1x8xi32>,
    %688 = arith.index_cast %c6_i32_198 : i32 to index
    %c0_203 = arith.constant 0 : index
    %689 = vector.load %arg20[%688, %c0_203] : memref<8x8xf32, #tpu.memory_space<vmem>>, vector<1x8xf32>
    %690 = arith.addf %679, %689 : vector<1x8xf32>
    %cst_204 = arith.constant 0.000000e+00 : f32
    %691 = vector.shape_cast %690 : vector<1x8xf32> to vector<1x8xf32>
    %692 = vector.broadcast %691 : vector<1x8xf32> to vector<8x8xf32>
    %693 = vector.broadcast %cst_204 : f32 to vector<8x8xf32>
    %694 = arith.select %537, %692, %693 : vector<8x8xi1>, vector<8x8xf32>
    %cst_205 = arith.constant dense<0.000000e+00> : vector<8xf32>
    %695 = vector.multi_reduction <add>, %694, %cst_205 [1] : vector<8x8xf32> to vector<8xf32>
    %696 = vector.shape_cast %695 : vector<8xf32> to vector<8x1xf32>
    %c7_i32_206 = arith.constant 7 : i32
    %697 = vector.broadcast %696 : vector<8x1xf32> to vector<8x8xf32>
    %698 = arith.addf %697, %534 : vector<8x8xf32>
    %cst_207 = arith.constant dense<0xFF800000> : vector<8xf32>
    %699 = vector.multi_reduction <maximumf>, %698, %cst_207 [0] : vector<8x8xf32> to vector<8xf32>
    %700 = vector.shape_cast %699 : vector<8xf32> to vector<1x8xf32>
    %701 = vector.broadcast %700 : vector<1x8xf32> to vector<8x8xf32>
    %702 = arith.cmpf oeq, %698, %701 : vector<8x8xf32>
    %c8_i32_208 = arith.constant 8 : i32
    %703 = vector.broadcast %c8_i32_208 : i32 to vector<8x8xi32>
    %704 = arith.select %702, %535, %703 : vector<8x8xi1>, vector<8x8xi32>
    %cst_209 = arith.constant dense<2147483647> : vector<8xi32>
    %705 = vector.multi_reduction <minsi>, %704, %cst_209 [0] : vector<8x8xi32> to vector<8xi32>
    %706 = vector.shape_cast %705 : vector<8xi32> to vector<1x8xi32>
    %707 = arith.index_cast %c7_i32_206 : i32 to index
    %c0_210 = arith.constant 0 : index
    %708 = vector.load %arg21[%707, %c0_210] : memref<8x8xi32, #tpu.memory_space<vmem>>, vector<1x8xi32>
    tpu.vector_store %arg21[%707, %c0_210], %706 {strides = array<i32>} : memref<8x8xi32, #tpu.memory_space<vmem>>, vector<1x8xi32>,
    %709 = arith.index_cast %c7_i32_206 : i32 to index
    %c0_211 = arith.constant 0 : index
    %710 = vector.load %arg20[%709, %c0_211] : memref<8x8xf32, #tpu.memory_space<vmem>>, vector<1x8xf32>
    %711 = arith.addf %700, %710 : vector<1x8xf32>
    %cst_212 = arith.constant 0.000000e+00 : f32
    %712 = vector.shape_cast %711 : vector<1x8xf32> to vector<1x8xf32>
    %713 = vector.broadcast %712 : vector<1x8xf32> to vector<8x8xf32>
    %714 = vector.broadcast %cst_212 : f32 to vector<8x8xf32>
    %715 = arith.select %537, %713, %714 : vector<8x8xi1>, vector<8x8xf32>
    %cst_213 = arith.constant dense<0.000000e+00> : vector<8xf32>
    %716 = vector.multi_reduction <add>, %715, %cst_213 [1] : vector<8x8xf32> to vector<8xf32>
    %717 = vector.shape_cast %716 : vector<8xf32> to vector<8x1xf32>
    %c8_i32_214 = arith.constant 8 : i32
    %c4 = arith.constant 4 : index
    %c0_215 = arith.constant 0 : index
    %718 = vector.load %arg11[%c4, %c0_215] : memref<8x8xf32, #tpu.memory_space<vmem>>, vector<1x8xf32>
    %719 = arith.addf %711, %718 : vector<1x8xf32>
    %cst_216 = arith.constant dense<0xFF800000> : vector<1xf32>
    %720 = vector.multi_reduction <maximumf>, %719, %cst_216 [1] : vector<1x8xf32> to vector<1xf32>
    %721 = vector.shape_cast %720 : vector<1xf32> to vector<1x1xf32>
    %722 = vector.broadcast %721 : vector<1x1xf32> to vector<1x8xf32>
    %723 = arith.cmpf oeq, %719, %722 : vector<1x8xf32>
    %c8_i32_217 = arith.constant 8 : i32
    %724 = vector.broadcast %c8_i32_217 : i32 to vector<1x8xi32>
    %725 = arith.select %723, %539, %724 : vector<1x8xi1>, vector<1x8xi32>
    %cst_218 = arith.constant dense<2147483647> : vector<1xi32>
    %726 = vector.multi_reduction <minsi>, %725, %cst_218 [1] : vector<1x8xi32> to vector<1xi32>
    %727 = vector.shape_cast %726 : vector<1xi32> to vector<1x1xi32>
    %c0_219 = arith.constant 0 : index
    %c0_220 = arith.constant 0 : index
    %728 = vector.load %arg14[%c0_219, %c0_220] : memref<1x1xf32, #tpu.memory_space<vmem>>, vector<1x1xf32>
    tpu.vector_store %arg14[%c0_219, %c0_220], %721 {strides = array<i32>} : memref<1x1xf32, #tpu.memory_space<vmem>>, vector<1x1xf32>,
    %729 = tpu.iota {dimensions = array<i32: 1>} : vector<1x8xi32>
    %c7_i32_221 = arith.constant 7 : i32
    %730 = vector.broadcast %c7_i32_221 : i32 to vector<1x8xi32>
    %731 = arith.cmpi eq, %729, %730 : vector<1x8xi32>
    %c0_i32_222 = arith.constant 0 : i32
    %732 = vector.broadcast %c0_i32_222 : i32 to vector<1x8xi32>
    %733 = vector.shape_cast %727 : vector<1x1xi32> to vector<1x1xi32>
    %734 = vector.broadcast %733 : vector<1x1xi32> to vector<1x8xi32>
    %735 = arith.select %731, %734, %732 : vector<1x8xi1>, vector<1x8xi32>
    %c7 = arith.constant 7 : index
    %c0_223 = arith.constant 0 : index
    %736 = vector.load %arg21[%c7, %c0_223] : memref<8x8xi32, #tpu.memory_space<vmem>>, vector<1x8xi32>
    %737 = vector.broadcast %727 : vector<1x1xi32> to vector<1x8xi32>
    %738 = arith.cmpi eq, %539, %737 : vector<1x8xi32>
    %c0_i32_224 = arith.constant 0 : i32
    %739 = vector.broadcast %c0_i32_224 : i32 to vector<1x8xi32>
    %740 = arith.select %738, %736, %739 : vector<1x8xi1>, vector<1x8xi32>
    %cst_225 = arith.constant dense<0> : vector<1xi32>
    %741 = vector.multi_reduction <add>, %740, %cst_225 [1] : vector<1x8xi32> to vector<1xi32>
    %742 = vector.shape_cast %741 : vector<1xi32> to vector<1x1xi32>
    %c6_i32_226 = arith.constant 6 : i32
    %743 = vector.broadcast %c6_i32_226 : i32 to vector<1x8xi32>
    %744 = arith.cmpi eq, %729, %743 : vector<1x8xi32>
    %745 = vector.shape_cast %742 : vector<1x1xi32> to vector<1x1xi32>
    %746 = vector.broadcast %745 : vector<1x1xi32> to vector<1x8xi32>
    %747 = arith.select %744, %746, %735 : vector<1x8xi1>, vector<1x8xi32>
    %c6 = arith.constant 6 : index
    %c0_227 = arith.constant 0 : index
    %748 = vector.load %arg21[%c6, %c0_227] : memref<8x8xi32, #tpu.memory_space<vmem>>, vector<1x8xi32>
    %749 = vector.broadcast %742 : vector<1x1xi32> to vector<1x8xi32>
    %750 = arith.cmpi eq, %539, %749 : vector<1x8xi32>
    %c0_i32_228 = arith.constant 0 : i32
    %751 = vector.broadcast %c0_i32_228 : i32 to vector<1x8xi32>
    %752 = arith.select %750, %748, %751 : vector<1x8xi1>, vector<1x8xi32>
    %cst_229 = arith.constant dense<0> : vector<1xi32>
    %753 = vector.multi_reduction <add>, %752, %cst_229 [1] : vector<1x8xi32> to vector<1xi32>
    %754 = vector.shape_cast %753 : vector<1xi32> to vector<1x1xi32>
    %c5_i32_230 = arith.constant 5 : i32
    %755 = vector.broadcast %c5_i32_230 : i32 to vector<1x8xi32>
    %756 = arith.cmpi eq, %729, %755 : vector<1x8xi32>
    %757 = vector.shape_cast %754 : vector<1x1xi32> to vector<1x1xi32>
    %758 = vector.broadcast %757 : vector<1x1xi32> to vector<1x8xi32>
    %759 = arith.select %756, %758, %747 : vector<1x8xi1>, vector<1x8xi32>
    %c5 = arith.constant 5 : index
    %c0_231 = arith.constant 0 : index
    %760 = vector.load %arg21[%c5, %c0_231] : memref<8x8xi32, #tpu.memory_space<vmem>>, vector<1x8xi32>
    %761 = vector.broadcast %754 : vector<1x1xi32> to vector<1x8xi32>
    %762 = arith.cmpi eq, %539, %761 : vector<1x8xi32>
    %c0_i32_232 = arith.constant 0 : i32
    %763 = vector.broadcast %c0_i32_232 : i32 to vector<1x8xi32>
    %764 = arith.select %762, %760, %763 : vector<1x8xi1>, vector<1x8xi32>
    %cst_233 = arith.constant dense<0> : vector<1xi32>
    %765 = vector.multi_reduction <add>, %764, %cst_233 [1] : vector<1x8xi32> to vector<1xi32>
    %766 = vector.shape_cast %765 : vector<1xi32> to vector<1x1xi32>
    %c4_i32_234 = arith.constant 4 : i32
    %767 = vector.broadcast %c4_i32_234 : i32 to vector<1x8xi32>
    %768 = arith.cmpi eq, %729, %767 : vector<1x8xi32>
    %769 = vector.shape_cast %766 : vector<1x1xi32> to vector<1x1xi32>
    %770 = vector.broadcast %769 : vector<1x1xi32> to vector<1x8xi32>
    %771 = arith.select %768, %770, %759 : vector<1x8xi1>, vector<1x8xi32>
    %c4_235 = arith.constant 4 : index
    %c0_236 = arith.constant 0 : index
    %772 = vector.load %arg21[%c4_235, %c0_236] : memref<8x8xi32, #tpu.memory_space<vmem>>, vector<1x8xi32>
    %773 = vector.broadcast %766 : vector<1x1xi32> to vector<1x8xi32>
    %774 = arith.cmpi eq, %539, %773 : vector<1x8xi32>
    %c0_i32_237 = arith.constant 0 : i32
    %775 = vector.broadcast %c0_i32_237 : i32 to vector<1x8xi32>
    %776 = arith.select %774, %772, %775 : vector<1x8xi1>, vector<1x8xi32>
    %cst_238 = arith.constant dense<0> : vector<1xi32>
    %777 = vector.multi_reduction <add>, %776, %cst_238 [1] : vector<1x8xi32> to vector<1xi32>
    %778 = vector.shape_cast %777 : vector<1xi32> to vector<1x1xi32>
    %c3_i32_239 = arith.constant 3 : i32
    %779 = vector.broadcast %c3_i32_239 : i32 to vector<1x8xi32>
    %780 = arith.cmpi eq, %729, %779 : vector<1x8xi32>
    %781 = vector.shape_cast %778 : vector<1x1xi32> to vector<1x1xi32>
    %782 = vector.broadcast %781 : vector<1x1xi32> to vector<1x8xi32>
    %783 = arith.select %780, %782, %771 : vector<1x8xi1>, vector<1x8xi32>
    %c3 = arith.constant 3 : index
    %c0_240 = arith.constant 0 : index
    %784 = vector.load %arg21[%c3, %c0_240] : memref<8x8xi32, #tpu.memory_space<vmem>>, vector<1x8xi32>
    %785 = vector.broadcast %778 : vector<1x1xi32> to vector<1x8xi32>
    %786 = arith.cmpi eq, %539, %785 : vector<1x8xi32>
    %c0_i32_241 = arith.constant 0 : i32
    %787 = vector.broadcast %c0_i32_241 : i32 to vector<1x8xi32>
    %788 = arith.select %786, %784, %787 : vector<1x8xi1>, vector<1x8xi32>
    %cst_242 = arith.constant dense<0> : vector<1xi32>
    %789 = vector.multi_reduction <add>, %788, %cst_242 [1] : vector<1x8xi32> to vector<1xi32>
    %790 = vector.shape_cast %789 : vector<1xi32> to vector<1x1xi32>
    %c2_i32_243 = arith.constant 2 : i32
    %791 = vector.broadcast %c2_i32_243 : i32 to vector<1x8xi32>
    %792 = arith.cmpi eq, %729, %791 : vector<1x8xi32>
    %793 = vector.shape_cast %790 : vector<1x1xi32> to vector<1x1xi32>
    %794 = vector.broadcast %793 : vector<1x1xi32> to vector<1x8xi32>
    %795 = arith.select %792, %794, %783 : vector<1x8xi1>, vector<1x8xi32>
    %c2 = arith.constant 2 : index
    %c0_244 = arith.constant 0 : index
    %796 = vector.load %arg21[%c2, %c0_244] : memref<8x8xi32, #tpu.memory_space<vmem>>, vector<1x8xi32>
    %797 = vector.broadcast %790 : vector<1x1xi32> to vector<1x8xi32>
    %798 = arith.cmpi eq, %539, %797 : vector<1x8xi32>
    %c0_i32_245 = arith.constant 0 : i32
    %799 = vector.broadcast %c0_i32_245 : i32 to vector<1x8xi32>
    %800 = arith.select %798, %796, %799 : vector<1x8xi1>, vector<1x8xi32>
    %cst_246 = arith.constant dense<0> : vector<1xi32>
    %801 = vector.multi_reduction <add>, %800, %cst_246 [1] : vector<1x8xi32> to vector<1xi32>
    %802 = vector.shape_cast %801 : vector<1xi32> to vector<1x1xi32>
    %c1_i32_247 = arith.constant 1 : i32
    %803 = vector.broadcast %c1_i32_247 : i32 to vector<1x8xi32>
    %804 = arith.cmpi eq, %729, %803 : vector<1x8xi32>
    %805 = vector.shape_cast %802 : vector<1x1xi32> to vector<1x1xi32>
    %806 = vector.broadcast %805 : vector<1x1xi32> to vector<1x8xi32>
    %807 = arith.select %804, %806, %795 : vector<1x8xi1>, vector<1x8xi32>
    %c1_248 = arith.constant 1 : index
    %c0_249 = arith.constant 0 : index
    %808 = vector.load %arg21[%c1_248, %c0_249] : memref<8x8xi32, #tpu.memory_space<vmem>>, vector<1x8xi32>
    %809 = vector.broadcast %802 : vector<1x1xi32> to vector<1x8xi32>
    %810 = arith.cmpi eq, %539, %809 : vector<1x8xi32>
    %c0_i32_250 = arith.constant 0 : i32
    %811 = vector.broadcast %c0_i32_250 : i32 to vector<1x8xi32>
    %812 = arith.select %810, %808, %811 : vector<1x8xi1>, vector<1x8xi32>
    %cst_251 = arith.constant dense<0> : vector<1xi32>
    %813 = vector.multi_reduction <add>, %812, %cst_251 [1] : vector<1x8xi32> to vector<1xi32>
    %814 = vector.shape_cast %813 : vector<1xi32> to vector<1x1xi32>
    %c0_i32_252 = arith.constant 0 : i32
    %815 = vector.broadcast %c0_i32_252 : i32 to vector<1x8xi32>
    %816 = arith.cmpi eq, %729, %815 : vector<1x8xi32>
    %817 = vector.shape_cast %814 : vector<1x1xi32> to vector<1x1xi32>
    %818 = vector.broadcast %817 : vector<1x1xi32> to vector<1x8xi32>
    %819 = arith.select %816, %818, %807 : vector<1x8xi1>, vector<1x8xi32>
    %c0_253 = arith.constant 0 : index
    %c0_254 = arith.constant 0 : index
    %820 = vector.load %arg21[%c0_253, %c0_254] : memref<8x8xi32, #tpu.memory_space<vmem>>, vector<1x8xi32>
    %821 = vector.broadcast %814 : vector<1x1xi32> to vector<1x8xi32>
    %822 = arith.cmpi eq, %539, %821 : vector<1x8xi32>
    %c0_i32_255 = arith.constant 0 : i32
    %823 = vector.broadcast %c0_i32_255 : i32 to vector<1x8xi32>
    %824 = arith.select %822, %820, %823 : vector<1x8xi1>, vector<1x8xi32>
    %cst_256 = arith.constant dense<0> : vector<1xi32>
    %825 = vector.multi_reduction <add>, %824, %cst_256 [1] : vector<1x8xi32> to vector<1xi32>
    %826 = vector.shape_cast %825 : vector<1xi32> to vector<1x1xi32>
    %c0_257 = arith.constant 0 : index
    %c0_258 = arith.constant 0 : index
    %827 = vector.load %arg13[%c0_257, %c0_258] : memref<1x8xi32, #tpu.memory_space<vmem>>, vector<1x8xi32>
    tpu.vector_store %arg13[%c0_257, %c0_258], %819 {strides = array<i32>} : memref<1x8xi32, #tpu.memory_space<vmem>>, vector<1x8xi32>,
    %c0_259 = arith.constant 0 : index
    %c0_260 = arith.constant 0 : index
    %828 = vector.load %arg15[%c0_259, %c0_260] : memref<1x1xi32, #tpu.memory_space<vmem>>, vector<1x1xi32>
    tpu.vector_store %arg15[%c0_259, %c0_260], %826 {strides = array<i32>} : memref<1x1xi32, #tpu.memory_space<vmem>>, vector<1x1xi32>,
    return
  }
}

</mosaic_0001>

<llo_original>
// kernel: bilstm_crf_forward.1
$region0: #{bilstm_crf_forward.1}
  #allocation0 [shape = 'u32[]', space=smem, size = 0x4, offset = 0x4, fixed_abs, tag = 'smem constant byte address 0x4 - core index']
  #allocation1 [shape = 'u32[144,128]{1,0:T(1,128)}', space=vmem, size = 0x12000, scoped, tag = 'internal scratch']
  #allocation2 [shape = 'f32[8,64]{1,0:T(8,128)}', space=vmem, size = 0x1000, scoped, tag = 'scratch operand']
  #allocation3 [shape = 'f32[8,64]{1,0:T(8,128)}', space=vmem, size = 0x1000, scoped, tag = 'scratch operand']
  #allocation4 [shape = 'f32[8,16]{1,0:T(8,128)}', space=vmem, size = 0x1000, scoped, tag = 'scratch operand']
  #allocation5 [shape = 'f32[8,16]{1,0:T(8,128)}', space=vmem, size = 0x1000, scoped, tag = 'scratch operand']
  #allocation6 [shape = 'f32[8,8]{1,0:T(8,128)}', space=vmem, size = 0x1000, scoped, tag = 'scratch operand']
  #allocation7 [shape = 's32[8,8]{1,0:T(8,128)}', space=vmem, size = 0x1000, scoped, tag = 'scratch operand']
  %s0 = inlined_call_operand.vmem [shape: f32[8,16], index: 0, kind: input, shape index: {}]
  %s1 = inlined_call_operand.vmem [shape: f32[16,64], index: 1, kind: input, shape index: {}]
  %s2 = inlined_call_operand.vmem [shape: f32[16,64], index: 2, kind: input, shape index: {}]
  %s3 = inlined_call_operand.vmem [shape: f32[1,64], index: 3, kind: input, shape index: {}]
  %s4 = inlined_call_operand.vmem [shape: f32[16,64], index: 4, kind: input, shape index: {}]
  %s5 = inlined_call_operand.vmem [shape: f32[16,64], index: 5, kind: input, shape index: {}]
  %s6 = inlined_call_operand.vmem [shape: f32[1,64], index: 6, kind: input, shape index: {}]
  %s7 = inlined_call_operand.vmem [shape: f32[2,16], index: 7, kind: input, shape index: {}]
  %s8 = inlined_call_operand.vmem [shape: f32[2,16], index: 8, kind: input, shape index: {}]
  %s9 = inlined_call_operand.vmem [shape: f32[32,8], index: 9, kind: input, shape index: {}]
  %s10 = inlined_call_operand.vmem [shape: f32[1,8], index: 10, kind: input, shape index: {}]
  %s11 = inlined_call_operand.vmem [shape: f32[8,8], index: 11, kind: input, shape index: {}]
  %s12 = inlined_call_operand.vmem [shape: f32[8,8], index: 12, kind: input, shape index: {}]
  %s13 = inlined_call_operand.hbm [shape: s32[1,8], index: 13, kind: output, shape index: {0}]
  %s14 = inlined_call_operand.hbm [shape: f32[1,1], index: 14, kind: output, shape index: {1}]
  %s15 = inlined_call_operand.hbm [shape: s32[1,1], index: 15, kind: output, shape index: {2}]
  %16 = xla_tuple %s13, %s14, %s15
  %s17 = sld [smem:[#allocation0]]
  $region78: #{bilstm_crf_forward.1} parent=0
    _
  %s19 = ssub.s32 1, %s17
  %s20 = scalar_select 0, %s19, %s17
  $region1: #{bilstm_crf_forward.1} parent=0
    #allocation8 [shape = 'u8[512]{0}', space=vmem, size = 0x400, scoped, tag = 'output window, operand 0, single buffered']
    #allocation9 [shape = 's32[1]{0}', space=sflag, size = 0x4, scoped, tag = 'scoped memory for bilstm_crf_forward.1']
    #allocation10 [shape = 'u8[512]{0}', space=vmem, size = 0x400, scoped, tag = 'output window, operand 1, single buffered']
    #allocation11 [shape = 's32[1]{0}', space=sflag, size = 0x4, scoped, tag = 'scoped memory for bilstm_crf_forward.1']
    #allocation12 [shape = 'u8[512]{0}', space=vmem, size = 0x400, scoped, tag = 'output window, operand 2, single buffered']
    %21 = vsyncpa [#allocation9], 0
    %22 = vsyncpa [#allocation11], 0
    // Predicated region
    $region2: #{bilstm_crf_forward.1} parent=1 // pred_check
      _
    $region3: #{bilstm_crf_forward.1} parent=1 // pred_check_branch
      %24 = sbr.rel (0) target = $region5
    $region4: #{bilstm_crf_forward.1} parent=1 // pred_region
      _
    $region5: #{bilstm_crf_forward.1} parent=1 // pred_fallthru
      _
    // Predicated region
    $region6: #{bilstm_crf_forward.1} parent=1 // pred_check
      _
    $region7: #{bilstm_crf_forward.1} parent=1 // pred_check_branch
      %26 = sbr.rel (0) target = $region9
    $region8: #{bilstm_crf_forward.1} parent=1 // pred_region
      _
    $region9: #{bilstm_crf_forward.1} parent=1 // pred_fallthru
      _
    // Predicated region
    $region10: #{bilstm_crf_forward.1} parent=1 // pred_check
      _
    $region11: #{bilstm_crf_forward.1} parent=1 // pred_check_branch
      %28 = sbr.rel (0) target = $region13
    $region12: #{bilstm_crf_forward.1} parent=1 // pred_region
      _
    $region13: #{bilstm_crf_forward.1} parent=1 // pred_fallthru
      _
    // Predicated region
    $region14: #{bilstm_crf_forward.1} parent=1 // pred_check
      _
    $region15: #{bilstm_crf_forward.1} parent=1 // pred_check_branch
      %30 = sbr.rel (0) target = $region17
    $region16: #{bilstm_crf_forward.1} parent=1 // pred_region
      _
    $region17: #{bilstm_crf_forward.1} parent=1 // pred_fallthru
      _
    // Predicated region
    $region18: #{bilstm_crf_forward.1} parent=1 // pred_check
      _
    $region19: #{bilstm_crf_forward.1} parent=1 // pred_check_branch
      %32 = sbr.rel (0) target = $region21
    $region20: #{bilstm_crf_forward.1} parent=1 // pred_region
      _
    $region21: #{bilstm_crf_forward.1} parent=1 // pred_fallthru
      _
    // Predicated region
    $region22: #{bilstm_crf_forward.1} parent=1 // pred_check
      _
    $region23: #{bilstm_crf_forward.1} parent=1 // pred_check_branch
      %34 = sbr.rel (0) target = $region25
    $region24: #{bilstm_crf_forward.1} parent=1 // pred_region
      _
    $region25: #{bilstm_crf_forward.1} parent=1 // pred_fallthru
      _
    // Predicated region
    $region26: #{bilstm_crf_forward.1} parent=1 // pred_check
      _
    $region27: #{bilstm_crf_forward.1} parent=1 // pred_check_branch
      %36 = sbr.rel (0) target = $region29
    $region28: #{bilstm_crf_forward.1} parent=1 // pred_region
      _
    $region29: #{bilstm_crf_forward.1} parent=1 // pred_fallthru
      _
    // Predicated region
    $region30: #{bilstm_crf_forward.1} parent=1 // pred_check
      _
    $region31: #{bilstm_crf_forward.1} parent=1 // pred_check_branch
      %38 = sbr.rel (0) target = $region33
    $region32: #{bilstm_crf_forward.1} parent=1 // pred_region
      _
    $region33: #{bilstm_crf_forward.1} parent=1 // pred_fallthru
      _
    // Predicated region
    $region34: #{bilstm_crf_forward.1} parent=1 // pred_check
      _
    $region35: #{bilstm_crf_forward.1} parent=1 // pred_check_branch
      %40 = sbr.rel (0) target = $region37
    $region36: #{bilstm_crf_forward.1} parent=1 // pred_region
      _
    $region37: #{bilstm_crf_forward.1} parent=1 // pred_fallthru
      _
    // Predicated region
    $region38: #{bilstm_crf_forward.1} parent=1 // pred_check
      _
    $region39: #{bilstm_crf_forward.1} parent=1 // pred_check_branch
      %42 = sbr.rel (0) target = $region41
    $region40: #{bilstm_crf_forward.1} parent=1 // pred_region
      _
    $region41: #{bilstm_crf_forward.1} parent=1 // pred_fallthru
      _
    // Predicated region
    $region42: #{bilstm_crf_forward.1} parent=1 // pred_check
      _
    $region43: #{bilstm_crf_forward.1} parent=1 // pred_check_branch
      %44 = sbr.rel (0) target = $region45
    $region44: #{bilstm_crf_forward.1} parent=1 // pred_region
      _
    $region45: #{bilstm_crf_forward.1} parent=1 // pred_fallthru
      _
    // Predicated region
    $region46: #{bilstm_crf_forward.1} parent=1 // pred_check
      _
    $region47: #{bilstm_crf_forward.1} parent=1 // pred_check_branch
      %46 = sbr.rel (0) target = $region49
    $region48: #{bilstm_crf_forward.1} parent=1 // pred_region
      _
    $region49: #{bilstm_crf_forward.1} parent=1 // pred_fallthru
      _
    // Predicated region
    $region50: #{bilstm_crf_forward.1} parent=1 // pred_check
      _
    $region51: #{bilstm_crf_forward.1} parent=1 // pred_check_branch
      %48 = sbr.rel (0) target = $region53
    $region52: #{bilstm_crf_forward.1} parent=1 // pred_region
      _
    $region53: #{bilstm_crf_forward.1} parent=1 // pred_fallthru
      _
    %v49 = vld [vmem:[%s0] sm:$0xff]
    %v50 = vld [vmem:[%s1] sm:$0xff]
    %v51 = vld [vmem:[%s1 + $0x8] sm:$0xff]
    %v52 = vld [vmem:[%s3] sm:$0x1]
    %v54 = vlaneseq
    %v55 = vshrl.u32 %v54, 7
    %v56 = vsub.s32 0, %v55
    %v57 = vrot.slane %v52, %v56
    %vm59 = vcmask 130048
    %v61 = vsel %vm59, %v49, 0
    %63 = vmatprep.subr.mxu0 0.0
    %64 = vmatpush1.msra.mxu0 %v50
    %65 = vmatprep.subr.mxu0 0.0
    %66 = vmatpush1.msra.mxu0 %v51
    %67 = vmatprep.subr.mxu0 0.0
    %68 = vmatpush1.msra.mxu0 0.0
    %69 = vmatprep.subr.mxu0 0.0
    %70 = vmatpush1.msra.mxu0 0.0
    %71 = vmatprep.subr.mxu0 0.0
    %72 = vmatpush1.msra.mxu0 0.0
    %73 = vmatprep.subr.mxu0 0.0
    %74 = vmatpush1.msra.mxu0 0.0
    %75 = vmatprep.subr.mxu0 0.0
    %76 = vmatpush1.msra.mxu0 0.0
    %77 = vmatprep.subr.mxu0 0.0
    %78 = vmatpush1.msra.mxu0 0.0
    %79 = vmatprep.subr.mxu0 0.0
    %80 = vmatpush1.msra.mxu0 0.0
    %81 = vmatprep.subr.mxu0 0.0
    %82 = vmatpush1.msra.mxu0 0.0
    %83 = vmatprep.subr.mxu0 0.0
    %84 = vmatpush1.msra.mxu0 0.0
    %85 = vmatprep.subr.mxu0 0.0
    %86 = vmatpush1.msra.mxu0 0.0
    %87 = vmatprep.subr.mxu0 0.0
    %88 = vmatpush1.msra.mxu0 0.0
    %89 = vmatprep.subr.mxu0 0.0
    %90 = vmatpush1.msra.mxu0 0.0
    %91 = vmatprep.subr.mxu0 0.0
    %92 = vmatpush1.msra.mxu0 0.0
    %93 = vmatprep.subr.mxu0 0.0
    %94 = vmatpush1.msra.mxu0 0.0
    %95 = vmatprep.subr.mxu0 0.0
    %96 = vmatpush1.msra.mxu0 0.0
    %97 = vmatprep.subr.mxu0 0.0
    %98 = vmatpush1.msra.mxu0 0.0
    %99 = vmatprep.subr.mxu0 0.0
    %100 = vmatpush1.msra.mxu0 0.0
    %101 = vmatprep.subr.mxu0 0.0
    %102 = vmatpush1.msra.mxu0 0.0
    %103 = vmatprep.subr.mxu0 0.0
    %104 = vmatpush1.msra.mxu0 0.0
    %105 = vmatprep.subr.mxu0 0.0
    %106 = vmatpush1.msra.mxu0 0.0
    %107 = vmatprep.subr.mxu0 0.0
    %108 = vmatpush1.msra.mxu0 0.0
    %109 = vmatprep.subr.mxu0 0.0
    %110 = vmatpush1.msra.mxu0 0.0
    %111 = vmatprep.subr.mxu0 0.0
    %112 = vmatpush1.msra.mxu0 0.0
    %113 = vmatprep.subr.mxu0 0.0
    %114 = vmatpush1.msra.mxu0 0.0
    %115 = vmatprep.subr.mxu0 0.0
    %116 = vmatpush1.msra.mxu0 0.0
    %117 = vmatprep.subr.mxu0 0.0
    %118 = vmatpush1.msra.mxu0 0.0
    %119 = vmatprep.subr.mxu0 0.0
    %120 = vmatpush1.msra.mxu0 0.0
    %121 = vmatprep.subr.mxu0 0.0
    %122 = vmatpush1.msra.mxu0 0.0
    %123 = vmatprep.subr.mxu0 0.0
    %124 = vmatpush1.msra.mxu0 0.0
    %125 = vmatprep.subr.mxu0 0.0
    %126 = vmatpush1.msra.mxu0 0.0
    %127 = vmatprep.mubr.f32.mxu0 0.0
    %128 = vmatmul.mubr.f32.gmra.mrb[0].mxu0 %v61
    %v129 = vpop.f32.mrb[0].mxu0
    %v130 = vadd.f32 %v57, %v129
    %v131 = vpop.f32.mrb[0].mxu0
    %132 = vdwg.mxu0
    %vm133 = vcmask 523264
    %134 = vst.msk [vmem:[#allocation2] sm:$0xff] %vm133, %v130
    %v135 = vld [vmem:[%s4] sm:$0xff]
    %v136 = vld [vmem:[%s4 + $0x8] sm:$0xff]
    %v137 = vld [vmem:[%s6] sm:$0x1]
    %v139 = vlaneseq
    %v140 = vshrl.u32 %v139, 7
    %v141 = vsub.s32 0, %v140
    %v142 = vrot.slane %v137, %v141
    %144 = vmatprep.subr.mxu0 0.0
    %145 = vmatpush1.msra.mxu0 %v135
    %146 = vmatprep.subr.mxu0 0.0
    %147 = vmatpush1.msra.mxu0 %v136
    %148 = vmatprep.subr.mxu0 0.0
    %149 = vmatpush1.msra.mxu0 0.0
    %150 = vmatprep.subr.mxu0 0.0
    %151 = vmatpush1.msra.mxu0 0.0
    %152 = vmatprep.subr.mxu0 0.0
    %153 = vmatpush1.msra.mxu0 0.0
    %154 = vmatprep.subr.mxu0 0.0
    %155 = vmatpush1.msra.mxu0 0.0
    %156 = vmatprep.subr.mxu0 0.0
    %157 = vmatpush1.msra.mxu0 0.0
    %158 = vmatprep.subr.mxu0 0.0
    %159 = vmatpush1.msra.mxu0 0.0
    %160 = vmatprep.subr.mxu0 0.0
    %161 = vmatpush1.msra.mxu0 0.0
    %162 = vmatprep.subr.mxu0 0.0
    %163 = vmatpush1.msra.mxu0 0.0
    %164 = vmatprep.subr.mxu0 0.0
    %165 = vmatpush1.msra.mxu0 0.0
    %166 = vmatprep.subr.mxu0 0.0
    %167 = vmatpush1.msra.mxu0 0.0
    %168 = vmatprep.subr.mxu0 0.0
    %169 = vmatpush1.msra.mxu0 0.0
    %170 = vmatprep.subr.mxu0 0.0
    %171 = vmatpush1.msra.mxu0 0.0
    %172 = vmatprep.subr.mxu0 0.0
    %173 = vmatpush1.msra.mxu0 0.0
    %174 = vmatprep.subr.mxu0 0.0
    %175 = vmatpush1.msra.mxu0 0.0
    %176 = vmatprep.subr.mxu0 0.0
    %177 = vmatpush1.msra.mxu0 0.0
    %178 = vmatprep.subr.mxu0 0.0
    %179 = vmatpush1.msra.mxu0 0.0
    %180 = vmatprep.subr.mxu0 0.0
    %181 = vmatpush1.msra.mxu0 0.0
    %182 = vmatprep.subr.mxu0 0.0
    %183 = vmatpush1.msra.mxu0 0.0
    %184 = vmatprep.subr.mxu0 0.0
    %185 = vmatpush1.msra.mxu0 0.0
    %186 = vmatprep.subr.mxu0 0.0
    %187 = vmatpush1.msra.mxu0 0.0
    %188 = vmatprep.subr.mxu0 0.0
    %189 = vmatpush1.msra.mxu0 0.0
    %190 = vmatprep.subr.mxu0 0.0
    %191 = vmatpush1.msra.mxu0 0.0
    %192 = vmatprep.subr.mxu0 0.0
    %193 = vmatpush1.msra.mxu0 0.0
    %194 = vmatprep.subr.mxu0 0.0
    %195 = vmatpush1.msra.mxu0 0.0
    %196 = vmatprep.subr.mxu0 0.0
    %197 = vmatpush1.msra.mxu0 0.0
    %198 = vmatprep.subr.mxu0 0.0
    %199 = vmatpush1.msra.mxu0 0.0
    %200 = vmatprep.subr.mxu0 0.0
    %201 = vmatpush1.msra.mxu0 0.0
    %202 = vmatprep.subr.mxu0 0.0
    %203 = vmatpush1.msra.mxu0 0.0
    %204 = vmatprep.subr.mxu0 0.0
    %205 = vmatpush1.msra.mxu0 0.0
    %206 = vmatprep.subr.mxu0 0.0
    %207 = vmatpush1.msra.mxu0 0.0
    %208 = vmatprep.mubr.f32.mxu0 0.0
    %209 = vmatmul.mubr.f32.gmra.mrb[0].mxu0 %v61
    %v210 = vpop.f32.mrb[0].mxu0
    %v211 = vadd.f32 %v142, %v210
    %v212 = vpop.f32.mrb[0].mxu0
    %213 = vdwg.mxu0
    %214 = vst.msk [vmem:[#allocation3] sm:$0xff] %vm133, %v211
    %v215 = vld [vmem:[%s2] sm:$0xff]
    %v216 = vld [vmem:[%s2 + $0x8] sm:$0xff]
    %v217 = vld [vmem:[%s5] sm:$0xff]
    %v218 = vld [vmem:[%s5 + $0x8] sm:$0xff]
    %v219 = vld [vmem:[%s7] sm:$0x1]
    %v220 = vld [vmem:[%s8] sm:$0x1]
    %v221 = vld [vmem:[%s7 + $0x1] sm:$0x1]
    %v222 = vld [vmem:[%s8 + $0x1] sm:$0x1]
    %v223 = vld [vmem:[#allocation2] sm:$0x1]
    %v225 = vsel %vm59, %v219, 0
    %227 = vmatprep.subr.mxu0 0.0
    %228 = vmatpush1.msra.mxu0 %v215
    %229 = vmatprep.subr.mxu0 0.0
    %230 = vmatpush1.msra.mxu0 %v216
    %231 = vmatprep.subr.mxu0 0.0
    %232 = vmatpush1.msra.mxu0 0.0
    %233 = vmatprep.subr.mxu0 0.0
    %234 = vmatpush1.msra.mxu0 0.0
    %235 = vmatprep.subr.mxu0 0.0
    %236 = vmatpush1.msra.mxu0 0.0
    %237 = vmatprep.subr.mxu0 0.0
    %238 = vmatpush1.msra.mxu0 0.0
    %239 = vmatprep.subr.mxu0 0.0
    %240 = vmatpush1.msra.mxu0 0.0
    %241 = vmatprep.subr.mxu0 0.0
    %242 = vmatpush1.msra.mxu0 0.0
    %243 = vmatprep.subr.mxu0 0.0
    %244 = vmatpush1.msra.mxu0 0.0
    %245 = vmatprep.subr.mxu0 0.0
    %246 = vmatpush1.msra.mxu0 0.0
    %247 = vmatprep.subr.mxu0 0.0
    %248 = vmatpush1.msra.mxu0 0.0
    %249 = vmatprep.subr.mxu0 0.0
    %250 = vmatpush1.msra.mxu0 0.0
    %251 = vmatprep.subr.mxu0 0.0
    %252 = vmatpush1.msra.mxu0 0.0
    %253 = vmatprep.subr.mxu0 0.0
    %254 = vmatpush1.msra.mxu0 0.0
    %255 = vmatprep.subr.mxu0 0.0
    %256 = vmatpush1.msra.mxu0 0.0
    %257 = vmatprep.subr.mxu0 0.0
    %258 = vmatpush1.msra.mxu0 0.0
    %259 = vmatprep.subr.mxu0 0.0
    %260 = vmatpush1.msra.mxu0 0.0
    %261 = vmatprep.subr.mxu0 0.0
    %262 = vmatpush1.msra.mxu0 0.0
    %263 = vmatprep.subr.mxu0 0.0
    %264 = vmatpush1.msra.mxu0 0.0
    %265 = vmatprep.subr.mxu0 0.0
    %266 = vmatpush1.msra.mxu0 0.0
    %267 = vmatprep.subr.mxu0 0.0
    %268 = vmatpush1.msra.mxu0 0.0
    %269 = vmatprep.subr.mxu0 0.0
    %270 = vmatpush1.msra.mxu0 0.0
    %271 = vmatprep.subr.mxu0 0.0
    %272 = vmatpush1.msra.mxu0 0.0
    %273 = vmatprep.subr.mxu0 0.0
    %274 = vmatpush1.msra.mxu0 0.0
    %275 = vmatprep.subr.mxu0 0.0
    %276 = vmatpush1.msra.mxu0 0.0
    %277 = vmatprep.subr.mxu0 0.0
    %278 = vmatpush1.msra.mxu0 0.0
    %279 = vmatprep.subr.mxu0 0.0
    %280 = vmatpush1.msra.mxu0 0.0
    %281 = vmatprep.subr.mxu0 0.0
    %282 = vmatpush1.msra.mxu0 0.0
    %283 = vmatprep.subr.mxu0 0.0
    %284 = vmatpush1.msra.mxu0 0.0
    %285 = vmatprep.subr.mxu0 0.0
    %286 = vmatpush1.msra.mxu0 0.0
    %287 = vmatprep.subr.mxu0 0.0
    %288 = vmatpush1.msra.mxu0 0.0
    %289 = vmatprep.subr.mxu0 0.0
    %290 = vmatpush1.msra.mxu0 0.0
    %291 = vmatprep.mubr.f32.mxu0 0.0
    %292 = vmatmul.mubr.f32.gmra.mrb[0].mxu0 %v225
    %v293 = vpop.f32.mrb[0].mxu0
    %v294 = vadd.f32 0.0, %v293
    %v295 = vpop.f32.mrb[0].mxu0
    %296 = vdwg.mxu0
    %v297 = vadd.f32 %v223, %v294
    %v298 = vld [vmem:[#allocation3 + $0x7] sm:$0x1]
    %v300 = vsel %vm59, %v221, 0
    %302 = vmatprep.subr.mxu0 0.0
    %303 = vmatpush1.msra.mxu0 %v217
    %304 = vmatprep.subr.mxu0 0.0
    %305 = vmatpush1.msra.mxu0 %v218
    %306 = vmatprep.subr.mxu0 0.0
    %307 = vmatpush1.msra.mxu0 0.0
    %308 = vmatprep.subr.mxu0 0.0
    %309 = vmatpush1.msra.mxu0 0.0
    %310 = vmatprep.subr.mxu0 0.0
    %311 = vmatpush1.msra.mxu0 0.0
    %312 = vmatprep.subr.mxu0 0.0
    %313 = vmatpush1.msra.mxu0 0.0
    %314 = vmatprep.subr.mxu0 0.0
    %315 = vmatpush1.msra.mxu0 0.0
    %316 = vmatprep.subr.mxu0 0.0
    %317 = vmatpush1.msra.mxu0 0.0
    %318 = vmatprep.subr.mxu0 0.0
    %319 = vmatpush1.msra.mxu0 0.0
    %320 = vmatprep.subr.mxu0 0.0
    %321 = vmatpush1.msra.mxu0 0.0
    %322 = vmatprep.subr.mxu0 0.0
    %323 = vmatpush1.msra.mxu0 0.0
    %324 = vmatprep.subr.mxu0 0.0
    %325 = vmatpush1.msra.mxu0 0.0
    %326 = vmatprep.subr.mxu0 0.0
    %327 = vmatpush1.msra.mxu0 0.0
    %328 = vmatprep.subr.mxu0 0.0
    %329 = vmatpush1.msra.mxu0 0.0
    %330 = vmatprep.subr.mxu0 0.0
    %331 = vmatpush1.msra.mxu0 0.0
    %332 = vmatprep.subr.mxu0 0.0
    %333 = vmatpush1.msra.mxu0 0.0
    %334 = vmatprep.subr.mxu0 0.0
    %335 = vmatpush1.msra.mxu0 0.0
    %336 = vmatprep.subr.mxu0 0.0
    %337 = vmatpush1.msra.mxu0 0.0
    %338 = vmatprep.subr.mxu0 0.0
    %339 = vmatpush1.msra.mxu0 0.0
    %340 = vmatprep.subr.mxu0 0.0
    %341 = vmatpush1.msra.mxu0 0.0
    %342 = vmatprep.subr.mxu0 0.0
    %343 = vmatpush1.msra.mxu0 0.0
    %344 = vmatprep.subr.mxu0 0.0
    %345 = vmatpush1.msra.mxu0 0.0
    %346 = vmatprep.subr.mxu0 0.0
    %347 = vmatpush1.msra.mxu0 0.0
    %348 = vmatprep.subr.mxu0 0.0
    %349 = vmatpush1.msra.mxu0 0.0
    %350 = vmatprep.subr.mxu0 0.0
    %351 = vmatpush1.msra.mxu0 0.0
    %352 = vmatprep.subr.mxu0 0.0
    %353 = vmatpush1.msra.mxu0 0.0
    %354 = vmatprep.subr.mxu0 0.0
    %355 = vmatpush1.msra.mxu0 0.0
    %356 = vmatprep.subr.mxu0 0.0
    %357 = vmatpush1.msra.mxu0 0.0
    %358 = vmatprep.subr.mxu0 0.0
    %359 = vmatpush1.msra.mxu0 0.0
    %360 = vmatprep.subr.mxu0 0.0
    %361 = vmatpush1.msra.mxu0 0.0
    %362 = vmatprep.subr.mxu0 0.0
    %363 = vmatpush1.msra.mxu0 0.0
    %364 = vmatprep.subr.mxu0 0.0
    %365 = vmatpush1.msra.mxu0 0.0
    %366 = vmatprep.mubr.f32.mxu0 0.0
    %367 = vmatmul.mubr.f32.gmra.mrb[0].mxu0 %v300
    %v368 = vpop.f32.mrb[0].mxu0
    %v369 = vadd.f32 0.0, %v368
    %v370 = vpop.f32.mrb[0].mxu0
    %371 = vdwg.mxu0
    %v372 = vadd.f32 %v298, %v369
    %v373 = vxor.u32 %v297, 2147483648
    %v374 = vmul.f32 %v373, 1.442695
    %v375 = vpow.pop %v374
    %v376 = vadd.f32 %v375, 1.0
    %v377 = vrcp.pop %v376
    %v378 = vmul.f32 1.0, %v377
    %v379 = vtanh.pop %v297
    %381 = vrot.lane.b32.xlu0 %v220, 16
    %v382 = vpop.permute.xlu0 %381
    %v384 = vmul.f32 %v378, %v382
    %386 = vrot.lane.b32.xlu0 %v379, 96
    %v387 = vpop.permute.xlu0 %386
    %v389 = vmul.f32 %v378, %v387
    %391 = vrot.lane.b32.xlu0 %v389, 16
    %v392 = vpop.permute.xlu0 %391
    %v394 = vadd.f32 %v384, %v392
    %v395 = vtanh.pop %v394
    %397 = vrot.lane.b32.xlu0 %v395, 32
    %v398 = vpop.permute.xlu0 %397
    %v400 = vmul.f32 %v378, %v398
    %v401 = vxor.u32 %v372, 2147483648
    %v402 = vmul.f32 %v401, 1.442695
    %v403 = vpow.pop %v402
    %v404 = vadd.f32 %v403, 1.0
    %v405 = vrcp.pop %v404
    %v406 = vmul.f32 1.0, %v405
    %v407 = vtanh.pop %v372
    %409 = vrot.lane.b32.xlu0 %v222, 16
    %v410 = vpop.permute.xlu0 %409
    %v412 = vmul.f32 %v406, %v410
    %414 = vrot.lane.b32.xlu0 %v407, 96
    %v415 = vpop.permute.xlu0 %414
    %v417 = vmul.f32 %v406, %v415
    %419 = vrot.lane.b32.xlu0 %v417, 16
    %v420 = vpop.permute.xlu0 %419
    %v422 = vadd.f32 %v412, %v420
    %v423 = vtanh.pop %v422
    %425 = vrot.lane.b32.xlu0 %v423, 32
    %v426 = vpop.permute.xlu0 %425
    %v428 = vmul.f32 %v406, %v426
    %430 = vrot.lane.b32.xlu0 %v400, 80
    %v431 = vpop.permute.xlu0 %430
    %vm433 = vcmask 122880
    %434 = vst.msk [vmem:[#allocation4] sm:$0x1] %vm433, %v431
    %436 = vrot.lane.b32.xlu0 %v428, 80
    %v437 = vpop.permute.xlu0 %436
    %439 = vst.msk [vmem:[#allocation5 + $0x7] sm:$0x1] %vm433, %v437
    %v440 = vld [vmem:[#allocation2 + $0x1] sm:$0x1]
    %v441 = vsel %vm59, %v431, 0
    %443 = vmatprep.subr.mxu0 0.0
    %444 = vmatpush1.msra.mxu0 %v215
    %445 = vmatprep.subr.mxu0 0.0
    %446 = vmatpush1.msra.mxu0 %v216
    %447 = vmatprep.subr.mxu0 0.0
    %448 = vmatpush1.msra.mxu0 0.0
    %449 = vmatprep.subr.mxu0 0.0
    %450 = vmatpush1.msra.mxu0 0.0
    %451 = vmatprep.subr.mxu0 0.0
    %452 = vmatpush1.msra.mxu0 0.0
    %453 = vmatprep.subr.mxu0 0.0
    %454 = vmatpush1.msra.mxu0 0.0
    %455 = vmatprep.subr.mxu0 0.0
    %456 = vmatpush1.msra.mxu0 0.0
    %457 = vmatprep.subr.mxu0 0.0
    %458 = vmatpush1.msra.mxu0 0.0
    %459 = vmatprep.subr.mxu0 0.0
    %460 = vmatpush1.msra.mxu0 0.0
    %461 = vmatprep.subr.mxu0 0.0
    %462 = vmatpush1.msra.mxu0 0.0
    %463 = vmatprep.subr.mxu0 0.0
    %464 = vmatpush1.msra.mxu0 0.0
    %465 = vmatprep.subr.mxu0 0.0
    %466 = vmatpush1.msra.mxu0 0.0
    %467 = vmatprep.subr.mxu0 0.0
    %468 = vmatpush1.msra.mxu0 0.0
    %469 = vmatprep.subr.mxu0 0.0
    %470 = vmatpush1.msra.mxu0 0.0
    %471 = vmatprep.subr.mxu0 0.0
    %472 = vmatpush1.msra.mxu0 0.0
    %473 = vmatprep.subr.mxu0 0.0
    %474 = vmatpush1.msra.mxu0 0.0
    %475 = vmatprep.subr.mxu0 0.0
    %476 = vmatpush1.msra.mxu0 0.0
    %477 = vmatprep.subr.mxu0 0.0
    %478 = vmatpush1.msra.mxu0 0.0
    %479 = vmatprep.subr.mxu0 0.0
    %480 = vmatpush1.msra.mxu0 0.0
    %481 = vmatprep.subr.mxu0 0.0
    %482 = vmatpush1.msra.mxu0 0.0
    %483 = vmatprep.subr.mxu0 0.0
    %484 = vmatpush1.msra.mxu0 0.0
    %485 = vmatprep.subr.mxu0 0.0
    %486 = vmatpush1.msra.mxu0 0.0
    %487 = vmatprep.subr.mxu0 0.0
    %488 = vmatpush1.msra.mxu0 0.0
    %489 = vmatprep.subr.mxu0 0.0
    %490 = vmatpush1.msra.mxu0 0.0
    %491 = vmatprep.subr.mxu0 0.0
    %492 = vmatpush1.msra.mxu0 0.0
    %493 = vmatprep.subr.mxu0 0.0
    %494 = vmatpush1.msra.mxu0 0.0
    %495 = vmatprep.subr.mxu0 0.0
    %496 = vmatpush1.msra.mxu0 0.0
    %497 = vmatprep.subr.mxu0 0.0
    %498 = vmatpush1.msra.mxu0 0.0
    %499 = vmatprep.subr.mxu0 0.0
    %500 = vmatpush1.msra.mxu0 0.0
    %501 = vmatprep.subr.mxu0 0.0
    %502 = vmatpush1.msra.mxu0 0.0
    %503 = vmatprep.subr.mxu0 0.0
    %504 = vmatpush1.msra.mxu0 0.0
    %505 = vmatprep.subr.mxu0 0.0
    %506 = vmatpush1.msra.mxu0 0.0
    %507 = vmatprep.mubr.f32.mxu0 0.0
    %508 = vmatmul.mubr.f32.gmra.mrb[0].mxu0 %v441
    %v509 = vpop.f32.mrb[0].mxu0
    %v510 = vadd.f32 0.0, %v509
    %v511 = vpop.f32.mrb[0].mxu0
    %512 = vdwg.mxu0
    %v513 = vadd.f32 %v440, %v510
    %v514 = vld [vmem:[#allocation3 + $0x6] sm:$0x1]
    %v515 = vsel %vm59, %v437, 0
    %517 = vmatprep.subr.mxu0 0.0
    %518 = vmatpush1.msra.mxu0 %v217
    %519 = vmatprep.subr.mxu0 0.0
    %520 = vmatpush1.msra.mxu0 %v218
    %521 = vmatprep.subr.mxu0 0.0
    %522 = vmatpush1.msra.mxu0 0.0
    %523 = vmatprep.subr.mxu0 0.0
    %524 = vmatpush1.msra.mxu0 0.0
    %525 = vmatprep.subr.mxu0 0.0
    %526 = vmatpush1.msra.mxu0 0.0
    %527 = vmatprep.subr.mxu0 0.0
    %528 = vmatpush1.msra.mxu0 0.0
    %529 = vmatprep.subr.mxu0 0.0
    %530 = vmatpush1.msra.mxu0 0.0
    %531 = vmatprep.subr.mxu0 0.0
    %532 = vmatpush1.msra.mxu0 0.0
    %533 = vmatprep.subr.mxu0 0.0
    %534 = vmatpush1.msra.mxu0 0.0
    %535 = vmatprep.subr.mxu0 0.0
    %536 = vmatpush1.msra.mxu0 0.0
    %537 = vmatprep.subr.mxu0 0.0
    %538 = vmatpush1.msra.mxu0 0.0
    %539 = vmatprep.subr.mxu0 0.0
    %540 = vmatpush1.msra.mxu0 0.0
    %541 = vmatprep.subr.mxu0 0.0
    %542 = vmatpush1.msra.mxu0 0.0
    %543 = vmatprep.subr.mxu0 0.0
    %544 = vmatpush1.msra.mxu0 0.0
    %545 = vmatprep.subr.mxu0 0.0
    %546 = vmatpush1.msra.mxu0 0.0
    %547 = vmatprep.subr.mxu0 0.0
    %548 = vmatpush1.msra.mxu0 0.0
    %549 = vmatprep.subr.mxu0 0.0
    %550 = vmatpush1.msra.mxu0 0.0
    %551 = vmatprep.subr.mxu0 0.0
    %552 = vmatpush1.msra.mxu0 0.0
    %553 = vmatprep.subr.mxu0 0.0
    %554 = vmatpush1.msra.mxu0 0.0
    %555 = vmatprep.subr.mxu0 0.0
    %556 = vmatpush1.msra.mxu0 0.0
    %557 = vmatprep.subr.mxu0 0.0
    %558 = vmatpush1.msra.mxu0 0.0
    %559 = vmatprep.subr.mxu0 0.0
    %560 = vmatpush1.msra.mxu0 0.0
    %561 = vmatprep.subr.mxu0 0.0
    %562 = vmatpush1.msra.mxu0 0.0
    %563 = vmatprep.subr.mxu0 0.0
    %564 = vmatpush1.msra.mxu0 0.0
    %565 = vmatprep.subr.mxu0 0.0
    %566 = vmatpush1.msra.mxu0 0.0
    %567 = vmatprep.subr.mxu0 0.0
    %568 = vmatpush1.msra.mxu0 0.0
    %569 = vmatprep.subr.mxu0 0.0
    %570 = vmatpush1.msra.mxu0 0.0
    %571 = vmatprep.subr.mxu0 0.0
    %572 = vmatpush1.msra.mxu0 0.0
    %573 = vmatprep.subr.mxu0 0.0
    %574 = vmatpush1.msra.mxu0 0.0
    %575 = vmatprep.subr.mxu0 0.0
    %576 = vmatpush1.msra.mxu0 0.0
    %577 = vmatprep.subr.mxu0 0.0
    %578 = vmatpush1.msra.mxu0 0.0
    %579 = vmatprep.subr.mxu0 0.0
    %580 = vmatpush1.msra.mxu0 0.0
    %581 = vmatprep.mubr.f32.mxu0 0.0
    %582 = vmatmul.mubr.f32.gmra.mrb[0].mxu0 %v515
    %v583 = vpop.f32.mrb[0].mxu0
    %v584 = vadd.f32 0.0, %v583
    %v585 = vpop.f32.mrb[0].mxu0
    %586 = vdwg.mxu0
    %v587 = vadd.f32 %v514, %v584
    %v588 = vxor.u32 %v513, 2147483648
    %v589 = vmul.f32 %v588, 1.442695
    %v590 = vpow.pop %v589
    %v591 = vadd.f32 %v590, 1.0
    %v592 = vrcp.pop %v591
    %v593 = vmul.f32 1.0, %v592
    %v594 = vtanh.pop %v513
    %v595 = vmul.f32 %v593, %v394
    %597 = vrot.lane.b32.xlu0 %v594, 96
    %v598 = vpop.permute.xlu0 %597
    %v600 = vmul.f32 %v593, %v598
    %602 = vrot.lane.b32.xlu0 %v600, 16
    %v603 = vpop.permute.xlu0 %602
    %v605 = vadd.f32 %v595, %v603
    %v606 = vtanh.pop %v605
    %608 = vrot.lane.b32.xlu0 %v606, 32
    %v609 = vpop.permute.xlu0 %608
    %v611 = vmul.f32 %v593, %v609
    %v612 = vxor.u32 %v587, 2147483648
    %v613 = vmul.f32 %v612, 1.442695
    %v614 = vpow.pop %v613
    %v615 = vadd.f32 %v614, 1.0
    %v616 = vrcp.pop %v615
    %v617 = vmul.f32 1.0, %v616
    %v618 = vtanh.pop %v587
    %v619 = vmul.f32 %v617, %v422
    %621 = vrot.lane.b32.xlu0 %v618, 96
    %v622 = vpop.permute.xlu0 %621
    %v624 = vmul.f32 %v617, %v622
    %626 = vrot.lane.b32.xlu0 %v624, 16
    %v627 = vpop.permute.xlu0 %626
    %v629 = vadd.f32 %v619, %v627
    %v630 = vtanh.pop %v629
    %632 = vrot.lane.b32.xlu0 %v630, 32
    %v633 = vpop.permute.xlu0 %632
    %v635 = vmul.f32 %v617, %v633
    %637 = vrot.lane.b32.xlu0 %v611, 80
    %v638 = vpop.permute.xlu0 %637
    %640 = vst.msk [vmem:[#allocation4 + $0x1] sm:$0x1] %vm433, %v638
    %642 = vrot.lane.b32.xlu0 %v635, 80
    %v643 = vpop.permute.xlu0 %642
    %645 = vst.msk [vmem:[#allocation5 + $0x6] sm:$0x1] %vm433, %v643
    %v646 = vld [vmem:[#allocation2 + $0x2] sm:$0x1]
    %v647 = vsel %vm59, %v638, 0
    %649 = vmatprep.subr.mxu0 0.0
    %650 = vmatpush1.msra.mxu0 %v215
    %651 = vmatprep.subr.mxu0 0.0
    %652 = vmatpush1.msra.mxu0 %v216
    %653 = vmatprep.subr.mxu0 0.0
    %654 = vmatpush1.msra.mxu0 0.0
    %655 = vmatprep.subr.mxu0 0.0
    %656 = vmatpush1.msra.mxu0 0.0
    %657 = vmatprep.subr.mxu0 0.0
    %658 = vmatpush1.msra.mxu0 0.0
    %659 = vmatprep.subr.mxu0 0.0
    %660 = vmatpush1.msra.mxu0 0.0
    %661 = vmatprep.subr.mxu0 0.0
    %662 = vmatpush1.msra.mxu0 0.0
    %663 = vmatprep.subr.mxu0 0.0
    %664 = vmatpush1.msra.mxu0 0.0
    %665 = vmatprep.subr.mxu0 0.0
    %666 = vmatpush1.msra.mxu0 0.0
    %667 = vmatprep.subr.mxu0 0.0
    %668 = vmatpush1.msra.mxu0 0.0
    %669 = vmatprep.subr.mxu0 0.0
    %670 = vmatpush1.msra.mxu0 0.0
    %671 = vmatprep.subr.mxu0 0.0
    %672 = vmatpush1.msra.mxu0 0.0
    %673 = vmatprep.subr.mxu0 0.0
    %674 = vmatpush1.msra.mxu0 0.0
    %675 = vmatprep.subr.mxu0 0.0
    %676 = vmatpush1.msra.mxu0 0.0
    %677 = vmatprep.subr.mxu0 0.0
    %678 = vmatpush1.msra.mxu0 0.0
    %679 = vmatprep.subr.mxu0 0.0
    %680 = vmatpush1.msra.mxu0 0.0
    %681 = vmatprep.subr.mxu0 0.0
    %682 = vmatpush1.msra.mxu0 0.0
    %683 = vmatprep.subr.mxu0 0.0
    %684 = vmatpush1.msra.mxu0 0.0
    %685 = vmatprep.subr.mxu0 0.0
    %686 = vmatpush1.msra.mxu0 0.0
    %687 = vmatprep.subr.mxu0 0.0
    %688 = vmatpush1.msra.mxu0 0.0
    %689 = vmatprep.subr.mxu0 0.0
    %690 = vmatpush1.msra.mxu0 0.0
    %691 = vmatprep.subr.mxu0 0.0
    %692 = vmatpush1.msra.mxu0 0.0
    %693 = vmatprep.subr.mxu0 0.0
    %694 = vmatpush1.msra.mxu0 0.0
    %695 = vmatprep.subr.mxu0 0.0
    %696 = vmatpush1.msra.mxu0 0.0
    %697 = vmatprep.subr.mxu0 0.0
    %698 = vmatpush1.msra.mxu0 0.0
    %699 = vmatprep.subr.mxu0 0.0
    %700 = vmatpush1.msra.mxu0 0.0
    %701 = vmatprep.subr.mxu0 0.0
    %702 = vmatpush1.msra.mxu0 0.0
    %703 = vmatprep.subr.mxu0 0.0
    %704 = vmatpush1.msra.mxu0 0.0
    %705 = vmatprep.subr.mxu0 0.0
    %706 = vmatpush1.msra.mxu0 0.0
    %707 = vmatprep.subr.mxu0 0.0
    %708 = vmatpush1.msra.mxu0 0.0
    %709 = vmatprep.subr.mxu0 0.0
    %710 = vmatpush1.msra.mxu0 0.0
    %711 = vmatprep.subr.mxu0 0.0
    %712 = vmatpush1.msra.mxu0 0.0
    %713 = vmatprep.mubr.f32.mxu0 0.0
    %714 = vmatmul.mubr.f32.gmra.mrb[0].mxu0 %v647
    %v715 = vpop.f32.mrb[0].mxu0
    %v716 = vadd.f32 0.0, %v715
    %v717 = vpop.f32.mrb[0].mxu0
    %718 = vdwg.mxu0
    %v719 = vadd.f32 %v646, %v716
    %v720 = vld [vmem:[#allocation3 + $0x5] sm:$0x1]
    %v721 = vsel %vm59, %v643, 0
    %723 = vmatprep.subr.mxu0 0.0
    %724 = vmatpush1.msra.mxu0 %v217
    %725 = vmatprep.subr.mxu0 0.0
    %726 = vmatpush1.msra.mxu0 %v218
    %727 = vmatprep.subr.mxu0 0.0
    %728 = vmatpush1.msra.mxu0 0.0
    %729 = vmatprep.subr.mxu0 0.0
    %730 = vmatpush1.msra.mxu0 0.0
    %731 = vmatprep.subr.mxu0 0.0
    %732 = vmatpush1.msra.mxu0 0.0
    %733 = vmatprep.subr.mxu0 0.0
    %734 = vmatpush1.msra.mxu0 0.0
    %735 = vmatprep.subr.mxu0 0.0
    %736 = vmatpush1.msra.mxu0 0.0
    %737 = vmatprep.subr.mxu0 0.0
    %738 = vmatpush1.msra.mxu0 0.0
    %739 = vmatprep.subr.mxu0 0.0
    %740 = vmatpush1.msra.mxu0 0.0
    %741 = vmatprep.subr.mxu0 0.0
    %742 = vmatpush1.msra.mxu0 0.0
    %743 = vmatprep.subr.mxu0 0.0
    %744 = vmatpush1.msra.mxu0 0.0
    %745 = vmatprep.subr.mxu0 0.0
    %746 = vmatpush1.msra.mxu0 0.0
    %747 = vmatprep.subr.mxu0 0.0
    %748 = vmatpush1.msra.mxu0 0.0
    %749 = vmatprep.subr.mxu0 0.0
    %750 = vmatpush1.msra.mxu0 0.0
    %751 = vmatprep.subr.mxu0 0.0
    %752 = vmatpush1.msra.mxu0 0.0
    %753 = vmatprep.subr.mxu0 0.0
    %754 = vmatpush1.msra.mxu0 0.0
    %755 = vmatprep.subr.mxu0 0.0
    %756 = vmatpush1.msra.mxu0 0.0
    %757 = vmatprep.subr.mxu0 0.0
    %758 = vmatpush1.msra.mxu0 0.0
    %759 = vmatprep.subr.mxu0 0.0
    %760 = vmatpush1.msra.mxu0 0.0
    %761 = vmatprep.subr.mxu0 0.0
    %762 = vmatpush1.msra.mxu0 0.0
    %763 = vmatprep.subr.mxu0 0.0
    %764 = vmatpush1.msra.mxu0 0.0
    %765 = vmatprep.subr.mxu0 0.0
    %766 = vmatpush1.msra.mxu0 0.0
    %767 = vmatprep.subr.mxu0 0.0
    %768 = vmatpush1.msra.mxu0 0.0
    %769 = vmatprep.subr.mxu0 0.0
    %770 = vmatpush1.msra.mxu0 0.0
    %771 = vmatprep.subr.mxu0 0.0
    %772 = vmatpush1.msra.mxu0 0.0
    %773 = vmatprep.subr.mxu0 0.0
    %774 = vmatpush1.msra.mxu0 0.0
    %775 = vmatprep.subr.mxu0 0.0
    %776 = vmatpush1.msra.mxu0 0.0
    %777 = vmatprep.subr.mxu0 0.0
    %778 = vmatpush1.msra.mxu0 0.0
    %779 = vmatprep.subr.mxu0 0.0
    %780 = vmatpush1.msra.mxu0 0.0
    %781 = vmatprep.subr.mxu0 0.0
    %782 = vmatpush1.msra.mxu0 0.0
    %783 = vmatprep.subr.mxu0 0.0
    %784 = vmatpush1.msra.mxu0 0.0
    %785 = vmatprep.subr.mxu0 0.0
    %786 = vmatpush1.msra.mxu0 0.0
    %787 = vmatprep.mubr.f32.mxu0 0.0
    %788 = vmatmul.mubr.f32.gmra.mrb[0].mxu0 %v721
    %v789 = vpop.f32.mrb[0].mxu0
    %v790 = vadd.f32 0.0, %v789
    %v791 = vpop.f32.mrb[0].mxu0
    %792 = vdwg.mxu0
    %v793 = vadd.f32 %v720, %v790
    %v794 = vxor.u32 %v719, 2147483648
    %v795 = vmul.f32 %v794, 1.442695
    %v796 = vpow.pop %v795
    %v797 = vadd.f32 %v796, 1.0
    %v798 = vrcp.pop %v797
    %v799 = vmul.f32 1.0, %v798
    %v800 = vtanh.pop %v719
    %v801 = vmul.f32 %v799, %v605
    %803 = vrot.lane.b32.xlu0 %v800, 96
    %v804 = vpop.permute.xlu0 %803
    %v806 = vmul.f32 %v799, %v804
    %808 = vrot.lane.b32.xlu0 %v806, 16
    %v809 = vpop.permute.xlu0 %808
    %v811 = vadd.f32 %v801, %v809
    %v812 = vtanh.pop %v811
    %814 = vrot.lane.b32.xlu0 %v812, 32
    %v815 = vpop.permute.xlu0 %814
    %v817 = vmul.f32 %v799, %v815
    %v818 = vxor.u32 %v793, 2147483648
    %v819 = vmul.f32 %v818, 1.442695
    %v820 = vpow.pop %v819
    %v821 = vadd.f32 %v820, 1.0
    %v822 = vrcp.pop %v821
    %v823 = vmul.f32 1.0, %v822
    %v824 = vtanh.pop %v793
    %v825 = vmul.f32 %v823, %v629
    %827 = vrot.lane.b32.xlu0 %v824, 96
    %v828 = vpop.permute.xlu0 %827
    %v830 = vmul.f32 %v823, %v828
    %832 = vrot.lane.b32.xlu0 %v830, 16
    %v833 = vpop.permute.xlu0 %832
    %v835 = vadd.f32 %v825, %v833
    %v836 = vtanh.pop %v835
    %838 = vrot.lane.b32.xlu0 %v836, 32
    %v839 = vpop.permute.xlu0 %838
    %v841 = vmul.f32 %v823, %v839
    %843 = vrot.lane.b32.xlu0 %v817, 80
    %v844 = vpop.permute.xlu0 %843
    %846 = vst.msk [vmem:[#allocation4 + $0x2] sm:$0x1] %vm433, %v844
    %848 = vrot.lane.b32.xlu0 %v841, 80
    %v849 = vpop.permute.xlu0 %848
    %851 = vst.msk [vmem:[#allocation5 + $0x5] sm:$0x1] %vm433, %v849
    %v852 = vld [vmem:[#allocation2 + $0x3] sm:$0x1]
    %v853 = vsel %vm59, %v844, 0
    %855 = vmatprep.subr.mxu0 0.0
    %856 = vmatpush1.msra.mxu0 %v215
    %857 = vmatprep.subr.mxu0 0.0
    %858 = vmatpush1.msra.mxu0 %v216
    %859 = vmatprep.subr.mxu0 0.0
    %860 = vmatpush1.msra.mxu0 0.0
    %861 = vmatprep.subr.mxu0 0.0
    %862 = vmatpush1.msra.mxu0 0.0
    %863 = vmatprep.subr.mxu0 0.0
    %864 = vmatpush1.msra.mxu0 0.0
    %865 = vmatprep.subr.mxu0 0.0
    %866 = vmatpush1.msra.mxu0 0.0
    %867 = vmatprep.subr.mxu0 0.0
    %868 = vmatpush1.msra.mxu0 0.0
    %869 = vmatprep.subr.mxu0 0.0
    %870 = vmatpush1.msra.mxu0 0.0
    %871 = vmatprep.subr.mxu0 0.0
    %872 = vmatpush1.msra.mxu0 0.0
    %873 = vmatprep.subr.mxu0 0.0
    %874 = vmatpush1.msra.mxu0 0.0
    %875 = vmatprep.subr.mxu0 0.0
    %876 = vmatpush1.msra.mxu0 0.0
    %877 = vmatprep.subr.mxu0 0.0
    %878 = vmatpush1.msra.mxu0 0.0
    %879 = vmatprep.subr.mxu0 0.0
    %880 = vmatpush1.msra.mxu0 0.0
    %881 = vmatprep.subr.mxu0 0.0
    %882 = vmatpush1.msra.mxu0 0.0
    %883 = vmatprep.subr.mxu0 0.0
    %884 = vmatpush1.msra.mxu0 0.0
    %885 = vmatprep.subr.mxu0 0.0
    %886 = vmatpush1.msra.mxu0 0.0
    %887 = vmatprep.subr.mxu0 0.0
    %888 = vmatpush1.msra.mxu0 0.0
    %889 = vmatprep.subr.mxu0 0.0
    %890 = vmatpush1.msra.mxu0 0.0
    %891 = vmatprep.subr.mxu0 0.0
    %892 = vmatpush1.msra.mxu0 0.0
    %893 = vmatprep.subr.mxu0 0.0
    %894 = vmatpush1.msra.mxu0 0.0
    %895 = vmatprep.subr.mxu0 0.0
    %896 = vmatpush1.msra.mxu0 0.0
    %897 = vmatprep.subr.mxu0 0.0
    %898 = vmatpush1.msra.mxu0 0.0
    %899 = vmatprep.subr.mxu0 0.0
    %900 = vmatpush1.msra.mxu0 0.0
    %901 = vmatprep.subr.mxu0 0.0
    %902 = vmatpush1.msra.mxu0 0.0
    %903 = vmatprep.subr.mxu0 0.0
    %904 = vmatpush1.msra.mxu0 0.0
    %905 = vmatprep.subr.mxu0 0.0
    %906 = vmatpush1.msra.mxu0 0.0
    %907 = vmatprep.subr.mxu0 0.0
    %908 = vmatpush1.msra.mxu0 0.0
    %909 = vmatprep.subr.mxu0 0.0
    %910 = vmatpush1.msra.mxu0 0.0
    %911 = vmatprep.subr.mxu0 0.0
    %912 = vmatpush1.msra.mxu0 0.0
    %913 = vmatprep.subr.mxu0 0.0
    %914 = vmatpush1.msra.mxu0 0.0
    %915 = vmatprep.subr.mxu0 0.0
    %916 = vmatpush1.msra.mxu0 0.0
    %917 = vmatprep.subr.mxu0 0.0
    %918 = vmatpush1.msra.mxu0 0.0
    %919 = vmatprep.mubr.f32.mxu0 0.0
    %920 = vmatmul.mubr.f32.gmra.mrb[0].mxu0 %v853
    %v921 = vpop.f32.mrb[0].mxu0
    %v922 = vadd.f32 0.0, %v921
    %v923 = vpop.f32.mrb[0].mxu0
    %924 = vdwg.mxu0
    %v925 = vadd.f32 %v852, %v922
    %v926 = vld [vmem:[#allocation3 + $0x4] sm:$0x1]
    %v927 = vsel %vm59, %v849, 0
    %929 = vmatprep.subr.mxu0 0.0
    %930 = vmatpush1.msra.mxu0 %v217
    %931 = vmatprep.subr.mxu0 0.0
    %932 = vmatpush1.msra.mxu0 %v218
    %933 = vmatprep.subr.mxu0 0.0
    %934 = vmatpush1.msra.mxu0 0.0
    %935 = vmatprep.subr.mxu0 0.0
    %936 = vmatpush1.msra.mxu0 0.0
    %937 = vmatprep.subr.mxu0 0.0
    %938 = vmatpush1.msra.mxu0 0.0
    %939 = vmatprep.subr.mxu0 0.0
    %940 = vmatpush1.msra.mxu0 0.0
    %941 = vmatprep.subr.mxu0 0.0
    %942 = vmatpush1.msra.mxu0 0.0
    %943 = vmatprep.subr.mxu0 0.0
    %944 = vmatpush1.msra.mxu0 0.0
    %945 = vmatprep.subr.mxu0 0.0
    %946 = vmatpush1.msra.mxu0 0.0
    %947 = vmatprep.subr.mxu0 0.0
    %948 = vmatpush1.msra.mxu0 0.0
    %949 = vmatprep.subr.mxu0 0.0
    %950 = vmatpush1.msra.mxu0 0.0
    %951 = vmatprep.subr.mxu0 0.0
    %952 = vmatpush1.msra.mxu0 0.0
    %953 = vmatprep.subr.mxu0 0.0
    %954 = vmatpush1.msra.mxu0 0.0
    %955 = vmatprep.subr.mxu0 0.0
    %956 = vmatpush1.msra.mxu0 0.0
    %957 = vmatprep.subr.mxu0 0.0
    %958 = vmatpush1.msra.mxu0 0.0
    %959 = vmatprep.subr.mxu0 0.0
    %960 = vmatpush1.msra.mxu0 0.0
    %961 = vmatprep.subr.mxu0 0.0
    %962 = vmatpush1.msra.mxu0 0.0
    %963 = vmatprep.subr.mxu0 0.0
    %964 = vmatpush1.msra.mxu0 0.0
    %965 = vmatprep.subr.mxu0 0.0
    %966 = vmatpush1.msra.mxu0 0.0
    %967 = vmatprep.subr.mxu0 0.0
    %968 = vmatpush1.msra.mxu0 0.0
    %969 = vmatprep.subr.mxu0 0.0
    %970 = vmatpush1.msra.mxu0 0.0
    %971 = vmatprep.subr.mxu0 0.0
    %972 = vmatpush1.msra.mxu0 0.0
    %973 = vmatprep.subr.mxu0 0.0
    %974 = vmatpush1.msra.mxu0 0.0
    %975 = vmatprep.subr.mxu0 0.0
    %976 = vmatpush1.msra.mxu0 0.0
    %977 = vmatprep.subr.mxu0 0.0
    %978 = vmatpush1.msra.mxu0 0.0
    %979 = vmatprep.subr.mxu0 0.0
    %980 = vmatpush1.msra.mxu0 0.0
    %981 = vmatprep.subr.mxu0 0.0
    %982 = vmatpush1.msra.mxu0 0.0
    %983 = vmatprep.subr.mxu0 0.0
    %984 = vmatpush1.msra.mxu0 0.0
    %985 = vmatprep.subr.mxu0 0.0
    %986 = vmatpush1.msra.mxu0 0.0
    %987 = vmatprep.subr.mxu0 0.0
    %988 = vmatpush1.msra.mxu0 0.0
    %989 = vmatprep.subr.mxu0 0.0
    %990 = vmatpush1.msra.mxu0 0.0
    %991 = vmatprep.subr.mxu0 0.0
    %992 = vmatpush1.msra.mxu0 0.0
    %993 = vmatprep.mubr.f32.mxu0 0.0
    %994 = vmatmul.mubr.f32.gmra.mrb[0].mxu0 %v927
    %v995 = vpop.f32.mrb[0].mxu0
    %v996 = vadd.f32 0.0, %v995
    %v997 = vpop.f32.mrb[0].mxu0
    %998 = vdwg.mxu0
    %v999 = vadd.f32 %v926, %v996
    %v1000 = vxor.u32 %v925, 2147483648
    %v1001 = vmul.f32 %v1000, 1.442695
    %v1002 = vpow.pop %v1001
    %v1003 = vadd.f32 %v1002, 1.0
    %v1004 = vrcp.pop %v1003
    %v1005 = vmul.f32 1.0, %v1004
    %v1006 = vtanh.pop %v925
    %v1007 = vmul.f32 %v1005, %v811
    %1009 = vrot.lane.b32.xlu0 %v1006, 96
    %v1010 = vpop.permute.xlu0 %1009
    %v1012 = vmul.f32 %v1005, %v1010
    %1014 = vrot.lane.b32.xlu0 %v1012, 16
    %v1015 = vpop.permute.xlu0 %1014
    %v1017 = vadd.f32 %v1007, %v1015
    %v1018 = vtanh.pop %v1017
    %1020 = vrot.lane.b32.xlu0 %v1018, 32
    %v1021 = vpop.permute.xlu0 %1020
    %v1023 = vmul.f32 %v1005, %v1021
    %v1024 = vxor.u32 %v999, 2147483648
    %v1025 = vmul.f32 %v1024, 1.442695
    %v1026 = vpow.pop %v1025
    %v1027 = vadd.f32 %v1026, 1.0
    %v1028 = vrcp.pop %v1027
    %v1029 = vmul.f32 1.0, %v1028
    %v1030 = vtanh.pop %v999
    %v1031 = vmul.f32 %v1029, %v835
    %1033 = vrot.lane.b32.xlu0 %v1030, 96
    %v1034 = vpop.permute.xlu0 %1033
    %v1036 = vmul.f32 %v1029, %v1034
    %1038 = vrot.lane.b32.xlu0 %v1036, 16
    %v1039 = vpop.permute.xlu0 %1038
    %v1041 = vadd.f32 %v1031, %v1039
    %v1042 = vtanh.pop %v1041
    %1044 = vrot.lane.b32.xlu0 %v1042, 32
    %v1045 = vpop.permute.xlu0 %1044
    %v1047 = vmul.f32 %v1029, %v1045
    %1049 = vrot.lane.b32.xlu0 %v1023, 80
    %v1050 = vpop.permute.xlu0 %1049
    %1052 = vst.msk [vmem:[#allocation4 + $0x3] sm:$0x1] %vm433, %v1050
    %1054 = vrot.lane.b32.xlu0 %v1047, 80
    %v1055 = vpop.permute.xlu0 %1054
    %1057 = vst.msk [vmem:[#allocation5 + $0x4] sm:$0x1] %vm433, %v1055
    %v1058 = vld [vmem:[#allocation2 + $0x4] sm:$0x1]
    %v1059 = vsel %vm59, %v1050, 0
    %1061 = vmatprep.subr.mxu0 0.0
    %1062 = vmatpush1.msra.mxu0 %v215
    %1063 = vmatprep.subr.mxu0 0.0
    %1064 = vmatpush1.msra.mxu0 %v216
    %1065 = vmatprep.subr.mxu0 0.0
    %1066 = vmatpush1.msra.mxu0 0.0
    %1067 = vmatprep.subr.mxu0 0.0
    %1068 = vmatpush1.msra.mxu0 0.0
    %1069 = vmatprep.subr.mxu0 0.0
    %1070 = vmatpush1.msra.mxu0 0.0
    %1071 = vmatprep.subr.mxu0 0.0
    %1072 = vmatpush1.msra.mxu0 0.0
    %1073 = vmatprep.subr.mxu0 0.0
    %1074 = vmatpush1.msra.mxu0 0.0
    %1075 = vmatprep.subr.mxu0 0.0
    %1076 = vmatpush1.msra.mxu0 0.0
    %1077 = vmatprep.subr.mxu0 0.0
    %1078 = vmatpush1.msra.mxu0 0.0
    %1079 = vmatprep.subr.mxu0 0.0
    %1080 = vmatpush1.msra.mxu0 0.0
    %1081 = vmatprep.subr.mxu0 0.0
    %1082 = vmatpush1.msra.mxu0 0.0
    %1083 = vmatprep.subr.mxu0 0.0
    %1084 = vmatpush1.msra.mxu0 0.0
    %1085 = vmatprep.subr.mxu0 0.0
    %1086 = vmatpush1.msra.mxu0 0.0
    %1087 = vmatprep.subr.mxu0 0.0
    %1088 = vmatpush1.msra.mxu0 0.0
    %1089 = vmatprep.subr.mxu0 0.0
    %1090 = vmatpush1.msra.mxu0 0.0
    %1091 = vmatprep.subr.mxu0 0.0
    %1092 = vmatpush1.msra.mxu0 0.0
    %1093 = vmatprep.subr.mxu0 0.0
    %1094 = vmatpush1.msra.mxu0 0.0
    %1095 = vmatprep.subr.mxu0 0.0
    %1096 = vmatpush1.msra.mxu0 0.0
    %1097 = vmatprep.subr.mxu0 0.0
    %1098 = vmatpush1.msra.mxu0 0.0
    %1099 = vmatprep.subr.mxu0 0.0
    %1100 = vmatpush1.msra.mxu0 0.0
    %1101 = vmatprep.subr.mxu0 0.0
    %1102 = vmatpush1.msra.mxu0 0.0
    %1103 = vmatprep.subr.mxu0 0.0
    %1104 = vmatpush1.msra.mxu0 0.0
    %1105 = vmatprep.subr.mxu0 0.0
    %1106 = vmatpush1.msra.mxu0 0.0
    %1107 = vmatprep.subr.mxu0 0.0
    %1108 = vmatpush1.msra.mxu0 0.0
    %1109 = vmatprep.subr.mxu0 0.0
    %1110 = vmatpush1.msra.mxu0 0.0
    %1111 = vmatprep.subr.mxu0 0.0
    %1112 = vmatpush1.msra.mxu0 0.0
    %1113 = vmatprep.subr.mxu0 0.0
    %1114 = vmatpush1.msra.mxu0 0.0
    %1115 = vmatprep.subr.mxu0 0.0
    %1116 = vmatpush1.msra.mxu0 0.0
    %1117 = vmatprep.subr.mxu0 0.0
    %1118 = vmatpush1.msra.mxu0 0.0
    %1119 = vmatprep.subr.mxu0 0.0
    %1120 = vmatpush1.msra.mxu0 0.0
    %1121 = vmatprep.subr.mxu0 0.0
    %1122 = vmatpush1.msra.mxu0 0.0
    %1123 = vmatprep.subr.mxu0 0.0
    %1124 = vmatpush1.msra.mxu0 0.0
    %1125 = vmatprep.mubr.f32.mxu0 0.0
    %1126 = vmatmul.mubr.f32.gmra.mrb[0].mxu0 %v1059
    %v1127 = vpop.f32.mrb[0].mxu0
    %v1128 = vadd.f32 0.0, %v1127
    %v1129 = vpop.f32.mrb[0].mxu0
    %1130 = vdwg.mxu0
    %v1131 = vadd.f32 %v1058, %v1128
    %v1132 = vld [vmem:[#allocation3 + $0x3] sm:$0x1]
    %v1133 = vsel %vm59, %v1055, 0
    %1135 = vmatprep.subr.mxu0 0.0
    %1136 = vmatpush1.msra.mxu0 %v217
    %1137 = vmatprep.subr.mxu0 0.0
    %1138 = vmatpush1.msra.mxu0 %v218
    %1139 = vmatprep.subr.mxu0 0.0
    %1140 = vmatpush1.msra.mxu0 0.0
    %1141 = vmatprep.subr.mxu0 0.0
    %1142 = vmatpush1.msra.mxu0 0.0
    %1143 = vmatprep.subr.mxu0 0.0
    %1144 = vmatpush1.msra.mxu0 0.0
    %1145 = vmatprep.subr.mxu0 0.0
    %1146 = vmatpush1.msra.mxu0 0.0
    %1147 = vmatprep.subr.mxu0 0.0
    %1148 = vmatpush1.msra.mxu0 0.0
    %1149 = vmatprep.subr.mxu0 0.0
    %1150 = vmatpush1.msra.mxu0 0.0
    %1151 = vmatprep.subr.mxu0 0.0
    %1152 = vmatpush1.msra.mxu0 0.0
    %1153 = vmatprep.subr.mxu0 0.0
    %1154 = vmatpush1.msra.mxu0 0.0
    %1155 = vmatprep.subr.mxu0 0.0
    %1156 = vmatpush1.msra.mxu0 0.0
    %1157 = vmatprep.subr.mxu0 0.0
    %1158 = vmatpush1.msra.mxu0 0.0
    %1159 = vmatprep.subr.mxu0 0.0
    %1160 = vmatpush1.msra.mxu0 0.0
    %1161 = vmatprep.subr.mxu0 0.0
    %1162 = vmatpush1.msra.mxu0 0.0
    %1163 = vmatprep.subr.mxu0 0.0
    %1164 = vmatpush1.msra.mxu0 0.0
    %1165 = vmatprep.subr.mxu0 0.0
    %1166 = vmatpush1.msra.mxu0 0.0
    %1167 = vmatprep.subr.mxu0 0.0
    %1168 = vmatpush1.msra.mxu0 0.0
    %1169 = vmatprep.subr.mxu0 0.0
    %1170 = vmatpush1.msra.mxu0 0.0
    %1171 = vmatprep.subr.mxu0 0.0
    %1172 = vmatpush1.msra.mxu0 0.0
    %1173 = vmatprep.subr.mxu0 0.0
    %1174 = vmatpush1.msra.mxu0 0.0
    %1175 = vmatprep.subr.mxu0 0.0
    %1176 = vmatpush1.msra.mxu0 0.0
    %1177 = vmatprep.subr.mxu0 0.0
    %1178 = vmatpush1.msra.mxu0 0.0
    %1179 = vmatprep.subr.mxu0 0.0
    %1180 = vmatpush1.msra.mxu0 0.0
    %1181 = vmatprep.subr.mxu0 0.0
    %1182 = vmatpush1.msra.mxu0 0.0
    %1183 = vmatprep.subr.mxu0 0.0
    %1184 = vmatpush1.msra.mxu0 0.0
    %1185 = vmatprep.subr.mxu0 0.0
    %1186 = vmatpush1.msra.mxu0 0.0
    %1187 = vmatprep.subr.mxu0 0.0
    %1188 = vmatpush1.msra.mxu0 0.0
    %1189 = vmatprep.subr.mxu0 0.0
    %1190 = vmatpush1.msra.mxu0 0.0
    %1191 = vmatprep.subr.mxu0 0.0
    %1192 = vmatpush1.msra.mxu0 0.0
    %1193 = vmatprep.subr.mxu0 0.0
    %1194 = vmatpush1.msra.mxu0 0.0
    %1195 = vmatprep.subr.mxu0 0.0
    %1196 = vmatpush1.msra.mxu0 0.0
    %1197 = vmatprep.subr.mxu0 0.0
    %1198 = vmatpush1.msra.mxu0 0.0
    %1199 = vmatprep.mubr.f32.mxu0 0.0
    %1200 = vmatmul.mubr.f32.gmra.mrb[0].mxu0 %v1133
    %v1201 = vpop.f32.mrb[0].mxu0
    %v1202 = vadd.f32 0.0, %v1201
    %v1203 = vpop.f32.mrb[0].mxu0
    %1204 = vdwg.mxu0
    %v1205 = vadd.f32 %v1132, %v1202
    %v1206 = vxor.u32 %v1131, 2147483648
    %v1207 = vmul.f32 %v1206, 1.442695
    %v1208 = vpow.pop %v1207
    %v1209 = vadd.f32 %v1208, 1.0
    %v1210 = vrcp.pop %v1209
    %v1211 = vmul.f32 1.0, %v1210
    %v1212 = vtanh.pop %v1131
    %v1213 = vmul.f32 %v1211, %v1017
    %1215 = vrot.lane.b32.xlu0 %v1212, 96
    %v1216 = vpop.permute.xlu0 %1215
    %v1218 = vmul.f32 %v1211, %v1216
    %1220 = vrot.lane.b32.xlu0 %v1218, 16
    %v1221 = vpop.permute.xlu0 %1220
    %v1223 = vadd.f32 %v1213, %v1221
    %v1224 = vtanh.pop %v1223
    %1226 = vrot.lane.b32.xlu0 %v1224, 32
    %v1227 = vpop.permute.xlu0 %1226
    %v1229 = vmul.f32 %v1211, %v1227
    %v1230 = vxor.u32 %v1205, 2147483648
    %v1231 = vmul.f32 %v1230, 1.442695
    %v1232 = vpow.pop %v1231
    %v1233 = vadd.f32 %v1232, 1.0
    %v1234 = vrcp.pop %v1233
    %v1235 = vmul.f32 1.0, %v1234
    %v1236 = vtanh.pop %v1205
    %v1237 = vmul.f32 %v1235, %v1041
    %1239 = vrot.lane.b32.xlu0 %v1236, 96
    %v1240 = vpop.permute.xlu0 %1239
    %v1242 = vmul.f32 %v1235, %v1240
    %1244 = vrot.lane.b32.xlu0 %v1242, 16
    %v1245 = vpop.permute.xlu0 %1244
    %v1247 = vadd.f32 %v1237, %v1245
    %v1248 = vtanh.pop %v1247
    %1250 = vrot.lane.b32.xlu0 %v1248, 32
    %v1251 = vpop.permute.xlu0 %1250
    %v1253 = vmul.f32 %v1235, %v1251
    %1255 = vrot.lane.b32.xlu0 %v1229, 80
    %v1256 = vpop.permute.xlu0 %1255
    %1258 = vst.msk [vmem:[#allocation4 + $0x4] sm:$0x1] %vm433, %v1256
    %1260 = vrot.lane.b32.xlu0 %v1253, 80
    %v1261 = vpop.permute.xlu0 %1260
    %1263 = vst.msk [vmem:[#allocation5 + $0x3] sm:$0x1] %vm433, %v1261
    %v1264 = vld [vmem:[#allocation2 + $0x5] sm:$0x1]
    %v1265 = vsel %vm59, %v1256, 0
    %1267 = vmatprep.subr.mxu0 0.0
    %1268 = vmatpush1.msra.mxu0 %v215
    %1269 = vmatprep.subr.mxu0 0.0
    %1270 = vmatpush1.msra.mxu0 %v216
    %1271 = vmatprep.subr.mxu0 0.0
    %1272 = vmatpush1.msra.mxu0 0.0
    %1273 = vmatprep.subr.mxu0 0.0
    %1274 = vmatpush1.msra.mxu0 0.0
    %1275 = vmatprep.subr.mxu0 0.0
    %1276 = vmatpush1.msra.mxu0 0.0
    %1277 = vmatprep.subr.mxu0 0.0
    %1278 = vmatpush1.msra.mxu0 0.0
    %1279 = vmatprep.subr.mxu0 0.0
    %1280 = vmatpush1.msra.mxu0 0.0
    %1281 = vmatprep.subr.mxu0 0.0
    %1282 = vmatpush1.msra.mxu0 0.0
    %1283 = vmatprep.subr.mxu0 0.0
    %1284 = vmatpush1.msra.mxu0 0.0
    %1285 = vmatprep.subr.mxu0 0.0
    %1286 = vmatpush1.msra.mxu0 0.0
    %1287 = vmatprep.subr.mxu0 0.0
    %1288 = vmatpush1.msra.mxu0 0.0
    %1289 = vmatprep.subr.mxu0 0.0
    %1290 = vmatpush1.msra.mxu0 0.0
    %1291 = vmatprep.subr.mxu0 0.0
    %1292 = vmatpush1.msra.mxu0 0.0
    %1293 = vmatprep.subr.mxu0 0.0
    %1294 = vmatpush1.msra.mxu0 0.0
    %1295 = vmatprep.subr.mxu0 0.0
    %1296 = vmatpush1.msra.mxu0 0.0
    %1297 = vmatprep.subr.mxu0 0.0
    %1298 = vmatpush1.msra.mxu0 0.0
    %1299 = vmatprep.subr.mxu0 0.0
    %1300 = vmatpush1.msra.mxu0 0.0
    %1301 = vmatprep.subr.mxu0 0.0
    %1302 = vmatpush1.msra.mxu0 0.0
    %1303 = vmatprep.subr.mxu0 0.0
    %1304 = vmatpush1.msra.mxu0 0.0
    %1305 = vmatprep.subr.mxu0 0.0
    %1306 = vmatpush1.msra.mxu0 0.0
    %1307 = vmatprep.subr.mxu0 0.0
    %1308 = vmatpush1.msra.mxu0 0.0
    %1309 = vmatprep.subr.mxu0 0.0
    %1310 = vmatpush1.msra.mxu0 0.0
    %1311 = vmatprep.subr.mxu0 0.0
    %1312 = vmatpush1.msra.mxu0 0.0
    %1313 = vmatprep.subr.mxu0 0.0
    %1314 = vmatpush1.msra.mxu0 0.0
    %1315 = vmatprep.subr.mxu0 0.0
    %1316 = vmatpush1.msra.mxu0 0.0
    %1317 = vmatprep.subr.mxu0 0.0
    %1318 = vmatpush1.msra.mxu0 0.0
    %1319 = vmatprep.subr.mxu0 0.0
    %1320 = vmatpush1.msra.mxu0 0.0
    %1321 = vmatprep.subr.mxu0 0.0
    %1322 = vmatpush1.msra.mxu0 0.0
    %1323 = vmatprep.subr.mxu0 0.0
    %1324 = vmatpush1.msra.mxu0 0.0
    %1325 = vmatprep.subr.mxu0 0.0
    %1326 = vmatpush1.msra.mxu0 0.0
    %1327 = vmatprep.subr.mxu0 0.0
    %1328 = vmatpush1.msra.mxu0 0.0
    %1329 = vmatprep.subr.mxu0 0.0
    %1330 = vmatpush1.msra.mxu0 0.0
    %1331 = vmatprep.mubr.f32.mxu0 0.0
    %1332 = vmatmul.mubr.f32.gmra.mrb[0].mxu0 %v1265
    %v1333 = vpop.f32.mrb[0].mxu0
    %v1334 = vadd.f32 0.0, %v1333
    %v1335 = vpop.f32.mrb[0].mxu0
    %1336 = vdwg.mxu0
    %v1337 = vadd.f32 %v1264, %v1334
    %v1338 = vld [vmem:[#allocation3 + $0x2] sm:$0x1]
    %v1339 = vsel %vm59, %v1261, 0
    %1341 = vmatprep.subr.mxu0 0.0
    %1342 = vmatpush1.msra.mxu0 %v217
    %1343 = vmatprep.subr.mxu0 0.0
    %1344 = vmatpush1.msra.mxu0 %v218
    %1345 = vmatprep.subr.mxu0 0.0
    %1346 = vmatpush1.msra.mxu0 0.0
    %1347 = vmatprep.subr.mxu0 0.0
    %1348 = vmatpush1.msra.mxu0 0.0
    %1349 = vmatprep.subr.mxu0 0.0
    %1350 = vmatpush1.msra.mxu0 0.0
    %1351 = vmatprep.subr.mxu0 0.0
    %1352 = vmatpush1.msra.mxu0 0.0
    %1353 = vmatprep.subr.mxu0 0.0
    %1354 = vmatpush1.msra.mxu0 0.0
    %1355 = vmatprep.subr.mxu0 0.0
    %1356 = vmatpush1.msra.mxu0 0.0
    %1357 = vmatprep.subr.mxu0 0.0
    %1358 = vmatpush1.msra.mxu0 0.0
    %1359 = vmatprep.subr.mxu0 0.0
    %1360 = vmatpush1.msra.mxu0 0.0
    %1361 = vmatprep.subr.mxu0 0.0
    %1362 = vmatpush1.msra.mxu0 0.0
    %1363 = vmatprep.subr.mxu0 0.0
    %1364 = vmatpush1.msra.mxu0 0.0
    %1365 = vmatprep.subr.mxu0 0.0
    %1366 = vmatpush1.msra.mxu0 0.0
    %1367 = vmatprep.subr.mxu0 0.0
    %1368 = vmatpush1.msra.mxu0 0.0
    %1369 = vmatprep.subr.mxu0 0.0
    %1370 = vmatpush1.msra.mxu0 0.0
    %1371 = vmatprep.subr.mxu0 0.0
    %1372 = vmatpush1.msra.mxu0 0.0
    %1373 = vmatprep.subr.mxu0 0.0
    %1374 = vmatpush1.msra.mxu0 0.0
    %1375 = vmatprep.subr.mxu0 0.0
    %1376 = vmatpush1.msra.mxu0 0.0
    %1377 = vmatprep.subr.mxu0 0.0
    %1378 = vmatpush1.msra.mxu0 0.0
    %1379 = vmatprep.subr.mxu0 0.0
    %1380 = vmatpush1.msra.mxu0 0.0
    %1381 = vmatprep.subr.mxu0 0.0
    %1382 = vmatpush1.msra.mxu0 0.0
    %1383 = vmatprep.subr.mxu0 0.0
    %1384 = vmatpush1.msra.mxu0 0.0
    %1385 = vmatprep.subr.mxu0 0.0
    %1386 = vmatpush1.msra.mxu0 0.0
    %1387 = vmatprep.subr.mxu0 0.0
    %1388 = vmatpush1.msra.mxu0 0.0
    %1389 = vmatprep.subr.mxu0 0.0
    %1390 = vmatpush1.msra.mxu0 0.0
    %1391 = vmatprep.subr.mxu0 0.0
    %1392 = vmatpush1.msra.mxu0 0.0
    %1393 = vmatprep.subr.mxu0 0.0
    %1394 = vmatpush1.msra.mxu0 0.0
    %1395 = vmatprep.subr.mxu0 0.0
    %1396 = vmatpush1.msra.mxu0 0.0
    %1397 = vmatprep.subr.mxu0 0.0
    %1398 = vmatpush1.msra.mxu0 0.0
    %1399 = vmatprep.subr.mxu0 0.0
    %1400 = vmatpush1.msra.mxu0 0.0
    %1401 = vmatprep.subr.mxu0 0.0
    %1402 = vmatpush1.msra.mxu0 0.0
    %1403 = vmatprep.subr.mxu0 0.0
    %1404 = vmatpush1.msra.mxu0 0.0
    %1405 = vmatprep.mubr.f32.mxu0 0.0
    %1406 = vmatmul.mubr.f32.gmra.mrb[0].mxu0 %v1339
    %v1407 = vpop.f32.mrb[0].mxu0
    %v1408 = vadd.f32 0.0, %v1407
    %v1409 = vpop.f32.mrb[0].mxu0
    %1410 = vdwg.mxu0
    %v1411 = vadd.f32 %v1338, %v1408
    %v1412 = vxor.u32 %v1337, 2147483648
    %v1413 = vmul.f32 %v1412, 1.442695
    %v1414 = vpow.pop %v1413
    %v1415 = vadd.f32 %v1414, 1.0
    %v1416 = vrcp.pop %v1415
    %v1417 = vmul.f32 1.0, %v1416
    %v1418 = vtanh.pop %v1337
    %v1419 = vmul.f32 %v1417, %v1223
    %1421 = vrot.lane.b32.xlu0 %v1418, 96
    %v1422 = vpop.permute.xlu0 %1421
    %v1424 = vmul.f32 %v1417, %v1422
    %1426 = vrot.lane.b32.xlu0 %v1424, 16
    %v1427 = vpop.permute.xlu0 %1426
    %v1429 = vadd.f32 %v1419, %v1427
    %v1430 = vtanh.pop %v1429
    %1432 = vrot.lane.b32.xlu0 %v1430, 32
    %v1433 = vpop.permute.xlu0 %1432
    %v1435 = vmul.f32 %v1417, %v1433
    %v1436 = vxor.u32 %v1411, 2147483648
    %v1437 = vmul.f32 %v1436, 1.442695
    %v1438 = vpow.pop %v1437
    %v1439 = vadd.f32 %v1438, 1.0
    %v1440 = vrcp.pop %v1439
    %v1441 = vmul.f32 1.0, %v1440
    %v1442 = vtanh.pop %v1411
    %v1443 = vmul.f32 %v1441, %v1247
    %1445 = vrot.lane.b32.xlu0 %v1442, 96
    %v1446 = vpop.permute.xlu0 %1445
    %v1448 = vmul.f32 %v1441, %v1446
    %1450 = vrot.lane.b32.xlu0 %v1448, 16
    %v1451 = vpop.permute.xlu0 %1450
    %v1453 = vadd.f32 %v1443, %v1451
    %v1454 = vtanh.pop %v1453
    %1456 = vrot.lane.b32.xlu0 %v1454, 32
    %v1457 = vpop.permute.xlu0 %1456
    %v1459 = vmul.f32 %v1441, %v1457
    %1461 = vrot.lane.b32.xlu0 %v1435, 80
    %v1462 = vpop.permute.xlu0 %1461
    %1464 = vst.msk [vmem:[#allocation4 + $0x5] sm:$0x1] %vm433, %v1462
    %1466 = vrot.lane.b32.xlu0 %v1459, 80
    %v1467 = vpop.permute.xlu0 %1466
    %1469 = vst.msk [vmem:[#allocation5 + $0x2] sm:$0x1] %vm433, %v1467
    %v1470 = vld [vmem:[#allocation2 + $0x6] sm:$0x1]
    %v1471 = vsel %vm59, %v1462, 0
    %1473 = vmatprep.subr.mxu0 0.0
    %1474 = vmatpush1.msra.mxu0 %v215
    %1475 = vmatprep.subr.mxu0 0.0
    %1476 = vmatpush1.msra.mxu0 %v216
    %1477 = vmatprep.subr.mxu0 0.0
    %1478 = vmatpush1.msra.mxu0 0.0
    %1479 = vmatprep.subr.mxu0 0.0
    %1480 = vmatpush1.msra.mxu0 0.0
    %1481 = vmatprep.subr.mxu0 0.0
    %1482 = vmatpush1.msra.mxu0 0.0
    %1483 = vmatprep.subr.mxu0 0.0
    %1484 = vmatpush1.msra.mxu0 0.0
    %1485 = vmatprep.subr.mxu0 0.0
    %1486 = vmatpush1.msra.mxu0 0.0
    %1487 = vmatprep.subr.mxu0 0.0
    %1488 = vmatpush1.msra.mxu0 0.0
    %1489 = vmatprep.subr.mxu0 0.0
    %1490 = vmatpush1.msra.mxu0 0.0
    %1491 = vmatprep.subr.mxu0 0.0
    %1492 = vmatpush1.msra.mxu0 0.0
    %1493 = vmatprep.subr.mxu0 0.0
    %1494 = vmatpush1.msra.mxu0 0.0
    %1495 = vmatprep.subr.mxu0 0.0
    %1496 = vmatpush1.msra.mxu0 0.0
    %1497 = vmatprep.subr.mxu0 0.0
    %1498 = vmatpush1.msra.mxu0 0.0
    %1499 = vmatprep.subr.mxu0 0.0
    %1500 = vmatpush1.msra.mxu0 0.0
    %1501 = vmatprep.subr.mxu0 0.0
    %1502 = vmatpush1.msra.mxu0 0.0
    %1503 = vmatprep.subr.mxu0 0.0
    %1504 = vmatpush1.msra.mxu0 0.0
    %1505 = vmatprep.subr.mxu0 0.0
    %1506 = vmatpush1.msra.mxu0 0.0
    %1507 = vmatprep.subr.mxu0 0.0
    %1508 = vmatpush1.msra.mxu0 0.0
    %1509 = vmatprep.subr.mxu0 0.0
    %1510 = vmatpush1.msra.mxu0 0.0
    %1511 = vmatprep.subr.mxu0 0.0
    %1512 = vmatpush1.msra.mxu0 0.0
    %1513 = vmatprep.subr.mxu0 0.0
    %1514 = vmatpush1.msra.mxu0 0.0
    %1515 = vmatprep.subr.mxu0 0.0
    %1516 = vmatpush1.msra.mxu0 0.0
    %1517 = vmatprep.subr.mxu0 0.0
    %1518 = vmatpush1.msra.mxu0 0.0
    %1519 = vmatprep.subr.mxu0 0.0
    %1520 = vmatpush1.msra.mxu0 0.0
    %1521 = vmatprep.subr.mxu0 0.0
    %1522 = vmatpush1.msra.mxu0 0.0
    %1523 = vmatprep.subr.mxu0 0.0
    %1524 = vmatpush1.msra.mxu0 0.0
    %1525 = vmatprep.subr.mxu0 0.0
    %1526 = vmatpush1.msra.mxu0 0.0
    %1527 = vmatprep.subr.mxu0 0.0
    %1528 = vmatpush1.msra.mxu0 0.0
    %1529 = vmatprep.subr.mxu0 0.0
    %1530 = vmatpush1.msra.mxu0 0.0
    %1531 = vmatprep.subr.mxu0 0.0
    %1532 = vmatpush1.msra.mxu0 0.0
    %1533 = vmatprep.subr.mxu0 0.0
    %1534 = vmatpush1.msra.mxu0 0.0
    %1535 = vmatprep.subr.mxu0 0.0
    %1536 = vmatpush1.msra.mxu0 0.0
    %1537 = vmatprep.mubr.f32.mxu0 0.0
    %1538 = vmatmul.mubr.f32.gmra.mrb[0].mxu0 %v1471
    %v1539 = vpop.f32.mrb[0].mxu0
    %v1540 = vadd.f32 0.0, %v1539
    %v1541 = vpop.f32.mrb[0].mxu0
    %1542 = vdwg.mxu0
    %v1543 = vadd.f32 %v1470, %v1540
    %v1544 = vld [vmem:[#allocation3 + $0x1] sm:$0x1]
    %v1545 = vsel %vm59, %v1467, 0
    %1547 = vmatprep.subr.mxu0 0.0
    %1548 = vmatpush1.msra.mxu0 %v217
    %1549 = vmatprep.subr.mxu0 0.0
    %1550 = vmatpush1.msra.mxu0 %v218
    %1551 = vmatprep.subr.mxu0 0.0
    %1552 = vmatpush1.msra.mxu0 0.0
    %1553 = vmatprep.subr.mxu0 0.0
    %1554 = vmatpush1.msra.mxu0 0.0
    %1555 = vmatprep.subr.mxu0 0.0
    %1556 = vmatpush1.msra.mxu0 0.0
    %1557 = vmatprep.subr.mxu0 0.0
    %1558 = vmatpush1.msra.mxu0 0.0
    %1559 = vmatprep.subr.mxu0 0.0
    %1560 = vmatpush1.msra.mxu0 0.0
    %1561 = vmatprep.subr.mxu0 0.0
    %1562 = vmatpush1.msra.mxu0 0.0
    %1563 = vmatprep.subr.mxu0 0.0
    %1564 = vmatpush1.msra.mxu0 0.0
    %1565 = vmatprep.subr.mxu0 0.0
    %1566 = vmatpush1.msra.mxu0 0.0
    %1567 = vmatprep.subr.mxu0 0.0
    %1568 = vmatpush1.msra.mxu0 0.0
    %1569 = vmatprep.subr.mxu0 0.0
    %1570 = vmatpush1.msra.mxu0 0.0
    %1571 = vmatprep.subr.mxu0 0.0
    %1572 = vmatpush1.msra.mxu0 0.0
    %1573 = vmatprep.subr.mxu0 0.0
    %1574 = vmatpush1.msra.mxu0 0.0
    %1575 = vmatprep.subr.mxu0 0.0
    %1576 = vmatpush1.msra.mxu0 0.0
    %1577 = vmatprep.subr.mxu0 0.0
    %1578 = vmatpush1.msra.mxu0 0.0
    %1579 = vmatprep.subr.mxu0 0.0
    %1580 = vmatpush1.msra.mxu0 0.0
    %1581 = vmatprep.subr.mxu0 0.0
    %1582 = vmatpush1.msra.mxu0 0.0
    %1583 = vmatprep.subr.mxu0 0.0
    %1584 = vmatpush1.msra.mxu0 0.0
    %1585 = vmatprep.subr.mxu0 0.0
    %1586 = vmatpush1.msra.mxu0 0.0
    %1587 = vmatprep.subr.mxu0 0.0
    %1588 = vmatpush1.msra.mxu0 0.0
    %1589 = vmatprep.subr.mxu0 0.0
    %1590 = vmatpush1.msra.mxu0 0.0
    %1591 = vmatprep.subr.mxu0 0.0
    %1592 = vmatpush1.msra.mxu0 0.0
    %1593 = vmatprep.subr.mxu0 0.0
    %1594 = vmatpush1.msra.mxu0 0.0
    %1595 = vmatprep.subr.mxu0 0.0
    %1596 = vmatpush1.msra.mxu0 0.0
    %1597 = vmatprep.subr.mxu0 0.0
    %1598 = vmatpush1.msra.mxu0 0.0
    %1599 = vmatprep.subr.mxu0 0.0
    %1600 = vmatpush1.msra.mxu0 0.0
    %1601 = vmatprep.subr.mxu0 0.0
    %1602 = vmatpush1.msra.mxu0 0.0
    %1603 = vmatprep.subr.mxu0 0.0
    %1604 = vmatpush1.msra.mxu0 0.0
    %1605 = vmatprep.subr.mxu0 0.0
    %1606 = vmatpush1.msra.mxu0 0.0
    %1607 = vmatprep.subr.mxu0 0.0
    %1608 = vmatpush1.msra.mxu0 0.0
    %1609 = vmatprep.subr.mxu0 0.0
    %1610 = vmatpush1.msra.mxu0 0.0
    %1611 = vmatprep.mubr.f32.mxu0 0.0
    %1612 = vmatmul.mubr.f32.gmra.mrb[0].mxu0 %v1545
    %v1613 = vpop.f32.mrb[0].mxu0
    %v1614 = vadd.f32 0.0, %v1613
    %v1615 = vpop.f32.mrb[0].mxu0
    %1616 = vdwg.mxu0
    %v1617 = vadd.f32 %v1544, %v1614
    %v1618 = vxor.u32 %v1543, 2147483648
    %v1619 = vmul.f32 %v1618, 1.442695
    %v1620 = vpow.pop %v1619
    %v1621 = vadd.f32 %v1620, 1.0
    %v1622 = vrcp.pop %v1621
    %v1623 = vmul.f32 1.0, %v1622
    %v1624 = vtanh.pop %v1543
    %v1625 = vmul.f32 %v1623, %v1429
    %1627 = vrot.lane.b32.xlu0 %v1624, 96
    %v1628 = vpop.permute.xlu0 %1627
    %v1630 = vmul.f32 %v1623, %v1628
    %1632 = vrot.lane.b32.xlu0 %v1630, 16
    %v1633 = vpop.permute.xlu0 %1632
    %v1635 = vadd.f32 %v1625, %v1633
    %v1636 = vtanh.pop %v1635
    %1638 = vrot.lane.b32.xlu0 %v1636, 32
    %v1639 = vpop.permute.xlu0 %1638
    %v1641 = vmul.f32 %v1623, %v1639
    %v1642 = vxor.u32 %v1617, 2147483648
    %v1643 = vmul.f32 %v1642, 1.442695
    %v1644 = vpow.pop %v1643
    %v1645 = vadd.f32 %v1644, 1.0
    %v1646 = vrcp.pop %v1645
    %v1647 = vmul.f32 1.0, %v1646
    %v1648 = vtanh.pop %v1617
    %v1649 = vmul.f32 %v1647, %v1453
    %1651 = vrot.lane.b32.xlu0 %v1648, 96
    %v1652 = vpop.permute.xlu0 %1651
    %v1654 = vmul.f32 %v1647, %v1652
    %1656 = vrot.lane.b32.xlu0 %v1654, 16
    %v1657 = vpop.permute.xlu0 %1656
    %v1659 = vadd.f32 %v1649, %v1657
    %v1660 = vtanh.pop %v1659
    %1662 = vrot.lane.b32.xlu0 %v1660, 32
    %v1663 = vpop.permute.xlu0 %1662
    %v1665 = vmul.f32 %v1647, %v1663
    %1667 = vrot.lane.b32.xlu0 %v1641, 80
    %v1668 = vpop.permute.xlu0 %1667
    %1670 = vst.msk [vmem:[#allocation4 + $0x6] sm:$0x1] %vm433, %v1668
    %1672 = vrot.lane.b32.xlu0 %v1665, 80
    %v1673 = vpop.permute.xlu0 %1672
    %1675 = vst.msk [vmem:[#allocation5 + $0x1] sm:$0x1] %vm433, %v1673
    %v1676 = vld [vmem:[#allocation2 + $0x7] sm:$0x1]
    %v1677 = vsel %vm59, %v1668, 0
    %1679 = vmatprep.subr.mxu0 0.0
    %1680 = vmatpush1.msra.mxu0 %v215
    %1681 = vmatprep.subr.mxu0 0.0
    %1682 = vmatpush1.msra.mxu0 %v216
    %1683 = vmatprep.subr.mxu0 0.0
    %1684 = vmatpush1.msra.mxu0 0.0
    %1685 = vmatprep.subr.mxu0 0.0
    %1686 = vmatpush1.msra.mxu0 0.0
    %1687 = vmatprep.subr.mxu0 0.0
    %1688 = vmatpush1.msra.mxu0 0.0
    %1689 = vmatprep.subr.mxu0 0.0
    %1690 = vmatpush1.msra.mxu0 0.0
    %1691 = vmatprep.subr.mxu0 0.0
    %1692 = vmatpush1.msra.mxu0 0.0
    %1693 = vmatprep.subr.mxu0 0.0
    %1694 = vmatpush1.msra.mxu0 0.0
    %1695 = vmatprep.subr.mxu0 0.0
    %1696 = vmatpush1.msra.mxu0 0.0
    %1697 = vmatprep.subr.mxu0 0.0
    %1698 = vmatpush1.msra.mxu0 0.0
    %1699 = vmatprep.subr.mxu0 0.0
    %1700 = vmatpush1.msra.mxu0 0.0
    %1701 = vmatprep.subr.mxu0 0.0
    %1702 = vmatpush1.msra.mxu0 0.0
    %1703 = vmatprep.subr.mxu0 0.0
    %1704 = vmatpush1.msra.mxu0 0.0
    %1705 = vmatprep.subr.mxu0 0.0
    %1706 = vmatpush1.msra.mxu0 0.0
    %1707 = vmatprep.subr.mxu0 0.0
    %1708 = vmatpush1.msra.mxu0 0.0
    %1709 = vmatprep.subr.mxu0 0.0
    %1710 = vmatpush1.msra.mxu0 0.0
    %1711 = vmatprep.subr.mxu0 0.0
    %1712 = vmatpush1.msra.mxu0 0.0
    %1713 = vmatprep.subr.mxu0 0.0
    %1714 = vmatpush1.msra.mxu0 0.0
    %1715 = vmatprep.subr.mxu0 0.0
    %1716 = vmatpush1.msra.mxu0 0.0
    %1717 = vmatprep.subr.mxu0 0.0
    %1718 = vmatpush1.msra.mxu0 0.0
    %1719 = vmatprep.subr.mxu0 0.0
    %1720 = vmatpush1.msra.mxu0 0.0
    %1721 = vmatprep.subr.mxu0 0.0
    %1722 = vmatpush1.msra.mxu0 0.0
    %1723 = vmatprep.subr.mxu0 0.0
    %1724 = vmatpush1.msra.mxu0 0.0
    %1725 = vmatprep.subr.mxu0 0.0
    %1726 = vmatpush1.msra.mxu0 0.0
    %1727 = vmatprep.subr.mxu0 0.0
    %1728 = vmatpush1.msra.mxu0 0.0
    %1729 = vmatprep.subr.mxu0 0.0
    %1730 = vmatpush1.msra.mxu0 0.0
    %1731 = vmatprep.subr.mxu0 0.0
    %1732 = vmatpush1.msra.mxu0 0.0
    %1733 = vmatprep.subr.mxu0 0.0
    %1734 = vmatpush1.msra.mxu0 0.0
    %1735 = vmatprep.subr.mxu0 0.0
    %1736 = vmatpush1.msra.mxu0 0.0
    %1737 = vmatprep.subr.mxu0 0.0
    %1738 = vmatpush1.msra.mxu0 0.0
    %1739 = vmatprep.subr.mxu0 0.0
    %1740 = vmatpush1.msra.mxu0 0.0
    %1741 = vmatprep.subr.mxu0 0.0
    %1742 = vmatpush1.msra.mxu0 0.0
    %1743 = vmatprep.mubr.f32.mxu0 0.0
    %1744 = vmatmul.mubr.f32.gmra.mrb[0].mxu0 %v1677
    %v1745 = vpop.f32.mrb[0].mxu0
    %v1746 = vadd.f32 0.0, %v1745
    %v1747 = vpop.f32.mrb[0].mxu0
    %1748 = vdwg.mxu0
    %v1749 = vadd.f32 %v1676, %v1746
    %v1750 = vld [vmem:[#allocation3] sm:$0x1]
    %v1751 = vsel %vm59, %v1673, 0
    %1753 = vmatprep.subr.mxu0 0.0
    %1754 = vmatpush1.msra.mxu0 %v217
    %1755 = vmatprep.subr.mxu0 0.0
    %1756 = vmatpush1.msra.mxu0 %v218
    %1757 = vmatprep.subr.mxu0 0.0
    %1758 = vmatpush1.msra.mxu0 0.0
    %1759 = vmatprep.subr.mxu0 0.0
    %1760 = vmatpush1.msra.mxu0 0.0
    %1761 = vmatprep.subr.mxu0 0.0
    %1762 = vmatpush1.msra.mxu0 0.0
    %1763 = vmatprep.subr.mxu0 0.0
    %1764 = vmatpush1.msra.mxu0 0.0
    %1765 = vmatprep.subr.mxu0 0.0
    %1766 = vmatpush1.msra.mxu0 0.0
    %1767 = vmatprep.subr.mxu0 0.0
    %1768 = vmatpush1.msra.mxu0 0.0
    %1769 = vmatprep.subr.mxu0 0.0
    %1770 = vmatpush1.msra.mxu0 0.0
    %1771 = vmatprep.subr.mxu0 0.0
    %1772 = vmatpush1.msra.mxu0 0.0
    %1773 = vmatprep.subr.mxu0 0.0
    %1774 = vmatpush1.msra.mxu0 0.0
    %1775 = vmatprep.subr.mxu0 0.0
    %1776 = vmatpush1.msra.mxu0 0.0
    %1777 = vmatprep.subr.mxu0 0.0
    %1778 = vmatpush1.msra.mxu0 0.0
    %1779 = vmatprep.subr.mxu0 0.0
    %1780 = vmatpush1.msra.mxu0 0.0
    %1781 = vmatprep.subr.mxu0 0.0
    %1782 = vmatpush1.msra.mxu0 0.0
    %1783 = vmatprep.subr.mxu0 0.0
    %1784 = vmatpush1.msra.mxu0 0.0
    %1785 = vmatprep.subr.mxu0 0.0
    %1786 = vmatpush1.msra.mxu0 0.0
    %1787 = vmatprep.subr.mxu0 0.0
    %1788 = vmatpush1.msra.mxu0 0.0
    %1789 = vmatprep.subr.mxu0 0.0
    %1790 = vmatpush1.msra.mxu0 0.0
    %1791 = vmatprep.subr.mxu0 0.0
    %1792 = vmatpush1.msra.mxu0 0.0
    %1793 = vmatprep.subr.mxu0 0.0
    %1794 = vmatpush1.msra.mxu0 0.0
    %1795 = vmatprep.subr.mxu0 0.0
    %1796 = vmatpush1.msra.mxu0 0.0
    %1797 = vmatprep.subr.mxu0 0.0
    %1798 = vmatpush1.msra.mxu0 0.0
    %1799 = vmatprep.subr.mxu0 0.0
    %1800 = vmatpush1.msra.mxu0 0.0
    %1801 = vmatprep.subr.mxu0 0.0
    %1802 = vmatpush1.msra.mxu0 0.0
    %1803 = vmatprep.subr.mxu0 0.0
    %1804 = vmatpush1.msra.mxu0 0.0
    %1805 = vmatprep.subr.mxu0 0.0
    %1806 = vmatpush1.msra.mxu0 0.0
    %1807 = vmatprep.subr.mxu0 0.0
    %1808 = vmatpush1.msra.mxu0 0.0
    %1809 = vmatprep.subr.mxu0 0.0
    %1810 = vmatpush1.msra.mxu0 0.0
    %1811 = vmatprep.subr.mxu0 0.0
    %1812 = vmatpush1.msra.mxu0 0.0
    %1813 = vmatprep.subr.mxu0 0.0
    %1814 = vmatpush1.msra.mxu0 0.0
    %1815 = vmatprep.subr.mxu0 0.0
    %1816 = vmatpush1.msra.mxu0 0.0
    %1817 = vmatprep.mubr.f32.mxu0 0.0
    %1818 = vmatmul.mubr.f32.gmra.mrb[0].mxu0 %v1751
    %v1819 = vpop.f32.mrb[0].mxu0
    %v1820 = vadd.f32 0.0, %v1819
    %v1821 = vpop.f32.mrb[0].mxu0
    %1822 = vdwg.mxu0
    %v1823 = vadd.f32 %v1750, %v1820
    %v1824 = vxor.u32 %v1749, 2147483648
    %v1825 = vmul.f32 %v1824, 1.442695
    %v1826 = vpow.pop %v1825
    %v1827 = vadd.f32 %v1826, 1.0
    %v1828 = vrcp.pop %v1827
    %v1829 = vmul.f32 1.0, %v1828
    %v1830 = vtanh.pop %v1749
    %v1831 = vmul.f32 %v1829, %v1635
    %1833 = vrot.lane.b32.xlu0 %v1830, 96
    %v1834 = vpop.permute.xlu0 %1833
    %v1836 = vmul.f32 %v1829, %v1834
    %1838 = vrot.lane.b32.xlu0 %v1836, 16
    %v1839 = vpop.permute.xlu0 %1838
    %v1841 = vadd.f32 %v1831, %v1839
    %v1842 = vtanh.pop %v1841
    %1844 = vrot.lane.b32.xlu0 %v1842, 32
    %v1845 = vpop.permute.xlu0 %1844
    %v1847 = vmul.f32 %v1829, %v1845
    %v1848 = vxor.u32 %v1823, 2147483648
    %v1849 = vmul.f32 %v1848, 1.442695
    %v1850 = vpow.pop %v1849
    %v1851 = vadd.f32 %v1850, 1.0
    %v1852 = vrcp.pop %v1851
    %v1853 = vmul.f32 1.0, %v1852
    %v1854 = vtanh.pop %v1823
    %v1855 = vmul.f32 %v1853, %v1659
    %1857 = vrot.lane.b32.xlu0 %v1854, 96
    %v1858 = vpop.permute.xlu0 %1857
    %v1860 = vmul.f32 %v1853, %v1858
    %1862 = vrot.lane.b32.xlu0 %v1860, 16
    %v1863 = vpop.permute.xlu0 %1862
    %v1865 = vadd.f32 %v1855, %v1863
    %v1866 = vtanh.pop %v1865
    %1868 = vrot.lane.b32.xlu0 %v1866, 32
    %v1869 = vpop.permute.xlu0 %1868
    %v1871 = vmul.f32 %v1853, %v1869
    %1873 = vrot.lane.b32.xlu0 %v1847, 80
    %v1874 = vpop.permute.xlu0 %1873
    %1876 = vst.msk [vmem:[#allocation4 + $0x7] sm:$0x1] %vm433, %v1874
    %1878 = vrot.lane.b32.xlu0 %v1871, 80
    %v1879 = vpop.permute.xlu0 %1878
    %1881 = vst.msk [vmem:[#allocation5] sm:$0x1] %vm433, %v1879
    %v1882 = vld [vmem:[#allocation4] sm:$0xff]
    %v1883 = vld [vmem:[%s9] sm:$0xff]
    %v1884 = vld [vmem:[%s9 + $0x8] sm:$0xff]
    %v1885 = vld [vmem:[#allocation5] sm:$0xff]
    %v1886 = vld [vmem:[%s9 + $0x10] sm:$0xff]
    %v1887 = vld [vmem:[%s9 + $0x18] sm:$0xff]
    %v1889 = vsel %vm59, %v1885, 0
    %1891 = vmatprep.subr.mxu0 0.0
    %1892 = vmatpush1.msra.mxu0 %v1886
    %1893 = vmatprep.subr.mxu0 0.0
    %1894 = vmatpush1.msra.mxu0 %v1887
    %1895 = vmatprep.subr.mxu0 0.0
    %1896 = vmatpush1.msra.mxu0 0.0
    %1897 = vmatprep.subr.mxu0 0.0
    %1898 = vmatpush1.msra.mxu0 0.0
    %1899 = vmatprep.subr.mxu0 0.0
    %1900 = vmatpush1.msra.mxu0 0.0
    %1901 = vmatprep.subr.mxu0 0.0
    %1902 = vmatpush1.msra.mxu0 0.0
    %1903 = vmatprep.subr.mxu0 0.0
    %1904 = vmatpush1.msra.mxu0 0.0
    %1905 = vmatprep.subr.mxu0 0.0
    %1906 = vmatpush1.msra.mxu0 0.0
    %1907 = vmatprep.subr.mxu0 0.0
    %1908 = vmatpush1.msra.mxu0 0.0
    %1909 = vmatprep.subr.mxu0 0.0
    %1910 = vmatpush1.msra.mxu0 0.0
    %1911 = vmatprep.subr.mxu0 0.0
    %1912 = vmatpush1.msra.mxu0 0.0
    %1913 = vmatprep.subr.mxu0 0.0
    %1914 = vmatpush1.msra.mxu0 0.0
    %1915 = vmatprep.subr.mxu0 0.0
    %1916 = vmatpush1.msra.mxu0 0.0
    %1917 = vmatprep.subr.mxu0 0.0
    %1918 = vmatpush1.msra.mxu0 0.0
    %1919 = vmatprep.subr.mxu0 0.0
    %1920 = vmatpush1.msra.mxu0 0.0
    %1921 = vmatprep.subr.mxu0 0.0
    %1922 = vmatpush1.msra.mxu0 0.0
    %1923 = vmatprep.subr.mxu0 0.0
    %1924 = vmatpush1.msra.mxu0 0.0
    %1925 = vmatprep.subr.mxu0 0.0
    %1926 = vmatpush1.msra.mxu0 0.0
    %1927 = vmatprep.subr.mxu0 0.0
    %1928 = vmatpush1.msra.mxu0 0.0
    %1929 = vmatprep.subr.mxu0 0.0
    %1930 = vmatpush1.msra.mxu0 0.0
    %1931 = vmatprep.subr.mxu0 0.0
    %1932 = vmatpush1.msra.mxu0 0.0
    %1933 = vmatprep.subr.mxu0 0.0
    %1934 = vmatpush1.msra.mxu0 0.0
    %1935 = vmatprep.subr.mxu0 0.0
    %1936 = vmatpush1.msra.mxu0 0.0
    %1937 = vmatprep.subr.mxu0 0.0
    %1938 = vmatpush1.msra.mxu0 0.0
    %1939 = vmatprep.subr.mxu0 0.0
    %1940 = vmatpush1.msra.mxu0 0.0
    %1941 = vmatprep.subr.mxu0 0.0
    %1942 = vmatpush1.msra.mxu0 0.0
    %1943 = vmatprep.subr.mxu0 0.0
    %1944 = vmatpush1.msra.mxu0 0.0
    %1945 = vmatprep.subr.mxu0 0.0
    %1946 = vmatpush1.msra.mxu0 0.0
    %1947 = vmatprep.subr.mxu0 0.0
    %1948 = vmatpush1.msra.mxu0 0.0
    %1949 = vmatprep.subr.mxu0 0.0
    %1950 = vmatpush1.msra.mxu0 0.0
    %1951 = vmatprep.subr.mxu0 0.0
    %1952 = vmatpush1.msra.mxu0 0.0
    %1953 = vmatprep.subr.mxu0 0.0
    %1954 = vmatpush1.msra.mxu0 0.0
    %1955 = vmatprep.mubr.f32.mxu0 0.0
    %1956 = vmatmul.mubr.f32.gmra.mrb[0].mxu0 %v1889
    %v1957 = vpop.f32.mrb[0].mxu0
    %v1958 = vadd.f32 0.0, %v1957
    %v1959 = vpop.f32.mrb[0].mxu0
    %1960 = vdwg.mxu0
    %v1962 = vsel %vm59, %v1882, 0
    %1964 = vmatprep.subr.mxu0 0.0
    %1965 = vmatpush1.msra.mxu0 %v1883
    %1966 = vmatprep.subr.mxu0 0.0
    %1967 = vmatpush1.msra.mxu0 %v1884
    %1968 = vmatprep.subr.mxu0 0.0
    %1969 = vmatpush1.msra.mxu0 0.0
    %1970 = vmatprep.subr.mxu0 0.0
    %1971 = vmatpush1.msra.mxu0 0.0
    %1972 = vmatprep.subr.mxu0 0.0
    %1973 = vmatpush1.msra.mxu0 0.0
    %1974 = vmatprep.subr.mxu0 0.0
    %1975 = vmatpush1.msra.mxu0 0.0
    %1976 = vmatprep.subr.mxu0 0.0
    %1977 = vmatpush1.msra.mxu0 0.0
    %1978 = vmatprep.subr.mxu0 0.0
    %1979 = vmatpush1.msra.mxu0 0.0
    %1980 = vmatprep.subr.mxu0 0.0
    %1981 = vmatpush1.msra.mxu0 0.0
    %1982 = vmatprep.subr.mxu0 0.0
    %1983 = vmatpush1.msra.mxu0 0.0
    %1984 = vmatprep.subr.mxu0 0.0
    %1985 = vmatpush1.msra.mxu0 0.0
    %1986 = vmatprep.subr.mxu0 0.0
    %1987 = vmatpush1.msra.mxu0 0.0
    %1988 = vmatprep.subr.mxu0 0.0
    %1989 = vmatpush1.msra.mxu0 0.0
    %1990 = vmatprep.subr.mxu0 0.0
    %1991 = vmatpush1.msra.mxu0 0.0
    %1992 = vmatprep.subr.mxu0 0.0
    %1993 = vmatpush1.msra.mxu0 0.0
    %1994 = vmatprep.subr.mxu0 0.0
    %1995 = vmatpush1.msra.mxu0 0.0
    %1996 = vmatprep.subr.mxu0 0.0
    %1997 = vmatpush1.msra.mxu0 0.0
    %1998 = vmatprep.subr.mxu0 0.0
    %1999 = vmatpush1.msra.mxu0 0.0
    %2000 = vmatprep.subr.mxu0 0.0
    %2001 = vmatpush1.msra.mxu0 0.0
    %2002 = vmatprep.subr.mxu0 0.0
    %2003 = vmatpush1.msra.mxu0 0.0
    %2004 = vmatprep.subr.mxu0 0.0
    %2005 = vmatpush1.msra.mxu0 0.0
    %2006 = vmatprep.subr.mxu0 0.0
    %2007 = vmatpush1.msra.mxu0 0.0
    %2008 = vmatprep.subr.mxu0 0.0
    %2009 = vmatpush1.msra.mxu0 0.0
    %2010 = vmatprep.subr.mxu0 0.0
    %2011 = vmatpush1.msra.mxu0 0.0
    %2012 = vmatprep.subr.mxu0 0.0
    %2013 = vmatpush1.msra.mxu0 0.0
    %2014 = vmatprep.subr.mxu0 0.0
    %2015 = vmatpush1.msra.mxu0 0.0
    %2016 = vmatprep.subr.mxu0 0.0
    %2017 = vmatpush1.msra.mxu0 0.0
    %2018 = vmatprep.subr.mxu0 0.0
    %2019 = vmatpush1.msra.mxu0 0.0
    %2020 = vmatprep.subr.mxu0 0.0
    %2021 = vmatpush1.msra.mxu0 0.0
    %2022 = vmatprep.subr.mxu0 0.0
    %2023 = vmatpush1.msra.mxu0 0.0
    %2024 = vmatprep.subr.mxu0 0.0
    %2025 = vmatpush1.msra.mxu0 0.0
    %2026 = vmatprep.subr.mxu0 0.0
    %2027 = vmatpush1.msra.mxu0 0.0
    %2028 = vmatprep.mubr.f32.mxu0 0.0
    %2029 = vmatmul.mubr.f32.gmra.mrb[0].mxu0 %v1962
    %v2030 = vpop.f32.mrb[0].mxu0
    %v2031 = vadd.f32 %v1958, %v2030
    %v2032 = vpop.f32.mrb[0].mxu0
    %2033 = vdwg.mxu0
    %v2034 = vld [vmem:[%s10] sm:$0x1]
    %v2036 = vlaneseq
    %v2037 = vshrl.u32 %v2036, 7
    %v2038 = vsub.s32 0, %v2037
    %v2039 = vrot.slane %v2034, %v2038
    %v2041 = vadd.f32 %v2031, %v2039
    %vm2042 = vcmask 64512
    %2043 = vst.msk [vmem:[#allocation6] sm:$0xff] %vm2042, %v2041
    %v2044 = vld [vmem:[%s12] sm:$0xff]
    %v2045 = vlaneseq
    %v2046 = vshrl.u32 %v2045, 7
    %v2047 = vlaneseq
    %v2048 = vand.u32 %v2047, 127
    %vm2049 = vcmp.eq.s32.totalorder %v2046, %v2048
    %vm2050 = vcmp.eq.s32.totalorder %v2046, 3
    %v2051 = vsel %vm2050, 0.0, -10000.0
    %v2052 = vadd.f32 %v2051, %v2044
    %v2053 = vsel %vm2042, %v2052, -inf
    %v2054 = vrot.slane %v2053, 4
    %v2055 = vmax.f32 %v2053, %v2054
    %v2056 = vrot.slane %v2055, 2
    %v2057 = vmax.f32 %v2055, %v2056
    %v2058 = vrot.slane %v2057, 1
    %v2059 = vmax.f32 %v2057, %v2058
    %vm2060 = vcmp.eq.f32.partialorder %v2052, %v2059
    %v2061 = vsel %vm2060, %v2046, 8
    %v2062 = vsel %vm2042, %v2061, 2147483647
    %v2063 = vrot.slane %v2062, 4
    %vm2064 = vcmp.lt.s32.totalorder %v2062, %v2063
    %v2065 = vsel %vm2064, %v2062, %v2063
    %v2066 = vrot.slane %v2065, 2
    %vm2067 = vcmp.lt.s32.totalorder %v2065, %v2066
    %v2068 = vsel %vm2067, %v2065, %v2066
    %v2069 = vrot.slane %v2068, 1
    %vm2070 = vcmp.lt.s32.totalorder %v2068, %v2069
    %v2071 = vsel %vm2070, %v2068, %v2069
    %vm2072 = vcmask 57344
    %2073 = vst.msk [vmem:[#allocation7] sm:$0x1] %vm2072, %v2071
    %v2074 = vld [vmem:[#allocation6] sm:$0x1]
    %v2075 = vadd.f32 %v2059, %v2074
    %v2076 = vlaneseq
    %v2077 = vshrl.u32 %v2076, 7
    %v2078 = vsub.s32 0, %v2077
    %v2079 = vrot.slane %v2075, %v2078
    %v2080 = vsel %vm2049, %v2079, 0.0
    %v2081 = vsel %vm2042, %v2080, 0.0
    %2082 = vadd.xlane.f32.xlu0 %v2081
    %v2083 = vpop.xlane.xlu0 %2082
    %v2084 = vadd.f32 %v2083, %v2044
    %v2085 = vsel %vm2042, %v2084, -inf
    %v2086 = vrot.slane %v2085, 4
    %v2087 = vmax.f32 %v2085, %v2086
    %v2088 = vrot.slane %v2087, 2
    %v2089 = vmax.f32 %v2087, %v2088
    %v2090 = vrot.slane %v2089, 1
    %v2091 = vmax.f32 %v2089, %v2090
    %vm2092 = vcmp.eq.f32.partialorder %v2084, %v2091
    %v2093 = vsel %vm2092, %v2046, 8
    %v2094 = vsel %vm2042, %v2093, 2147483647
    %v2095 = vrot.slane %v2094, 4
    %vm2096 = vcmp.lt.s32.totalorder %v2094, %v2095
    %v2097 = vsel %vm2096, %v2094, %v2095
    %v2098 = vrot.slane %v2097, 2
    %vm2099 = vcmp.lt.s32.totalorder %v2097, %v2098
    %v2100 = vsel %vm2099, %v2097, %v2098
    %v2101 = vrot.slane %v2100, 1
    %vm2102 = vcmp.lt.s32.totalorder %v2100, %v2101
    %v2103 = vsel %vm2102, %v2100, %v2101
    %2104 = vst.msk [vmem:[#allocation7 + $0x1] sm:$0x1] %vm2072, %v2103
    %v2105 = vld [vmem:[#allocation6 + $0x1] sm:$0x1]
    %v2106 = vadd.f32 %v2091, %v2105
    %v2107 = vlaneseq
    %v2108 = vshrl.u32 %v2107, 7
    %v2109 = vsub.s32 0, %v2108
    %v2110 = vrot.slane %v2106, %v2109
    %v2111 = vsel %vm2049, %v2110, 0.0
    %v2112 = vsel %vm2042, %v2111, 0.0
    %2113 = vadd.xlane.f32.xlu0 %v2112
    %v2114 = vpop.xlane.xlu0 %2113
    %v2115 = vadd.f32 %v2114, %v2044
    %v2116 = vsel %vm2042, %v2115, -inf
    %v2117 = vrot.slane %v2116, 4
    %v2118 = vmax.f32 %v2116, %v2117
    %v2119 = vrot.slane %v2118, 2
    %v2120 = vmax.f32 %v2118, %v2119
    %v2121 = vrot.slane %v2120, 1
    %v2122 = vmax.f32 %v2120, %v2121
    %vm2123 = vcmp.eq.f32.partialorder %v2115, %v2122
    %v2124 = vsel %vm2123, %v2046, 8
    %v2125 = vsel %vm2042, %v2124, 2147483647
    %v2126 = vrot.slane %v2125, 4
    %vm2127 = vcmp.lt.s32.totalorder %v2125, %v2126
    %v2128 = vsel %vm2127, %v2125, %v2126
    %v2129 = vrot.slane %v2128, 2
    %vm2130 = vcmp.lt.s32.totalorder %v2128, %v2129
    %v2131 = vsel %vm2130, %v2128, %v2129
    %v2132 = vrot.slane %v2131, 1
    %vm2133 = vcmp.lt.s32.totalorder %v2131, %v2132
    %v2134 = vsel %vm2133, %v2131, %v2132
    %2135 = vst.msk [vmem:[#allocation7 + $0x2] sm:$0x1] %vm2072, %v2134
    %v2136 = vld [vmem:[#allocation6 + $0x2] sm:$0x1]
    %v2137 = vadd.f32 %v2122, %v2136
    %v2138 = vlaneseq
    %v2139 = vshrl.u32 %v2138, 7
    %v2140 = vsub.s32 0, %v2139
    %v2141 = vrot.slane %v2137, %v2140
    %v2142 = vsel %vm2049, %v2141, 0.0
    %v2143 = vsel %vm2042, %v2142, 0.0
    %2144 = vadd.xlane.f32.xlu0 %v2143
    %v2145 = vpop.xlane.xlu0 %2144
    %v2146 = vadd.f32 %v2145, %v2044
    %v2147 = vsel %vm2042, %v2146, -inf
    %v2148 = vrot.slane %v2147, 4
    %v2149 = vmax.f32 %v2147, %v2148
    %v2150 = vrot.slane %v2149, 2
    %v2151 = vmax.f32 %v2149, %v2150
    %v2152 = vrot.slane %v2151, 1
    %v2153 = vmax.f32 %v2151, %v2152
    %vm2154 = vcmp.eq.f32.partialorder %v2146, %v2153
    %v2155 = vsel %vm2154, %v2046, 8
    %v2156 = vsel %vm2042, %v2155, 2147483647
    %v2157 = vrot.slane %v2156, 4
    %vm2158 = vcmp.lt.s32.totalorder %v2156, %v2157
    %v2159 = vsel %vm2158, %v2156, %v2157
    %v2160 = vrot.slane %v2159, 2
    %vm2161 = vcmp.lt.s32.totalorder %v2159, %v2160
    %v2162 = vsel %vm2161, %v2159, %v2160
    %v2163 = vrot.slane %v2162, 1
    %vm2164 = vcmp.lt.s32.totalorder %v2162, %v2163
    %v2165 = vsel %vm2164, %v2162, %v2163
    %2166 = vst.msk [vmem:[#allocation7 + $0x3] sm:$0x1] %vm2072, %v2165
    %v2167 = vld [vmem:[#allocation6 + $0x3] sm:$0x1]
    %v2168 = vadd.f32 %v2153, %v2167
    %v2169 = vlaneseq
    %v2170 = vshrl.u32 %v2169, 7
    %v2171 = vsub.s32 0, %v2170
    %v2172 = vrot.slane %v2168, %v2171
    %v2173 = vsel %vm2049, %v2172, 0.0
    %v2174 = vsel %vm2042, %v2173, 0.0
    %2175 = vadd.xlane.f32.xlu0 %v2174
    %v2176 = vpop.xlane.xlu0 %2175
    %v2177 = vadd.f32 %v2176, %v2044
    %v2178 = vsel %vm2042, %v2177, -inf
    %v2179 = vrot.slane %v2178, 4
    %v2180 = vmax.f32 %v2178, %v2179
    %v2181 = vrot.slane %v2180, 2
    %v2182 = vmax.f32 %v2180, %v2181
    %v2183 = vrot.slane %v2182, 1
    %v2184 = vmax.f32 %v2182, %v2183
    %vm2185 = vcmp.eq.f32.partialorder %v2177, %v2184
    %v2186 = vsel %vm2185, %v2046, 8
    %v2187 = vsel %vm2042, %v2186, 2147483647
    %v2188 = vrot.slane %v2187, 4
    %vm2189 = vcmp.lt.s32.totalorder %v2187, %v2188
    %v2190 = vsel %vm2189, %v2187, %v2188
    %v2191 = vrot.slane %v2190, 2
    %vm2192 = vcmp.lt.s32.totalorder %v2190, %v2191
    %v2193 = vsel %vm2192, %v2190, %v2191
    %v2194 = vrot.slane %v2193, 1
    %vm2195 = vcmp.lt.s32.totalorder %v2193, %v2194
    %v2196 = vsel %vm2195, %v2193, %v2194
    %2197 = vst.msk [vmem:[#allocation7 + $0x4] sm:$0x1] %vm2072, %v2196
    %v2198 = vld [vmem:[#allocation6 + $0x4] sm:$0x1]
    %v2199 = vadd.f32 %v2184, %v2198
    %v2200 = vlaneseq
    %v2201 = vshrl.u32 %v2200, 7
    %v2202 = vsub.s32 0, %v2201
    %v2203 = vrot.slane %v2199, %v2202
    %v2204 = vsel %vm2049, %v2203, 0.0
    %v2205 = vsel %vm2042, %v2204, 0.0
    %2206 = vadd.xlane.f32.xlu0 %v2205
    %v2207 = vpop.xlane.xlu0 %2206
    %v2208 = vadd.f32 %v2207, %v2044
    %v2209 = vsel %vm2042, %v2208, -inf
    %v2210 = vrot.slane %v2209, 4
    %v2211 = vmax.f32 %v2209, %v2210
    %v2212 = vrot.slane %v2211, 2
    %v2213 = vmax.f32 %v2211, %v2212
    %v2214 = vrot.slane %v2213, 1
    %v2215 = vmax.f32 %v2213, %v2214
    %vm2216 = vcmp.eq.f32.partialorder %v2208, %v2215
    %v2217 = vsel %vm2216, %v2046, 8
    %v2218 = vsel %vm2042, %v2217, 2147483647
    %v2219 = vrot.slane %v2218, 4
    %vm2220 = vcmp.lt.s32.totalorder %v2218, %v2219
    %v2221 = vsel %vm2220, %v2218, %v2219
    %v2222 = vrot.slane %v2221, 2
    %vm2223 = vcmp.lt.s32.totalorder %v2221, %v2222
    %v2224 = vsel %vm2223, %v2221, %v2222
    %v2225 = vrot.slane %v2224, 1
    %vm2226 = vcmp.lt.s32.totalorder %v2224, %v2225
    %v2227 = vsel %vm2226, %v2224, %v2225
    %2228 = vst.msk [vmem:[#allocation7 + $0x5] sm:$0x1] %vm2072, %v2227
    %v2229 = vld [vmem:[#allocation6 + $0x5] sm:$0x1]
    %v2230 = vadd.f32 %v2215, %v2229
    %v2231 = vlaneseq
    %v2232 = vshrl.u32 %v2231, 7
    %v2233 = vsub.s32 0, %v2232
    %v2234 = vrot.slane %v2230, %v2233
    %v2235 = vsel %vm2049, %v2234, 0.0
    %v2236 = vsel %vm2042, %v2235, 0.0
    %2237 = vadd.xlane.f32.xlu0 %v2236
    %v2238 = vpop.xlane.xlu0 %2237
    %v2239 = vadd.f32 %v2238, %v2044
    %v2240 = vsel %vm2042, %v2239, -inf
    %v2241 = vrot.slane %v2240, 4
    %v2242 = vmax.f32 %v2240, %v2241
    %v2243 = vrot.slane %v2242, 2
    %v2244 = vmax.f32 %v2242, %v2243
    %v2245 = vrot.slane %v2244, 1
    %v2246 = vmax.f32 %v2244, %v2245
    %vm2247 = vcmp.eq.f32.partialorder %v2239, %v2246
    %v2248 = vsel %vm2247, %v2046, 8
    %v2249 = vsel %vm2042, %v2248, 2147483647
    %v2250 = vrot.slane %v2249, 4
    %vm2251 = vcmp.lt.s32.totalorder %v2249, %v2250
    %v2252 = vsel %vm2251, %v2249, %v2250
    %v2253 = vrot.slane %v2252, 2
    %vm2254 = vcmp.lt.s32.totalorder %v2252, %v2253
    %v2255 = vsel %vm2254, %v2252, %v2253
    %v2256 = vrot.slane %v2255, 1
    %vm2257 = vcmp.lt.s32.totalorder %v2255, %v2256
    %v2258 = vsel %vm2257, %v2255, %v2256
    %2259 = vst.msk [vmem:[#allocation7 + $0x6] sm:$0x1] %vm2072, %v2258
    %v2260 = vld [vmem:[#allocation6 + $0x6] sm:$0x1]
    %v2261 = vadd.f32 %v2246, %v2260
    %v2262 = vlaneseq
    %v2263 = vshrl.u32 %v2262, 7
    %v2264 = vsub.s32 0, %v2263
    %v2265 = vrot.slane %v2261, %v2264
    %v2266 = vsel %vm2049, %v2265, 0.0
    %v2267 = vsel %vm2042, %v2266, 0.0
    %2268 = vadd.xlane.f32.xlu0 %v2267
    %v2269 = vpop.xlane.xlu0 %2268
    %v2270 = vadd.f32 %v2269, %v2044
    %v2271 = vsel %vm2042, %v2270, -inf
    %v2272 = vrot.slane %v2271, 4
    %v2273 = vmax.f32 %v2271, %v2272
    %v2274 = vrot.slane %v2273, 2
    %v2275 = vmax.f32 %v2273, %v2274
    %v2276 = vrot.slane %v2275, 1
    %v2277 = vmax.f32 %v2275, %v2276
    %vm2278 = vcmp.eq.f32.partialorder %v2270, %v2277
    %v2279 = vsel %vm2278, %v2046, 8
    %v2280 = vsel %vm2042, %v2279, 2147483647
    %v2281 = vrot.slane %v2280, 4
    %vm2282 = vcmp.lt.s32.totalorder %v2280, %v2281
    %v2283 = vsel %vm2282, %v2280, %v2281
    %v2284 = vrot.slane %v2283, 2
    %vm2285 = vcmp.lt.s32.totalorder %v2283, %v2284
    %v2286 = vsel %vm2285, %v2283, %v2284
    %v2287 = vrot.slane %v2286, 1
    %vm2288 = vcmp.lt.s32.totalorder %v2286, %v2287
    %v2289 = vsel %vm2288, %v2286, %v2287
    %2290 = vst.msk [vmem:[#allocation7 + $0x7] sm:$0x1] %vm2072, %v2289
    %v2291 = vld [vmem:[#allocation6 + $0x7] sm:$0x1]
    %v2292 = vadd.f32 %v2277, %v2291
    %v2293 = vld [vmem:[%s11 + $0x4] sm:$0x1]
    %v2294 = vadd.f32 %v2292, %v2293
    %v2295 = vsel %vm2072, %v2294, -inf
    %2296 = vmax.xlane.f32.xlu0 %v2295
    %v2297 = vpop.xlane.xlu0 %2296
    %vm2298 = vcmp.eq.f32.partialorder %v2294, %v2297
    %v2299 = vsel %vm2298, %v2048, 8
    %v2300 = vsel %vm2072, %v2299, 2147483647
    %v2301 = vand.u32 %v2300, 65535
    %v2302 = vshra.s32 %v2300, 16
    %v2303 = vcvt.s32.f32 %v2301
    %v2304 = vcvt.s32.f32 %v2302
    %2305 = vmin.xlane.f32.xlu0 %v2304
    %v2306 = vpop.xlane.xlu0 %2305
    %vm2307 = vcmp.eq.f32.partialorder %v2304, %v2306
    %v2308 = vsel %vm2307, %v2303, inf
    %2309 = vmin.xlane.f32.xlu0 %v2308
    %v2310 = vpop.xlane.xlu0 %2309
    %v2311 = vcvt.f32.s32 %v2310
    %v2312 = vcvt.f32.s32 %v2306
    %v2313 = vshll.u32 %v2312, 16
    %v2314 = vadd.s32 %v2313, %v2311
    %vm2315 = vcmask 0
    %2316 = vst.msk [vmem:[#allocation10] sm:$0x1] %vm2315, %v2297
    %vm2317 = vcmp.eq.s32.totalorder %v2048, 7
    %v2318 = vsel %vm2317, %v2314, 0
    %v2319 = vld [vmem:[#allocation7 + $0x7] sm:$0x1]
    %vm2320 = vcmp.eq.s32.totalorder %v2048, %v2314
    %v2321 = vsel %vm2320, %v2319, 0
    %v2322 = vsel %vm2072, %v2321, 0
    %v2323 = vand.u32 %v2322, 65535
    %v2324 = vshrl.u32 %v2322, 16
    %v2325 = vcvt.s32.f32 %v2323
    %v2326 = vcvt.s32.f32 %v2324
    %2327 = vadd.xlane.f32.xlu0 %v2325
    %v2328 = vpop.xlane.xlu0 %2327
    %2329 = vadd.xlane.f32.xlu0 %v2326
    %v2330 = vpop.xlane.xlu0 %2329
    %v2331 = vcvt.f32.s32 %v2328
    %v2332 = vcvt.f32.s32 %v2330
    %v2333 = vshll.u32 %v2332, 16
    %v2334 = vadd.s32 %v2333, %v2331
    %vm2335 = vcmp.eq.s32.totalorder %v2048, 6
    %v2336 = vsel %vm2335, %v2334, %v2318
    %v2337 = vld [vmem:[#allocation7 + $0x6] sm:$0x1]
    %vm2338 = vcmp.eq.s32.totalorder %v2048, %v2334
    %v2339 = vsel %vm2338, %v2337, 0
    %v2340 = vsel %vm2072, %v2339, 0
    %v2341 = vand.u32 %v2340, 65535
    %v2342 = vshrl.u32 %v2340, 16
    %v2343 = vcvt.s32.f32 %v2341
    %v2344 = vcvt.s32.f32 %v2342
    %2345 = vadd.xlane.f32.xlu0 %v2343
    %v2346 = vpop.xlane.xlu0 %2345
    %2347 = vadd.xlane.f32.xlu0 %v2344
    %v2348 = vpop.xlane.xlu0 %2347
    %v2349 = vcvt.f32.s32 %v2346
    %v2350 = vcvt.f32.s32 %v2348
    %v2351 = vshll.u32 %v2350, 16
    %v2352 = vadd.s32 %v2351, %v2349
    %vm2353 = vcmp.eq.s32.totalorder %v2048, 5
    %v2354 = vsel %vm2353, %v2352, %v2336
    %v2355 = vld [vmem:[#allocation7 + $0x5] sm:$0x1]
    %vm2356 = vcmp.eq.s32.totalorder %v2048, %v2352
    %v2357 = vsel %vm2356, %v2355, 0
    %v2358 = vsel %vm2072, %v2357, 0
    %v2359 = vand.u32 %v2358, 65535
    %v2360 = vshrl.u32 %v2358, 16
    %v2361 = vcvt.s32.f32 %v2359
    %v2362 = vcvt.s32.f32 %v2360
    %2363 = vadd.xlane.f32.xlu0 %v2361
    %v2364 = vpop.xlane.xlu0 %2363
    %2365 = vadd.xlane.f32.xlu0 %v2362
    %v2366 = vpop.xlane.xlu0 %2365
    %v2367 = vcvt.f32.s32 %v2364
    %v2368 = vcvt.f32.s32 %v2366
    %v2369 = vshll.u32 %v2368, 16
    %v2370 = vadd.s32 %v2369, %v2367
    %vm2371 = vcmp.eq.s32.totalorder %v2048, 4
    %v2372 = vsel %vm2371, %v2370, %v2354
    %v2373 = vld [vmem:[#allocation7 + $0x4] sm:$0x1]
    %vm2374 = vcmp.eq.s32.totalorder %v2048, %v2370
    %v2375 = vsel %vm2374, %v2373, 0
    %v2376 = vsel %vm2072, %v2375, 0
    %v2377 = vand.u32 %v2376, 65535
    %v2378 = vshrl.u32 %v2376, 16
    %v2379 = vcvt.s32.f32 %v2377
    %v2380 = vcvt.s32.f32 %v2378
    %2381 = vadd.xlane.f32.xlu0 %v2379
    %v2382 = vpop.xlane.xlu0 %2381
    %2383 = vadd.xlane.f32.xlu0 %v2380
    %v2384 = vpop.xlane.xlu0 %2383
    %v2385 = vcvt.f32.s32 %v2382
    %v2386 = vcvt.f32.s32 %v2384
    %v2387 = vshll.u32 %v2386, 16
    %v2388 = vadd.s32 %v2387, %v2385
    %vm2389 = vcmp.eq.s32.totalorder %v2048, 3
    %v2390 = vsel %vm2389, %v2388, %v2372
    %v2391 = vld [vmem:[#allocation7 + $0x3] sm:$0x1]
    %vm2392 = vcmp.eq.s32.totalorder %v2048, %v2388
    %v2393 = vsel %vm2392, %v2391, 0
    %v2394 = vsel %vm2072, %v2393, 0
    %v2395 = vand.u32 %v2394, 65535
    %v2396 = vshrl.u32 %v2394, 16
    %v2397 = vcvt.s32.f32 %v2395
    %v2398 = vcvt.s32.f32 %v2396
    %2399 = vadd.xlane.f32.xlu0 %v2397
    %v2400 = vpop.xlane.xlu0 %2399
    %2401 = vadd.xlane.f32.xlu0 %v2398
    %v2402 = vpop.xlane.xlu0 %2401
    %v2403 = vcvt.f32.s32 %v2400
    %v2404 = vcvt.f32.s32 %v2402
    %v2405 = vshll.u32 %v2404, 16
    %v2406 = vadd.s32 %v2405, %v2403
    %vm2407 = vcmp.eq.s32.totalorder %v2048, 2
    %v2408 = vsel %vm2407, %v2406, %v2390
    %v2409 = vld [vmem:[#allocation7 + $0x2] sm:$0x1]
    %vm2410 = vcmp.eq.s32.totalorder %v2048, %v2406
    %v2411 = vsel %vm2410, %v2409, 0
    %v2412 = vsel %vm2072, %v2411, 0
    %v2413 = vand.u32 %v2412, 65535
    %v2414 = vshrl.u32 %v2412, 16
    %v2415 = vcvt.s32.f32 %v2413
    %v2416 = vcvt.s32.f32 %v2414
    %2417 = vadd.xlane.f32.xlu0 %v2415
    %v2418 = vpop.xlane.xlu0 %2417
    %2419 = vadd.xlane.f32.xlu0 %v2416
    %v2420 = vpop.xlane.xlu0 %2419
    %v2421 = vcvt.f32.s32 %v2418
    %v2422 = vcvt.f32.s32 %v2420
    %v2423 = vshll.u32 %v2422, 16
    %v2424 = vadd.s32 %v2423, %v2421
    %vm2425 = vcmp.eq.s32.totalorder %v2048, 1
    %v2426 = vsel %vm2425, %v2424, %v2408
    %v2427 = vld [vmem:[#allocation7 + $0x1] sm:$0x1]
    %vm2428 = vcmp.eq.s32.totalorder %v2048, %v2424
    %v2429 = vsel %vm2428, %v2427, 0
    %v2430 = vsel %vm2072, %v2429, 0
    %v2431 = vand.u32 %v2430, 65535
    %v2432 = vshrl.u32 %v2430, 16
    %v2433 = vcvt.s32.f32 %v2431
    %v2434 = vcvt.s32.f32 %v2432
    %2435 = vadd.xlane.f32.xlu0 %v2433
    %v2436 = vpop.xlane.xlu0 %2435
    %2437 = vadd.xlane.f32.xlu0 %v2434
    %v2438 = vpop.xlane.xlu0 %2437
    %v2439 = vcvt.f32.s32 %v2436
    %v2440 = vcvt.f32.s32 %v2438
    %v2441 = vshll.u32 %v2440, 16
    %v2442 = vadd.s32 %v2441, %v2439
    %vm2443 = vcmp.eq.s32.totalorder %v2048, 0
    %v2444 = vsel %vm2443, %v2442, %v2426
    %v2445 = vld [vmem:[#allocation7] sm:$0x1]
    %vm2446 = vcmp.eq.s32.totalorder %v2048, %v2442
    %v2447 = vsel %vm2446, %v2445, 0
    %v2448 = vsel %vm2072, %v2447, 0
    %v2449 = vand.u32 %v2448, 65535
    %v2450 = vshrl.u32 %v2448, 16
    %v2451 = vcvt.s32.f32 %v2449
    %v2452 = vcvt.s32.f32 %v2450
    %2453 = vadd.xlane.f32.xlu0 %v2451
    %v2454 = vpop.xlane.xlu0 %2453
    %2455 = vadd.xlane.f32.xlu0 %v2452
    %v2456 = vpop.xlane.xlu0 %2455
    %v2457 = vcvt.f32.s32 %v2454
    %v2458 = vcvt.f32.s32 %v2456
    %v2459 = vshll.u32 %v2458, 16
    %v2460 = vadd.s32 %v2459, %v2457
    %2461 = vst.msk [vmem:[#allocation8] sm:$0x1] %vm2072, %v2444
    %2462 = vst.msk [vmem:[#allocation12] sm:$0x1] %vm2315, %v2460
    // Predicated region
    $region54: #{bilstm_crf_forward.1} parent=1 // pred_check
      _
    $region55: #{bilstm_crf_forward.1} parent=1 // pred_check_branch
      %2464 = sbr.rel (0) target = $region57
    $region56: #{bilstm_crf_forward.1} parent=1 // pred_region
      %s2466 = ssub.s32 16, 16
      %2467 = vsyncadd [#allocation9], %s2466
      %s2469 = sshll.u32 [#allocation8], 4
      %s2470 = int_to_ptr.vmem [resolvable:$true] %s2469
      %2472 = dma.vmem_to_hbm [thread:$0]  %s2470, 16, %s13, [#allocation9]
    $region57: #{bilstm_crf_forward.1} parent=1 // pred_fallthru
      _
    // Predicated region
    $region58: #{bilstm_crf_forward.1} parent=1 // pred_check
      _
    $region59: #{bilstm_crf_forward.1} parent=1 // pred_check_branch
      %2474 = sbr.rel (0) target = $region61
    $region60: #{bilstm_crf_forward.1} parent=1 // pred_region
      %s2476 = ssub.s32 16, 16
      %2477 = vsyncadd [#allocation11], %s2476
      %s2479 = sshll.u32 [#allocation10], 4
      %s2480 = int_to_ptr.vmem [resolvable:$true] %s2479
      %2482 = dma.vmem_to_hbm [thread:$0]  %s2480, 16, %s14, [#allocation11]
    $region61: #{bilstm_crf_forward.1} parent=1 // pred_fallthru
      _
    // Predicated region
    $region62: #{bilstm_crf_forward.1} parent=1 // pred_check
      _
    $region63: #{bilstm_crf_forward.1} parent=1 // pred_check_branch
      %2484 = sbr.rel (0) target = $region65
    $region64: #{bilstm_crf_forward.1} parent=1 // pred_region
      %s2486 = ssub.s32 16, 16
      %2487 = vsyncadd [#allocation11], %s2486
      %s2489 = sshll.u32 [#allocation12], 4
      %s2490 = int_to_ptr.vmem [resolvable:$true] %s2489
      %2492 = dma.vmem_to_hbm [thread:$0]  %s2490, 16, %s15, [#allocation11]
    $region65: #{bilstm_crf_forward.1} parent=1 // pred_fallthru
      _
    // Predicated region
    $region66: #{bilstm_crf_forward.1} parent=1 // pred_check
      _
    $region67: #{bilstm_crf_forward.1} parent=1 // pred_check_branch
      %2494 = sbr.rel (0) target = $region69
    $region68: #{bilstm_crf_forward.1} parent=1 // pred_region
      %2495 = dma.done [#allocation9], 16
    $region69: #{bilstm_crf_forward.1} parent=1 // pred_fallthru
      _
    // Predicated region
    $region70: #{bilstm_crf_forward.1} parent=1 // pred_check
      _
    $region71: #{bilstm_crf_forward.1} parent=1 // pred_check_branch
      %2497 = sbr.rel (0) target = $region73
    $region72: #{bilstm_crf_forward.1} parent=1 // pred_region
      %2498 = dma.done [#allocation11], 16
    $region73: #{bilstm_crf_forward.1} parent=1 // pred_fallthru
      _
    // Predicated region
    $region74: #{bilstm_crf_forward.1} parent=1 // pred_check
      _
    $region75: #{bilstm_crf_forward.1} parent=1 // pred_check_branch
      %2500 = sbr.rel (0) target = $region77
    $region76: #{bilstm_crf_forward.1} parent=1 // pred_region
      %2501 = dma.done [#allocation11], 16
    $region77: #{bilstm_crf_forward.1} parent=1 // pred_fallthru
      _
    %2502 = vsyncpa [#allocation9], 1
    %2503 = vsyncpa [#allocation11], 1

</llo_original>
